<compile_context>
chip_gen: v5e
topology: v5e:2x2
jax: 0.10.0
libtpu: 0.0.40
codegen_flags: <defaults>
</compile_context>

<pallas_src>
import jax
import jax.numpy as jnp
from jax.experimental import pallas as pl
from jax.experimental.pallas import tpu as pltpu


def _round_up(x, m):
    return ((x + m - 1) // m) * m


# ---------------------------------------------------------------------------
# Pallas kernels
# ---------------------------------------------------------------------------
def _matmul_bias_relu_kernel(x_ref, w_ref, b_ref, o_ref):
    # o = relu(x @ w + b); bf16 operands, f32 accumulation on the MXU, f32 bias/relu.
    acc = jnp.dot(x_ref[...], w_ref[...], preferred_element_type=jnp.float32)
    o_ref[...] = jnp.maximum(acc + b_ref[...], 0.0).astype(o_ref.dtype)


def matmul_bias_relu(x, w, b, *, tm=256):
    """x: (M, K) bf16, w: (K, N) bf16, b: (1, N) f32 -> relu(x @ w + b): (M, N) bf16.

    Row-tiled so the x-tile DMA double-buffers under the MXU; weights/bias stay
    resident in VMEM (pinned block index).  Ragged last tile handled by Pallas
    block padding (row-independent op, OOB output rows are dropped).
    """
    M, K = x.shape
    N = w.shape[1]
    tm = min(tm, _round_up(M, 8))
    grid = (pl.cdiv(M, tm),)
    cost = pl.CostEstimate(
        flops=2 * M * K * N,
        transcendentals=0,
        bytes_accessed=2 * (M * K + K * N + M * N) + 4 * N,
    )
    return pl.pallas_call(
        _matmul_bias_relu_kernel,
        out_shape=jax.ShapeDtypeStruct((M, N), jnp.bfloat16),
        grid=grid,
        in_specs=[
            pl.BlockSpec((tm, K), lambda i: (i, 0)),
            pl.BlockSpec((K, N), lambda i: (0, 0)),
            pl.BlockSpec((1, N), lambda i: (0, 0)),
        ],
        out_specs=pl.BlockSpec((tm, N), lambda i: (i, 0)),
        compiler_params=pltpu.CompilerParams(
            dimension_semantics=("parallel",),
            vmem_limit_bytes=32 * 1024 * 1024),
        cost_estimate=cost,
    )(x, w, b)


def _duel_head_kernel(x_ref, wh_ref, bh_ref, wo_ref, bo_ref, o_ref):
    # Fused dueling head.  wh = [hidden | duel_hidden] -> (K, 512);
    # wo is block-diagonal (512, 4): cols 0:3 = advantage head, col 3 = value head.
    x = x_ref[...]                                                     # (TB, K) bf16
    h = jnp.dot(x, wh_ref[...], preferred_element_type=jnp.float32)    # (TB, 512) f32
    h = jnp.maximum(h + bh_ref[...], 0.0)
    av = jnp.dot(h, wo_ref[...], preferred_element_type=jnp.float32)   # (TB, 4) f32
    av = av + bo_ref[...]
    o_ref[...] = av[:, 3:4] + av[:, :3]                                # v + a -> (TB, 3)


def duel_head(x, wh, bh, wo, bo, *, tb=256):
    """x: (B, 1568) bf16 -> (B, 3) f32 = duel_output(...) + output(...)."""
    B, K = x.shape
    H2 = wh.shape[1]          # 512 (two concatenated 256-wide hidden branches)
    NO = wo.shape[1]          # 4  (3 advantage cols + 1 value col)
    NA = NO - 1
    tb = min(tb, _round_up(B, 8))
    grid = (pl.cdiv(B, tb),)
    cost = pl.CostEstimate(
        flops=2 * B * K * H2 + 2 * B * H2 * NO,
        transcendentals=0,
        bytes_accessed=2 * (B * K + K * H2) + 4 * (H2 * NO + B * NA),
    )
    return pl.pallas_call(
        _duel_head_kernel,
        out_shape=jax.ShapeDtypeStruct((B, NA), jnp.float32),
        grid=grid,
        in_specs=[
            pl.BlockSpec((tb, K), lambda i: (i, 0)),
            pl.BlockSpec((K, H2), lambda i: (0, 0)),
            pl.BlockSpec((1, H2), lambda i: (0, 0)),
            pl.BlockSpec((H2, NO), lambda i: (0, 0)),
            pl.BlockSpec((1, NO), lambda i: (0, 0)),
        ],
        out_specs=pl.BlockSpec((tb, NA), lambda i: (i, 0)),
        compiler_params=pltpu.CompilerParams(
            dimension_semantics=("parallel",),
            vmem_limit_bytes=32 * 1024 * 1024),
        cost_estimate=cost,
    )(x, wh, bh, wo, bo)


# ---------------------------------------------------------------------------
# Plain-JAX glue: channels-last im2col, param init (torch-equivalent, re-laid-out)
# ---------------------------------------------------------------------------
def im2col_nhwc(x, kh, kw, stride):
    """x: (B, H, W, C) -> (B*OH*OW, kh*kw*C), patches flattened in (kh, kw, C) order."""
    B, H, W, C = x.shape
    OH = (H - kh) // stride + 1
    OW = (W - kw) // stride + 1
    patches = []
    for i in range(kh):
        for j in range(kw):
            patches.append(
                x[:, i:i + stride * OH:stride, j:j + stride * OW:stride, :])
    p = jnp.stack(patches, axis=3)                      # (B, OH, OW, kh*kw, C)
    return p.reshape(B * OH * OW, kh * kw * C), OH, OW


def conv2d_relu_nhwc(x, w2, b, *, kh, kw, stride):
    """x: (B,H,W,Cin) bf16, w2: (kh*kw*Cin, Cout) bf16, b: (1,Cout) f32 -> NHWC bf16."""
    B = x.shape[0]
    cout = w2.shape[1]
    cols, OH, OW = im2col_nhwc(x, kh, kw, stride)       # (B*OH*OW, kh*kw*Cin)
    y = matmul_bias_relu(cols, w2, b)                   # (B*OH*OW, Cout)
    return y.reshape(B, OH, OW, cout)                   # stays channels-last


def _orthogonal(key, rows, cols, gain):
    """Mirrors torch.nn.init.orthogonal_ on a (rows, cols) matrix."""
    a = jax.random.normal(key, (max(rows, cols), min(rows, cols)), jnp.float32)
    q, r = jnp.linalg.qr(a)
    q = q * jnp.sign(jnp.diagonal(r))
    if rows < cols:
        q = q.T
    return (gain * q[:rows, :cols]).astype(jnp.float32)


def _conv_weight(key, cout, cin, kh, kw, gain):
    # Orthogonal on the torch (Cout, Cin*kh*kw) flattened view, then re-laid-out once
    # into im2col (kh, kw, Cin) row order, bf16 for the MXU.
    w = _orthogonal(key, cout, cin * kh * kw, gain).reshape(cout, cin, kh, kw)
    w = jnp.transpose(w, (2, 3, 1, 0)).reshape(kh * kw * cin, cout)
    return w.astype(jnp.bfloat16)


def init_params(key):
    g = 2.0 ** 0.5
    ks = jax.random.split(key, 7)
    p = {}
    p["conv1_w"] = _conv_weight(ks[0], 32, 4, 8, 8, g)      # (256, 32)
    p["conv1_b"] = jnp.zeros((1, 32), jnp.float32)
    p["conv2_w"] = _conv_weight(ks[1], 64, 32, 4, 4, g)     # (512, 64)
    p["conv2_b"] = jnp.zeros((1, 64), jnp.float32)
    p["conv3_w"] = _conv_weight(ks[2], 32, 64, 3, 3, g)     # (576, 32)
    p["conv3_b"] = jnp.zeros((1, 32), jnp.float32)

    # hidden / duel_hidden: torch weight (256, 1568) acting on (C,H,W)-flattened
    # features.  Store as (1568, 256) with rows permuted to our NHWC (H,W,C) flatten
    # order, then concatenate both branches side-by-side for one fused MXU pass.
    def _hidden_w(k):
        w = _orthogonal(k, 256, 32 * 7 * 7, g).T             # (1568, 256), rows (c,h,w)
        w = w.reshape(32, 7, 7, 256).transpose(1, 2, 0, 3)   # rows now (h,w,c)
        return w.reshape(7 * 7 * 32, 256)

    wh = _hidden_w(ks[3])
    wdh = _hidden_w(ks[5])
    p["head_hidden_w"] = jnp.concatenate([wh, wdh], axis=1).astype(jnp.bfloat16)  # (1568, 512)
    p["head_hidden_b"] = jnp.zeros((1, 512), jnp.float32)

    wo = _orthogonal(ks[4], 3, 256, 1.0).T                   # (256, 3)  advantage
    wdo = _orthogonal(ks[6], 1, 256, 1.0).T                  # (256, 1)  value
    wcat = jnp.zeros((512, 4), jnp.float32)
    wcat = wcat.at[:256, :3].set(wo)
    wcat = wcat.at[256:, 3:].set(wdo)
    p["head_out_w"] = wcat                                   # block-diagonal (512, 4)
    p["head_out_b"] = jnp.zeros((1, 4), jnp.float32)
    return p


# ---------------------------------------------------------------------------
# Forward pass (DuelQFunc.forward)
# ---------------------------------------------------------------------------
@jax.jit
def duel_qfunc_forward(params, x):
    # x: (B, 4, 84, 84) f32 NCHW (torch interface).  One-time convert to NHWC bf16.
    x = jnp.transpose(x, (0, 2, 3, 1)).astype(jnp.bfloat16)
    x = conv2d_relu_nhwc(x, params["conv1_w"], params["conv1_b"], kh=8, kw=8, stride=4)  # (B,20,20,32)
    x = conv2d_relu_nhwc(x, params["conv2_w"], params["conv2_b"], kh=4, kw=4, stride=2)  # (B,9,9,64)
    x = conv2d_relu_nhwc(x, params["conv3_w"], params["conv3_b"], kh=3, kw=3, stride=1)  # (B,7,7,32)
    B = x.shape[0]
    feat = x.reshape(B, 7 * 7 * 32)   # NHWC flatten; torch (C,H,W) order folded into weights
    return duel_head(feat,
                     params["head_hidden_w"], params["head_hidden_b"],
                     params["head_out_w"], params["head_out_b"])       # (B, 3) = v + a


if __name__ == "__main__":
    key = jax.random.PRNGKey(0)
    pkey, xkey = jax.random.split(key)
    params = init_params(pkey)
    # Spatial size must be 84 so the trunk yields 32*7*7 features for the hidden Linear.
    x = jax.random.normal(xkey, (2, 4, 84, 84), jnp.float32)
    out = duel_qfunc_forward(params, x)
    out = jax.block_until_ready(out)
    assert out.shape == (2, 3) and out.dtype == jnp.float32
    print("KERNEL_OK")
</pallas_src>

<mosaic_0001>
module attributes {stable_mosaic.version = 11 : i64} {
  func.func @_matmul_bias_relu_kernel(%arg0: i32, %arg1: memref<256x256xbf16, #tpu.memory_space<vmem>>, %arg2: memref<256x32xbf16, #tpu.memory_space<vmem>>, %arg3: memref<1x32xf32, #tpu.memory_space<vmem>>, %arg4: memref<256x32xbf16, #tpu.memory_space<vmem>>) attributes {dimension_semantics = [#tpu.dimension_semantics<parallel>], iteration_bounds = array<i64: 4>, scalar_prefetch = 0 : i64, scratch_operands = 0 : i64, tpu.core_type = #tpu.core_type<tc>, window_params = [{transform_indices = @transform_0, window_bounds = array<i64: 256, 256>}, {pipeline_mode = #tpu.pipeline_mode<synchronous>, transform_indices = @transform_1, window_bounds = array<i64: 256, 32>}, {pipeline_mode = #tpu.pipeline_mode<synchronous>, transform_indices = @transform_2, window_bounds = array<i64: 1, 32>}, {transform_indices = @transform_3, window_bounds = array<i64: 256, 32>}]} {
    %c0 = arith.constant 0 : index
    %c0_0 = arith.constant 0 : index
    %0 = vector.load %arg1[%c0, %c0_0] : memref<256x256xbf16, #tpu.memory_space<vmem>>, vector<256x256xbf16>
    %c0_1 = arith.constant 0 : index
    %c0_2 = arith.constant 0 : index
    %1 = vector.load %arg2[%c0_1, %c0_2] : memref<256x32xbf16, #tpu.memory_space<vmem>>, vector<256x32xbf16>
    %cst = arith.constant dense<0.000000e+00> : vector<256x32xf32>
    %2 = tpu.matmul %0, %1, %cst {dimension_numbers = #tpu.dot_dimension_numbers<[1], [0], [0], [1], [0, 0, 1, 1], [], []>} : vector<256x256xbf16>, vector<256x32xbf16>, vector<256x32xf32> -> vector<256x32xf32>
    %c0_3 = arith.constant 0 : index
    %c0_4 = arith.constant 0 : index
    %3 = vector.load %arg3[%c0_3, %c0_4] : memref<1x32xf32, #tpu.memory_space<vmem>>, vector<1x32xf32>
    %4 = vector.broadcast %3 : vector<1x32xf32> to vector<256x32xf32>
    %5 = arith.addf %2, %4 : vector<256x32xf32>
    %cst_5 = arith.constant 0.000000e+00 : f32
    %6 = vector.broadcast %cst_5 : f32 to vector<256x32xf32>
    %7 = arith.maximumf %5, %6 : vector<256x32xf32>
    %8 = arith.truncf %7 : vector<256x32xf32> to vector<256x32xbf16>
    %c0_6 = arith.constant 0 : index
    %c0_7 = arith.constant 0 : index
    %9 = vector.load %arg4[%c0_6, %c0_7] : memref<256x32xbf16, #tpu.memory_space<vmem>>, vector<256x32xbf16>
    tpu.vector_store %arg4[%c0_6, %c0_7], %8 {strides = array<i32>} : memref<256x32xbf16, #tpu.memory_space<vmem>>, vector<256x32xbf16>,
    return
  }
  func.func @transform_0(%arg0: i32) -> (i32, i32) {
    %c0_i32 = arith.constant 0 : i32
    %c0_i32_0 = arith.constant 0 : i32
    return %arg0, %c0_i32 : i32, i32
  }
  func.func @transform_1(%arg0: i32) -> (i32, i32) {
    %c0_i32 = arith.constant 0 : i32
    %c0_i32_0 = arith.constant 0 : i32
    %c0_i32_1 = arith.constant 0 : i32
    return %c0_i32, %c0_i32_0 : i32, i32
  }
  func.func @transform_2(%arg0: i32) -> (i32, i32) {
    %c0_i32 = arith.constant 0 : i32
    %c0_i32_0 = arith.constant 0 : i32
    %c0_i32_1 = arith.constant 0 : i32
    return %c0_i32, %c0_i32_0 : i32, i32
  }
  func.func @transform_3(%arg0: i32) -> (i32, i32) {
    %c0_i32 = arith.constant 0 : i32
    %c0_i32_0 = arith.constant 0 : i32
    return %arg0, %c0_i32 : i32, i32
  }
}

module attributes {stable_mosaic.version = 11 : i64} {
  func.func @_matmul_bias_relu_kernel(%arg0: i32, %arg1: memref<168x512xbf16, #tpu.memory_space<vmem>>, %arg2: memref<512x64xbf16, #tpu.memory_space<vmem>>, %arg3: memref<1x64xf32, #tpu.memory_space<vmem>>, %arg4: memref<168x64xbf16, #tpu.memory_space<vmem>>) attributes {dimension_semantics = [#tpu.dimension_semantics<parallel>], iteration_bounds = array<i64: 1>, scalar_prefetch = 0 : i64, scratch_operands = 0 : i64, tpu.core_type = #tpu.core_type<tc>, window_params = [{transform_indices = @transform_0, window_bounds = array<i64: 168, 512>}, {pipeline_mode = #tpu.pipeline_mode<synchronous>, transform_indices = @transform_1, window_bounds = array<i64: 512, 64>}, {pipeline_mode = #tpu.pipeline_mode<synchronous>, transform_indices = @transform_2, window_bounds = array<i64: 1, 64>}, {transform_indices = @transform_3, window_bounds = array<i64: 168, 64>}]} {
    %c0 = arith.constant 0 : index
    %c0_0 = arith.constant 0 : index
    %0 = vector.load %arg1[%c0, %c0_0] : memref<168x512xbf16, #tpu.memory_space<vmem>>, vector<168x512xbf16>
    %c0_1 = arith.constant 0 : index
    %c0_2 = arith.constant 0 : index
    %1 = vector.load %arg2[%c0_1, %c0_2] : memref<512x64xbf16, #tpu.memory_space<vmem>>, vector<512x64xbf16>
    %cst = arith.constant dense<0.000000e+00> : vector<168x64xf32>
    %2 = tpu.matmul %0, %1, %cst {dimension_numbers = #tpu.dot_dimension_numbers<[1], [0], [0], [1], [0, 0, 1, 1], [], []>} : vector<168x512xbf16>, vector<512x64xbf16>, vector<168x64xf32> -> vector<168x64xf32>
    %c0_3 = arith.constant 0 : index
    %c0_4 = arith.constant 0 : index
    %3 = vector.load %arg3[%c0_3, %c0_4] : memref<1x64xf32, #tpu.memory_space<vmem>>, vector<1x64xf32>
    %4 = vector.broadcast %3 : vector<1x64xf32> to vector<168x64xf32>
    %5 = arith.addf %2, %4 : vector<168x64xf32>
    %cst_5 = arith.constant 0.000000e+00 : f32
    %6 = vector.broadcast %cst_5 : f32 to vector<168x64xf32>
    %7 = arith.maximumf %5, %6 : vector<168x64xf32>
    %8 = arith.truncf %7 : vector<168x64xf32> to vector<168x64xbf16>
    %c0_6 = arith.constant 0 : index
    %c0_7 = arith.constant 0 : index
    %9 = vector.load %arg4[%c0_6, %c0_7] : memref<168x64xbf16, #tpu.memory_space<vmem>>, vector<168x64xbf16>
    tpu.vector_store %arg4[%c0_6, %c0_7], %8 {strides = array<i32>} : memref<168x64xbf16, #tpu.memory_space<vmem>>, vector<168x64xbf16>,
    return
  }
  func.func @transform_0(%arg0: i32) -> (i32, i32) {
    %c0_i32 = arith.constant 0 : i32
    %c0_i32_0 = arith.constant 0 : i32
    return %arg0, %c0_i32 : i32, i32
  }
  func.func @transform_1(%arg0: i32) -> (i32, i32) {
    %c0_i32 = arith.constant 0 : i32
    %c0_i32_0 = arith.constant 0 : i32
    %c0_i32_1 = arith.constant 0 : i32
    return %c0_i32, %c0_i32_0 : i32, i32
  }
  func.func @transform_2(%arg0: i32) -> (i32, i32) {
    %c0_i32 = arith.constant 0 : i32
    %c0_i32_0 = arith.constant 0 : i32
    %c0_i32_1 = arith.constant 0 : i32
    return %c0_i32, %c0_i32_0 : i32, i32
  }
  func.func @transform_3(%arg0: i32) -> (i32, i32) {
    %c0_i32 = arith.constant 0 : i32
    %c0_i32_0 = arith.constant 0 : i32
    return %arg0, %c0_i32 : i32, i32
  }
}

module attributes {stable_mosaic.version = 11 : i64} {
  func.func @_matmul_bias_relu_kernel(%arg0: i32, %arg1: memref<104x576xbf16, #tpu.memory_space<vmem>>, %arg2: memref<576x32xbf16, #tpu.memory_space<vmem>>, %arg3: memref<1x32xf32, #tpu.memory_space<vmem>>, %arg4: memref<104x32xbf16, #tpu.memory_space<vmem>>) attributes {dimension_semantics = [#tpu.dimension_semantics<parallel>], iteration_bounds = array<i64: 1>, scalar_prefetch = 0 : i64, scratch_operands = 0 : i64, tpu.core_type = #tpu.core_type<tc>, window_params = [{transform_indices = @transform_0, window_bounds = array<i64: 104, 576>}, {pipeline_mode = #tpu.pipeline_mode<synchronous>, transform_indices = @transform_1, window_bounds = array<i64: 576, 32>}, {pipeline_mode = #tpu.pipeline_mode<synchronous>, transform_indices = @transform_2, window_bounds = array<i64: 1, 32>}, {transform_indices = @transform_3, window_bounds = array<i64: 104, 32>}]} {
    %c0 = arith.constant 0 : index
    %c0_0 = arith.constant 0 : index
    %0 = vector.load %arg1[%c0, %c0_0] : memref<104x576xbf16, #tpu.memory_space<vmem>>, vector<104x576xbf16>
    %c0_1 = arith.constant 0 : index
    %c0_2 = arith.constant 0 : index
    %1 = vector.load %arg2[%c0_1, %c0_2] : memref<576x32xbf16, #tpu.memory_space<vmem>>, vector<576x32xbf16>
    %cst = arith.constant dense<0.000000e+00> : vector<104x32xf32>
    %2 = tpu.matmul %0, %1, %cst {dimension_numbers = #tpu.dot_dimension_numbers<[1], [0], [0], [1], [0, 0, 1, 1], [], []>} : vector<104x576xbf16>, vector<576x32xbf16>, vector<104x32xf32> -> vector<104x32xf32>
    %c0_3 = arith.constant 0 : index
    %c0_4 = arith.constant 0 : index
    %3 = vector.load %arg3[%c0_3, %c0_4] : memref<1x32xf32, #tpu.memory_space<vmem>>, vector<1x32xf32>
    %4 = vector.broadcast %3 : vector<1x32xf32> to vector<104x32xf32>
    %5 = arith.addf %2, %4 : vector<104x32xf32>
    %cst_5 = arith.constant 0.000000e+00 : f32
    %6 = vector.broadcast %cst_5 : f32 to vector<104x32xf32>
    %7 = arith.maximumf %5, %6 : vector<104x32xf32>
    %8 = arith.truncf %7 : vector<104x32xf32> to vector<104x32xbf16>
    %c0_6 = arith.constant 0 : index
    %c0_7 = arith.constant 0 : index
    %9 = vector.load %arg4[%c0_6, %c0_7] : memref<104x32xbf16, #tpu.memory_space<vmem>>, vector<104x32xbf16>
    tpu.vector_store %arg4[%c0_6, %c0_7], %8 {strides = array<i32>} : memref<104x32xbf16, #tpu.memory_space<vmem>>, vector<104x32xbf16>,
    return
  }
  func.func @transform_0(%arg0: i32) -> (i32, i32) {
    %c0_i32 = arith.constant 0 : i32
    %c0_i32_0 = arith.constant 0 : i32
    return %arg0, %c0_i32 : i32, i32
  }
  func.func @transform_1(%arg0: i32) -> (i32, i32) {
    %c0_i32 = arith.constant 0 : i32
    %c0_i32_0 = arith.constant 0 : i32
    %c0_i32_1 = arith.constant 0 : i32
    return %c0_i32, %c0_i32_0 : i32, i32
  }
  func.func @transform_2(%arg0: i32) -> (i32, i32) {
    %c0_i32 = arith.constant 0 : i32
    %c0_i32_0 = arith.constant 0 : i32
    %c0_i32_1 = arith.constant 0 : i32
    return %c0_i32, %c0_i32_0 : i32, i32
  }
  func.func @transform_3(%arg0: i32) -> (i32, i32) {
    %c0_i32 = arith.constant 0 : i32
    %c0_i32_0 = arith.constant 0 : i32
    return %arg0, %c0_i32 : i32, i32
  }
}

module attributes {stable_mosaic.version = 11 : i64} {
  func.func @_duel_head_kernel(%arg0: i32, %arg1: memref<8x1568xbf16, #tpu.memory_space<vmem>>, %arg2: memref<1568x512xbf16, #tpu.memory_space<vmem>>, %arg3: memref<1x512xf32, #tpu.memory_space<vmem>>, %arg4: memref<512x4xf32, #tpu.memory_space<vmem>>, %arg5: memref<1x4xf32, #tpu.memory_space<vmem>>, %arg6: memref<8x3xf32, #tpu.memory_space<vmem>>) attributes {dimension_semantics = [#tpu.dimension_semantics<parallel>], iteration_bounds = array<i64: 1>, scalar_prefetch = 0 : i64, scratch_operands = 0 : i64, tpu.core_type = #tpu.core_type<tc>, window_params = [{transform_indices = @transform_0, window_bounds = array<i64: 8, 1568>}, {pipeline_mode = #tpu.pipeline_mode<synchronous>, transform_indices = @transform_1, window_bounds = array<i64: 1568, 512>}, {pipeline_mode = #tpu.pipeline_mode<synchronous>, transform_indices = @transform_2, window_bounds = array<i64: 1, 512>}, {pipeline_mode = #tpu.pipeline_mode<synchronous>, transform_indices = @transform_3, window_bounds = array<i64: 512, 4>}, {pipeline_mode = #tpu.pipeline_mode<synchronous>, transform_indices = @transform_4, window_bounds = array<i64: 1, 4>}, {transform_indices = @transform_5, window_bounds = array<i64: 8, 3>}]} {
    %c0 = arith.constant 0 : index
    %c0_0 = arith.constant 0 : index
    %0 = vector.load %arg1[%c0, %c0_0] : memref<8x1568xbf16, #tpu.memory_space<vmem>>, vector<8x1568xbf16>
    %c0_1 = arith.constant 0 : index
    %c0_2 = arith.constant 0 : index
    %1 = vector.load %arg2[%c0_1, %c0_2] : memref<1568x512xbf16, #tpu.memory_space<vmem>>, vector<1568x512xbf16>
    %cst = arith.constant dense<0.000000e+00> : vector<8x512xf32>
    %2 = tpu.matmul %0, %1, %cst {dimension_numbers = #tpu.dot_dimension_numbers<[1], [0], [0], [1], [0, 0, 1, 1], [], []>} : vector<8x1568xbf16>, vector<1568x512xbf16>, vector<8x512xf32> -> vector<8x512xf32>
    %c0_3 = arith.constant 0 : index
    %c0_4 = arith.constant 0 : index
    %3 = vector.load %arg3[%c0_3, %c0_4] : memref<1x512xf32, #tpu.memory_space<vmem>>, vector<1x512xf32>
    %4 = vector.broadcast %3 : vector<1x512xf32> to vector<8x512xf32>
    %5 = arith.addf %2, %4 : vector<8x512xf32>
    %cst_5 = arith.constant 0.000000e+00 : f32
    %6 = vector.broadcast %cst_5 : f32 to vector<8x512xf32>
    %7 = arith.maximumf %5, %6 : vector<8x512xf32>
    %c0_6 = arith.constant 0 : index
    %c0_7 = arith.constant 0 : index
    %8 = vector.load %arg4[%c0_6, %c0_7] : memref<512x4xf32, #tpu.memory_space<vmem>>, vector<512x4xf32>
    %cst_8 = arith.constant dense<0.000000e+00> : vector<8x4xf32>
    %9 = tpu.matmul %7, %8, %cst_8 {dimension_numbers = #tpu.dot_dimension_numbers<[1], [0], [0], [1], [0, 0, 1, 1], [], []>} : vector<8x512xf32>, vector<512x4xf32>, vector<8x4xf32> -> vector<8x4xf32>
    %c0_9 = arith.constant 0 : index
    %c0_10 = arith.constant 0 : index
    %10 = vector.load %arg5[%c0_9, %c0_10] : memref<1x4xf32, #tpu.memory_space<vmem>>, vector<1x4xf32>
    %11 = vector.broadcast %10 : vector<1x4xf32> to vector<8x4xf32>
    %12 = arith.addf %9, %11 : vector<8x4xf32>
    %13 = vector.extract_strided_slice %12 {offsets = [0, 3], sizes = [8, 1], strides = [1, 1]} : vector<8x4xf32> to vector<8x1xf32>
    %14 = vector.extract_strided_slice %12 {offsets = [0, 0], sizes = [8, 3], strides = [1, 1]} : vector<8x4xf32> to vector<8x3xf32>
    %15 = vector.broadcast %13 : vector<8x1xf32> to vector<8x3xf32>
    %16 = arith.addf %15, %14 : vector<8x3xf32>
    %c0_11 = arith.constant 0 : index
    %c0_12 = arith.constant 0 : index
    %17 = vector.load %arg6[%c0_11, %c0_12] : memref<8x3xf32, #tpu.memory_space<vmem>>, vector<8x3xf32>
    tpu.vector_store %arg6[%c0_11, %c0_12], %16 {strides = array<i32>} : memref<8x3xf32, #tpu.memory_space<vmem>>, vector<8x3xf32>,
    return
  }
  func.func @transform_0(%arg0: i32) -> (i32, i32) {
    %c0_i32 = arith.constant 0 : i32
    %c0_i32_0 = arith.constant 0 : i32
    return %arg0, %c0_i32 : i32, i32
  }
  func.func @transform_1(%arg0: i32) -> (i32, i32) {
    %c0_i32 = arith.constant 0 : i32
    %c0_i32_0 = arith.constant 0 : i32
    %c0_i32_1 = arith.constant 0 : i32
    return %c0_i32, %c0_i32_0 : i32, i32
  }
  func.func @transform_2(%arg0: i32) -> (i32, i32) {
    %c0_i32 = arith.constant 0 : i32
    %c0_i32_0 = arith.constant 0 : i32
    %c0_i32_1 = arith.constant 0 : i32
    return %c0_i32, %c0_i32_0 : i32, i32
  }
  func.func @transform_3(%arg0: i32) -> (i32, i32) {
    %c0_i32 = arith.constant 0 : i32
    %c0_i32_0 = arith.constant 0 : i32
    %c0_i32_1 = arith.constant 0 : i32
    return %c0_i32, %c0_i32_0 : i32, i32
  }
  func.func @transform_4(%arg0: i32) -> (i32, i32) {
    %c0_i32 = arith.constant 0 : i32
    %c0_i32_0 = arith.constant 0 : i32
    %c0_i32_1 = arith.constant 0 : i32
    return %c0_i32, %c0_i32_0 : i32, i32
  }
  func.func @transform_5(%arg0: i32) -> (i32, i32) {
    %c0_i32 = arith.constant 0 : i32
    %c0_i32_0 = arith.constant 0 : i32
    return %arg0, %c0_i32 : i32, i32
  }
}

</mosaic_0001>

<llo_original>
// kernel: duel_qfunc_forward.4
$region0: #{duel_qfunc_forward.4}
  #allocation0 [shape = 'u32[]', space=smem, size = 0x4, offset = 0x4, fixed_abs, tag = 'smem constant byte address 0x4 - core index']
  #allocation1 [shape = 'u32[72,128]{1,0:T(1,128)}', space=vmem, size = 0x9000, scoped, tag = 'internal scratch']
  %s0 = inlined_call_operand.vmem [shape: bf16[800,256], index: 0, kind: input, shape index: {}]
  %s1 = inlined_call_operand.vmem [shape: bf16[256,32], index: 1, kind: input, shape index: {}]
  %s2 = inlined_call_operand.vmem [shape: f32[1,32], index: 2, kind: input, shape index: {}]
  %s3 = inlined_call_operand.vmem [shape: bf16[800,32], index: 3, kind: output, shape index: {}]
  %s4 = sld [smem:[#allocation0]]
  $region89: #{duel_qfunc_forward.4} parent=0
    _
  %s6 = ssub.s32 1, %s4
  %s7 = scalar_select 0, %s6, %s4
  $region1: #{duel_qfunc_forward.4} parent=0
    #allocation2 [shape = 'u8[131072]{0}', space=vmem, size = 0x20000, scoped, tag = 'output window, operand 0']
    loop: start=0, step=1, limit=6
    $region2: #{duel_qfunc_forward.4} parent=1 // loop_pre_header
      _
    $region3: #{duel_qfunc_forward.4} parent=1 // loop_header
      %s9 = sphi 0, %s13
      %p10 = scmp.ge.s32.totalorder %s9, 6
      %s19 = sphi 0, %s21
      %s22 = sphi 0, %s19
      %s23 = sphi 0, %s22
      %s39 = sphi 0, %s23
      %s43 = sphi 0, %s43
      %s45 = sphi 0, %s43
      %s46 = sphi 0, %s45
      %s60 = sphi 0, %s46
      %s64 = sphi 0, %s64
      %s66 = sphi 0, %s64
      %s67 = sphi 0, %s66
      %s81 = sphi 0, %s67
      %s87 = sphi 0, %s89
      %s90 = sphi 0, %s87
      %s91 = sphi 0, %s90
      %s107 = sphi 0, %s91
    $region4: #{duel_qfunc_forward.4} parent=1 // loop_header_branch
      %12 = sbr.rel (%p10) target = $region8
    $region5: #{duel_qfunc_forward.4} parent=1 // loop_body
      %s14 = ssub.s32 %s9, 1
      %s15 = ssub.s32 %s9, 2
      %s16 = sadd.s32 %s9, 1
      %s17 = ssub.s32 %s9, %s16
      %p18 = scmp.eq.s32.totalorder %s17, 0
      %s20 = sadd.s32 %s19, 1
      %s21 = scalar_select %p18, %s19, %s20
      %p24 = pneg %p18
      %p25 = scmp.eq.s32.totalorder %s9, 3
      %p26 = por %p24, %p25
      %p27 = scmp.ne.s32.totalorder %s19, %s22
      %p28 = scmp.eq.s32.totalorder %s9, 0
      %p29 = por %p27, %p28
      %p30 = scmp.ne.s32.totalorder %s19, %s22
      %p31 = scmp.eq.s32.totalorder %s14, 3
      %p32 = por %p30, %p31
      %p33 = scmp.ne.s32.totalorder %s22, %s23
      %p34 = scmp.eq.s32.totalorder %s14, 0
      %p35 = por %p33, %p34
      %p36 = scmp.ne.s32.totalorder %s22, %s23
      %p37 = scmp.eq.s32.totalorder %s15, 3
      %p38 = por %p36, %p37
      %p40 = scmp.ne.s32.totalorder %s23, %s39
      %p41 = scmp.eq.s32.totalorder %s15, 0
      %p42 = por %p40, %p41
      %s44 = sadd.s32 %s43, 1
      %p47 = scmp.eq.s32.totalorder %s9, 3
      %p48 = scmp.ne.s32.totalorder %s43, %s45
      %p49 = scmp.eq.s32.totalorder %s9, 0
      %p50 = por %p48, %p49
      %p51 = scmp.ne.s32.totalorder %s43, %s45
      %p52 = scmp.eq.s32.totalorder %s14, 3
      %p53 = por %p51, %p52
      %p54 = scmp.ne.s32.totalorder %s45, %s46
      %p55 = scmp.eq.s32.totalorder %s14, 0
      %p56 = por %p54, %p55
      %p57 = scmp.ne.s32.totalorder %s45, %s46
      %p58 = scmp.eq.s32.totalorder %s15, 3
      %p59 = por %p57, %p58
      %p61 = scmp.ne.s32.totalorder %s46, %s60
      %p62 = scmp.eq.s32.totalorder %s15, 0
      %p63 = por %p61, %p62
      %s65 = sadd.s32 %s64, 1
      %p68 = scmp.eq.s32.totalorder %s9, 3
      %p69 = scmp.ne.s32.totalorder %s64, %s66
      %p70 = scmp.eq.s32.totalorder %s9, 0
      %p71 = por %p69, %p70
      %p72 = scmp.ne.s32.totalorder %s64, %s66
      %p73 = scmp.eq.s32.totalorder %s14, 3
      %p74 = por %p72, %p73
      %p75 = scmp.ne.s32.totalorder %s66, %s67
      %p76 = scmp.eq.s32.totalorder %s14, 0
      %p77 = por %p75, %p76
      %p78 = scmp.ne.s32.totalorder %s66, %s67
      %p79 = scmp.eq.s32.totalorder %s15, 3
      %p80 = por %p78, %p79
      %p82 = scmp.ne.s32.totalorder %s67, %s81
      %p83 = scmp.eq.s32.totalorder %s15, 0
      %p84 = por %p82, %p83
      %s85 = ssub.s32 %s9, %s16
      %p86 = scmp.eq.s32.totalorder %s85, 0
      %s88 = sadd.s32 %s87, 1
      %s89 = scalar_select %p86, %s87, %s88
      %p92 = pneg %p86
      %p93 = scmp.eq.s32.totalorder %s9, 3
      %p94 = por %p92, %p93
      %p95 = scmp.ne.s32.totalorder %s87, %s90
      %p96 = scmp.eq.s32.totalorder %s9, 0
      %p97 = por %p95, %p96
      %p98 = scmp.ne.s32.totalorder %s87, %s90
      %p99 = scmp.eq.s32.totalorder %s14, 3
      %p100 = por %p98, %p99
      %p101 = scmp.ne.s32.totalorder %s90, %s91
      %p102 = scmp.eq.s32.totalorder %s14, 0
      %p103 = por %p101, %p102
      %p104 = scmp.ne.s32.totalorder %s90, %s91
      %p105 = scmp.eq.s32.totalorder %s15, 3
      %p106 = por %p104, %p105
      %p108 = scmp.ne.s32.totalorder %s91, %s107
      %p109 = scmp.eq.s32.totalorder %s15, 0
      %p110 = por %p108, %p109
      %p111 = scmp.le.s32.totalorder 1, %s9
      %p112 = scmp.lt.s32.totalorder %s9, 5
      %p113 = pnand %p111, %p112
      %p114 = pneg %p113
      // Predicated region
      $region9: #{duel_qfunc_forward.4} parent=5 // pred_check
        _
      $region10: #{duel_qfunc_forward.4} parent=5 // pred_check_branch
        %116 = sbr.rel (%p113) target = $region12
      $region11: #{duel_qfunc_forward.4} parent=5 // pred_region
        %s117 = ssub.s32 %s9, 1
        // Predicated region
        $region13: #{duel_qfunc_forward.4} parent=11 // pred_check
          %p118 = pneg %p56
        $region14: #{duel_qfunc_forward.4} parent=11 // pred_check_branch
          %120 = sbr.rel (%p118) target = $region16
        $region15: #{duel_qfunc_forward.4} parent=11 // pred_region
          _
        $region16: #{duel_qfunc_forward.4} parent=11 // pred_fallthru
          _
        // Predicated region
        $region17: #{duel_qfunc_forward.4} parent=11 // pred_check
          %p121 = pneg %p77
        $region18: #{duel_qfunc_forward.4} parent=11 // pred_check_branch
          %123 = sbr.rel (%p121) target = $region20
        $region19: #{duel_qfunc_forward.4} parent=11 // pred_region
          _
        $region20: #{duel_qfunc_forward.4} parent=11 // pred_fallthru
          _
      $region12: #{duel_qfunc_forward.4} parent=5 // pred_fallthru
        _
      %p124 = scmp.lt.s32.totalorder %s9, 4
      // Predicated region
      $region21: #{duel_qfunc_forward.4} parent=5 // pred_check
        %p125 = pneg %p124
      $region22: #{duel_qfunc_forward.4} parent=5 // pred_check_branch
        %127 = sbr.rel (%p125) target = $region24
      $region23: #{duel_qfunc_forward.4} parent=5 // pred_region
        // Predicated region
        $region25: #{duel_qfunc_forward.4} parent=23 // pred_check
          %p128 = pneg %p29
        $region26: #{duel_qfunc_forward.4} parent=23 // pred_check_branch
          %130 = sbr.rel (%p128) target = $region28
        $region27: #{duel_qfunc_forward.4} parent=23 // pred_region
          %s131 = smul.u32 32, %s9
          %s132 = ssub.s32 100, %s131
          %p133 = scmp.lt.s32.totalorder %s132, 32
          %s134 = scalar_select %p133, %s132, 32
          %s135 = smul.u32 4, %s134
          %s136 = smul.u32 %s135, 2
          %p137 = scmp.lt.s32.totalorder %s131, 99
          %s138 = scalar_select %p137, %s131, 99
          %s139 = smul.addr %s138, 2
          %s140 = smul.addr %s139, 4
          %s141 = scalar_lea.vmem %s0, %s140
          %s142 = smul.u32 32, %s9
          %s143 = ssub.s32 100, %s142
          %p144 = scmp.lt.s32.totalorder %s143, 32
          %s145 = scalar_select %p144, %s143, 32
          %s146 = smul.u32 4, %s145
          %s147 = smul.u32 %s146, 2
        $region28: #{duel_qfunc_forward.4} parent=23 // pred_fallthru
          _
      $region24: #{duel_qfunc_forward.4} parent=5 // pred_fallthru
        _
      %p148 = scmp.le.s32.totalorder 1, %s9
      %p149 = scmp.lt.s32.totalorder %s9, 5
      %p150 = pnand %p148, %p149
      %p151 = pneg %p150
      // Predicated region
      $region29: #{duel_qfunc_forward.4} parent=5 // pred_check
        _
      $region30: #{duel_qfunc_forward.4} parent=5 // pred_check_branch
        %153 = sbr.rel (%p150) target = $region32
      $region31: #{duel_qfunc_forward.4} parent=5 // pred_region
        %s154 = ssub.s32 %s9, 1
        %s155 = smul.u32 32, %s14
        %s156 = ssub.s32 100, %s155
        %p157 = scmp.lt.s32.totalorder %s156, 32
        %s158 = scalar_select %p157, %s156, 32
        %s159 = smul.u32 4, %s158
        %s160 = smul.u32 %s159, 2
        %p161 = scmp.lt.s32.totalorder %s155, 99
        %s162 = scalar_select %p161, %s155, 99
        %s163 = smul.addr %s162, 2
        %s164 = smul.addr %s163, 4
        %s165 = scalar_lea.vmem %s0, %s164
        %p166 = pneg %p35
        %p167 = pneg %p32
        %p168 = pneg %p56
        %p169 = pneg %p53
        %p170 = pneg %p77
        %p171 = pneg %p74
        %p172 = pneg %p103
        %p173 = pneg %p100
        %s174 = sand.u32 %s90, 1
        %s175 = sand.u32 %s90, 1
        %s176 = smul.addr %s175, 128
        %s177 = scalar_lea.vmem [#allocation2], %s176
        %s178 = smul.u32 32, %s14
        %s179 = ssub.s32 100, %s178
        %p180 = scmp.lt.s32.totalorder %s179, 32
        %s181 = scalar_select %p180, %s179, 32
        %s182 = smul.u32 4, %s181
        %s183 = smul.u32 %s182, 2
        %p184 = scmp.lt.s32.totalorder %s178, 99
        %s185 = scalar_select %p184, %s178, 99
        %s186 = smul.addr %s185, 2
        %s187 = smul.addr %s186, 4
        %s188 = scalar_lea.vmem %s0, %s187
        %s189 = smul.u32 32, %s14
        %s190 = ssub.s32 100, %s189
        %p191 = scmp.lt.s32.totalorder %s190, 32
        %s192 = scalar_select %p191, %s190, 32
        %s193 = smul.u32 4, %s192
        %s194 = smul.u32 %s193, 2
        %s195 = smul.u32 32, %s14
        %s196 = ssub.s32 100, %s195
        %p197 = scmp.lt.s32.totalorder %s196, 32
        %s198 = scalar_select %p197, %s196, 32
        %s199 = smul.u32 4, %s198
        %v200 = vld [vmem:[%s188] sm:$0xff]
        %v201 = vld [vmem:[%s188 + $0x8] sm:$0xff]
        %v202 = vld [vmem:[%s188 + $0x10] sm:$0xff]
        %v203 = vld [vmem:[%s188 + $0x18] sm:$0xff]
        %v204 = vld [vmem:[%s188 + $0x20] sm:$0xff]
        %v205 = vld [vmem:[%s188 + $0x28] sm:$0xff]
        %v206 = vld [vmem:[%s188 + $0x30] sm:$0xff]
        %v207 = vld [vmem:[%s188 + $0x38] sm:$0xff]
        %v208 = vld [vmem:[%s188 + $0x40] sm:$0xff]
        %v209 = vld [vmem:[%s188 + $0x48] sm:$0xff]
        %v210 = vld [vmem:[%s188 + $0x50] sm:$0xff]
        %v211 = vld [vmem:[%s188 + $0x58] sm:$0xff]
        %v212 = vld [vmem:[%s188 + $0x60] sm:$0xff]
        %v213 = vld [vmem:[%s188 + $0x68] sm:$0xff]
        %v214 = vld [vmem:[%s188 + $0x70] sm:$0xff]
        %v215 = vld [vmem:[%s188 + $0x78] sm:$0xff]
        %v216 = vld [vmem:[%s188 + $0x80] sm:$0xff]
        %v217 = vld [vmem:[%s188 + $0x88] sm:$0xff]
        %v218 = vld [vmem:[%s188 + $0x90] sm:$0xff]
        %v219 = vld [vmem:[%s188 + $0x98] sm:$0xff]
        %v220 = vld [vmem:[%s188 + $0xa0] sm:$0xff]
        %v221 = vld [vmem:[%s188 + $0xa8] sm:$0xff]
        %v222 = vld [vmem:[%s188 + $0xb0] sm:$0xff]
        %v223 = vld [vmem:[%s188 + $0xb8] sm:$0xff]
        %v224 = vld [vmem:[%s188 + $0xc0] sm:$0xff]
        %v225 = vld [vmem:[%s188 + $0xc8] sm:$0xff]
        %v226 = vld [vmem:[%s188 + $0xd0] sm:$0xff]
        %v227 = vld [vmem:[%s188 + $0xd8] sm:$0xff]
        %v228 = vld [vmem:[%s188 + $0xe0] sm:$0xff]
        %v229 = vld [vmem:[%s188 + $0xe8] sm:$0xff]
        %v230 = vld [vmem:[%s188 + $0xf0] sm:$0xff]
        %v231 = vld [vmem:[%s188 + $0xf8] sm:$0xff]
        %v232 = vld [vmem:[%s1] sm:$0xf]
        %v233 = vld [vmem:[%s1 + $0x4] sm:$0xf]
        %v234 = vld [vmem:[%s1 + $0x8] sm:$0xf]
        %v235 = vld [vmem:[%s1 + $0xc] sm:$0xf]
        %v236 = vld [vmem:[%s1 + $0x10] sm:$0xf]
        %v237 = vld [vmem:[%s1 + $0x14] sm:$0xf]
        %v238 = vld [vmem:[%s1 + $0x18] sm:$0xf]
        %v239 = vld [vmem:[%s1 + $0x1c] sm:$0xf]
        %v240 = vld [vmem:[%s1 + $0x20] sm:$0xf]
        %v241 = vld [vmem:[%s1 + $0x24] sm:$0xf]
        %v242 = vld [vmem:[%s1 + $0x28] sm:$0xf]
        %v243 = vld [vmem:[%s1 + $0x2c] sm:$0xf]
        %v244 = vld [vmem:[%s1 + $0x30] sm:$0xf]
        %v245 = vld [vmem:[%s1 + $0x34] sm:$0xf]
        %v246 = vld [vmem:[%s1 + $0x38] sm:$0xf]
        %v247 = vld [vmem:[%s1 + $0x3c] sm:$0xf]
        %v248 = vld [vmem:[%s1 + $0x40] sm:$0xf]
        %v249 = vld [vmem:[%s1 + $0x44] sm:$0xf]
        %v250 = vld [vmem:[%s1 + $0x48] sm:$0xf]
        %v251 = vld [vmem:[%s1 + $0x4c] sm:$0xf]
        %v252 = vld [vmem:[%s1 + $0x50] sm:$0xf]
        %v253 = vld [vmem:[%s1 + $0x54] sm:$0xf]
        %v254 = vld [vmem:[%s1 + $0x58] sm:$0xf]
        %v255 = vld [vmem:[%s1 + $0x5c] sm:$0xf]
        %v256 = vld [vmem:[%s1 + $0x60] sm:$0xf]
        %v257 = vld [vmem:[%s1 + $0x64] sm:$0xf]
        %v258 = vld [vmem:[%s1 + $0x68] sm:$0xf]
        %v259 = vld [vmem:[%s1 + $0x6c] sm:$0xf]
        %v260 = vld [vmem:[%s1 + $0x70] sm:$0xf]
        %v261 = vld [vmem:[%s1 + $0x74] sm:$0xf]
        %v262 = vld [vmem:[%s1 + $0x78] sm:$0xf]
        %v263 = vld [vmem:[%s1 + $0x7c] sm:$0xf]
        %v264 = vld [vmem:[%s2] sm:$0x1]
        %v266 = vperm.slane %v264, 0
        %v300 = vunpack.c.l.b16 %v200
        %v301 = vunpack.c.h.b16 %v200
        %v302 = vunpack.c.l.b16 %v201
        %v303 = vunpack.c.h.b16 %v201
        %v304 = vunpack.c.l.b16 %v202
        %v305 = vunpack.c.h.b16 %v202
        %v306 = vunpack.c.l.b16 %v203
        %v307 = vunpack.c.h.b16 %v203
        %v308 = vunpack.c.l.b16 %v204
        %v309 = vunpack.c.h.b16 %v204
        %v310 = vunpack.c.l.b16 %v205
        %v311 = vunpack.c.h.b16 %v205
        %v312 = vunpack.c.l.b16 %v206
        %v313 = vunpack.c.h.b16 %v206
        %v314 = vunpack.c.l.b16 %v207
        %v315 = vunpack.c.h.b16 %v207
        %v316 = vunpack.c.l.b16 %v208
        %v317 = vunpack.c.h.b16 %v208
        %v318 = vunpack.c.l.b16 %v209
        %v319 = vunpack.c.h.b16 %v209
        %v320 = vunpack.c.l.b16 %v210
        %v321 = vunpack.c.h.b16 %v210
        %v322 = vunpack.c.l.b16 %v211
        %v323 = vunpack.c.h.b16 %v211
        %v324 = vunpack.c.l.b16 %v212
        %v325 = vunpack.c.h.b16 %v212
        %v326 = vunpack.c.l.b16 %v213
        %v327 = vunpack.c.h.b16 %v213
        %v328 = vunpack.c.l.b16 %v214
        %v329 = vunpack.c.h.b16 %v214
        %v330 = vunpack.c.l.b16 %v215
        %v331 = vunpack.c.h.b16 %v215
        %v332 = vunpack.c.l.b16 %v216
        %v333 = vunpack.c.h.b16 %v216
        %v334 = vunpack.c.l.b16 %v217
        %v335 = vunpack.c.h.b16 %v217
        %v336 = vunpack.c.l.b16 %v218
        %v337 = vunpack.c.h.b16 %v218
        %v338 = vunpack.c.l.b16 %v219
        %v339 = vunpack.c.h.b16 %v219
        %v340 = vunpack.c.l.b16 %v220
        %v341 = vunpack.c.h.b16 %v220
        %v342 = vunpack.c.l.b16 %v221
        %v343 = vunpack.c.h.b16 %v221
        %v344 = vunpack.c.l.b16 %v222
        %v345 = vunpack.c.h.b16 %v222
        %v346 = vunpack.c.l.b16 %v223
        %v347 = vunpack.c.h.b16 %v223
        %v348 = vunpack.c.l.b16 %v224
        %v349 = vunpack.c.h.b16 %v224
        %v350 = vunpack.c.l.b16 %v225
        %v351 = vunpack.c.h.b16 %v225
        %v352 = vunpack.c.l.b16 %v226
        %v353 = vunpack.c.h.b16 %v226
        %v354 = vunpack.c.l.b16 %v227
        %v355 = vunpack.c.h.b16 %v227
        %v356 = vunpack.c.l.b16 %v228
        %v357 = vunpack.c.h.b16 %v228
        %v358 = vunpack.c.l.b16 %v229
        %v359 = vunpack.c.h.b16 %v229
        %v360 = vunpack.c.l.b16 %v230
        %v361 = vunpack.c.h.b16 %v230
        %v362 = vunpack.c.l.b16 %v231
        %v363 = vunpack.c.h.b16 %v231
        %v364 = vpack.c.b16 %v302, %v300
        %v365 = vpack.c.b16 %v303, %v301
        %v366 = vpack.c.b16 %v306, %v304
        %v367 = vpack.c.b16 %v307, %v305
        %v368 = vpack.c.b16 %v310, %v308
        %v369 = vpack.c.b16 %v311, %v309
        %v370 = vpack.c.b16 %v314, %v312
        %v371 = vpack.c.b16 %v315, %v313
        %v372 = vpack.c.b16 %v318, %v316
        %v373 = vpack.c.b16 %v319, %v317
        %v374 = vpack.c.b16 %v322, %v320
        %v375 = vpack.c.b16 %v323, %v321
        %v376 = vpack.c.b16 %v326, %v324
        %v377 = vpack.c.b16 %v327, %v325
        %v378 = vpack.c.b16 %v330, %v328
        %v379 = vpack.c.b16 %v331, %v329
        %v380 = vpack.c.b16 %v334, %v332
        %v381 = vpack.c.b16 %v335, %v333
        %v382 = vpack.c.b16 %v338, %v336
        %v383 = vpack.c.b16 %v339, %v337
        %v384 = vpack.c.b16 %v342, %v340
        %v385 = vpack.c.b16 %v343, %v341
        %v386 = vpack.c.b16 %v346, %v344
        %v387 = vpack.c.b16 %v347, %v345
        %v388 = vpack.c.b16 %v350, %v348
        %v389 = vpack.c.b16 %v351, %v349
        %v390 = vpack.c.b16 %v354, %v352
        %v391 = vpack.c.b16 %v355, %v353
        %v392 = vpack.c.b16 %v358, %v356
        %v393 = vpack.c.b16 %v359, %v357
        %v394 = vpack.c.b16 %v362, %v360
        %v395 = vpack.c.b16 %v363, %v361
        %v460 = vunpack.c.l.b16 %v232
        %v461 = vunpack.c.l.b16 %v233
        %v462 = vunpack.c.l.b16 %v234
        %v463 = vunpack.c.l.b16 %v235
        %v464 = vunpack.c.l.b16 %v236
        %v465 = vunpack.c.l.b16 %v237
        %v466 = vunpack.c.l.b16 %v238
        %v467 = vunpack.c.l.b16 %v239
        %v468 = vunpack.c.l.b16 %v240
        %v469 = vunpack.c.l.b16 %v241
        %v470 = vunpack.c.l.b16 %v242
        %v471 = vunpack.c.l.b16 %v243
        %v472 = vunpack.c.l.b16 %v244
        %v473 = vunpack.c.l.b16 %v245
        %v474 = vunpack.c.l.b16 %v246
        %v475 = vunpack.c.l.b16 %v247
        %v476 = vunpack.c.l.b16 %v248
        %v477 = vunpack.c.l.b16 %v249
        %v478 = vunpack.c.l.b16 %v250
        %v479 = vunpack.c.l.b16 %v251
        %v480 = vunpack.c.l.b16 %v252
        %v481 = vunpack.c.l.b16 %v253
        %v482 = vunpack.c.l.b16 %v254
        %v483 = vunpack.c.l.b16 %v255
        %v484 = vunpack.c.l.b16 %v256
        %v485 = vunpack.c.l.b16 %v257
        %v486 = vunpack.c.l.b16 %v258
        %v487 = vunpack.c.l.b16 %v259
        %v488 = vunpack.c.l.b16 %v260
        %v489 = vunpack.c.l.b16 %v261
        %v490 = vunpack.c.l.b16 %v262
        %v491 = vunpack.c.l.b16 %v263
        %v492 = vpack.c.b16 %v461, %v460
        %v493 = vpack.c.b16 %v463, %v462
        %v494 = vpack.c.b16 %v465, %v464
        %v495 = vpack.c.b16 %v467, %v466
        %v496 = vpack.c.b16 %v469, %v468
        %v497 = vpack.c.b16 %v471, %v470
        %v498 = vpack.c.b16 %v473, %v472
        %v499 = vpack.c.b16 %v475, %v474
        %v500 = vpack.c.b16 %v477, %v476
        %v501 = vpack.c.b16 %v479, %v478
        %v502 = vpack.c.b16 %v481, %v480
        %v503 = vpack.c.b16 %v483, %v482
        %v504 = vpack.c.b16 %v485, %v484
        %v505 = vpack.c.b16 %v487, %v486
        %v506 = vpack.c.b16 %v489, %v488
        %v507 = vpack.c.b16 %v491, %v490
        %524 = vmatpush.bf16.msra.mxu0 %v499
        %525 = vmatpush.bf16.msra.mxu0 %v498
        %526 = vmatpush.bf16.msra.mxu0 %v497
        %527 = vmatpush.bf16.msra.mxu0 %v496
        %528 = vmatpush.bf16.msra.mxu0 %v495
        %529 = vmatpush.bf16.msra.mxu0 %v494
        %530 = vmatpush.bf16.msra.mxu0 %v493
        %531 = vmatpush.bf16.msra.mxu0 %v492
        %532 = vmatmul.bf16.gmra.mxu0 %v364
        %v533 = vpop.f32.mrf.mxu0
        %v534 = vadd.f32 %v266, %v533
        %v535 = vpop.f32.mrf.mxu0
        %v536 = vadd.f32 %v266, %v535
        %537 = vmatmul.bf16.gmra.mxu0 %v366
        %v538 = vpop.f32.mrf.mxu0
        %v539 = vadd.f32 %v266, %v538
        %v540 = vpop.f32.mrf.mxu0
        %v541 = vadd.f32 %v266, %v540
        %542 = vmatmul.bf16.gmra.mxu0 %v368
        %v543 = vpop.f32.mrf.mxu0
        %v544 = vadd.f32 %v266, %v543
        %v545 = vpop.f32.mrf.mxu0
        %v546 = vadd.f32 %v266, %v545
        %547 = vmatmul.bf16.gmra.mxu0 %v370
        %v548 = vpop.f32.mrf.mxu0
        %v549 = vadd.f32 %v266, %v548
        %v550 = vpop.f32.mrf.mxu0
        %v551 = vadd.f32 %v266, %v550
        %552 = vmatmul.bf16.gmra.mxu0 %v372
        %v553 = vpop.f32.mrf.mxu0
        %v554 = vadd.f32 %v266, %v553
        %v555 = vpop.f32.mrf.mxu0
        %v556 = vadd.f32 %v266, %v555
        %557 = vmatmul.bf16.gmra.mxu0 %v374
        %v558 = vpop.f32.mrf.mxu0
        %v559 = vadd.f32 %v266, %v558
        %v560 = vpop.f32.mrf.mxu0
        %v561 = vadd.f32 %v266, %v560
        %562 = vmatmul.bf16.gmra.mxu0 %v376
        %v563 = vpop.f32.mrf.mxu0
        %v564 = vadd.f32 %v266, %v563
        %v565 = vpop.f32.mrf.mxu0
        %v566 = vadd.f32 %v266, %v565
        %567 = vmatmul.bf16.gmra.mxu0 %v378
        %v568 = vpop.f32.mrf.mxu0
        %v569 = vadd.f32 %v266, %v568
        %v570 = vpop.f32.mrf.mxu0
        %v571 = vadd.f32 %v266, %v570
        %572 = vmatmul.bf16.gmra.mxu0 %v380
        %v573 = vpop.f32.mrf.mxu0
        %v574 = vadd.f32 %v266, %v573
        %v575 = vpop.f32.mrf.mxu0
        %v576 = vadd.f32 %v266, %v575
        %577 = vmatmul.bf16.gmra.mxu0 %v382
        %v578 = vpop.f32.mrf.mxu0
        %v579 = vadd.f32 %v266, %v578
        %v580 = vpop.f32.mrf.mxu0
        %v581 = vadd.f32 %v266, %v580
        %582 = vmatmul.bf16.gmra.mxu0 %v384
        %v583 = vpop.f32.mrf.mxu0
        %v584 = vadd.f32 %v266, %v583
        %v585 = vpop.f32.mrf.mxu0
        %v586 = vadd.f32 %v266, %v585
        %587 = vmatmul.bf16.gmra.mxu0 %v386
        %v588 = vpop.f32.mrf.mxu0
        %v589 = vadd.f32 %v266, %v588
        %v590 = vpop.f32.mrf.mxu0
        %v591 = vadd.f32 %v266, %v590
        %592 = vmatmul.bf16.gmra.mxu0 %v388
        %v593 = vpop.f32.mrf.mxu0
        %v594 = vadd.f32 %v266, %v593
        %v595 = vpop.f32.mrf.mxu0
        %v596 = vadd.f32 %v266, %v595
        %597 = vmatmul.bf16.gmra.mxu0 %v390
        %v598 = vpop.f32.mrf.mxu0
        %v599 = vadd.f32 %v266, %v598
        %v600 = vpop.f32.mrf.mxu0
        %v601 = vadd.f32 %v266, %v600
        %602 = vmatmul.bf16.gmra.mxu0 %v392
        %v603 = vpop.f32.mrf.mxu0
        %v604 = vadd.f32 %v266, %v603
        %v605 = vpop.f32.mrf.mxu0
        %v606 = vadd.f32 %v266, %v605
        %607 = vmatmul.bf16.gmra.mxu0 %v394
        %v608 = vpop.f32.mrf.mxu0
        %v609 = vadd.f32 %v266, %v608
        %v610 = vpop.f32.mrf.mxu0
        %v611 = vadd.f32 %v266, %v610
        %612 = vdwg.mxu0
        %613 = vmatpush.bf16.msra.mxu0 %v507
        %614 = vmatpush.bf16.msra.mxu0 %v506
        %615 = vmatpush.bf16.msra.mxu0 %v505
        %616 = vmatpush.bf16.msra.mxu0 %v504
        %617 = vmatpush.bf16.msra.mxu0 %v503
        %618 = vmatpush.bf16.msra.mxu0 %v502
        %619 = vmatpush.bf16.msra.mxu0 %v501
        %620 = vmatpush.bf16.msra.mxu0 %v500
        %621 = vmatmul.bf16.gmra.mxu0 %v365
        %v622 = vpop.f32.mrf.mxu0
        %v623 = vadd.f32 %v534, %v622
        %v624 = vpop.f32.mrf.mxu0
        %v625 = vadd.f32 %v536, %v624
        %626 = vmatmul.bf16.gmra.mxu0 %v367
        %v627 = vpop.f32.mrf.mxu0
        %v628 = vadd.f32 %v539, %v627
        %v629 = vpop.f32.mrf.mxu0
        %v630 = vadd.f32 %v541, %v629
        %631 = vmatmul.bf16.gmra.mxu0 %v369
        %v632 = vpop.f32.mrf.mxu0
        %v633 = vadd.f32 %v544, %v632
        %v634 = vpop.f32.mrf.mxu0
        %v635 = vadd.f32 %v546, %v634
        %636 = vmatmul.bf16.gmra.mxu0 %v371
        %v637 = vpop.f32.mrf.mxu0
        %v638 = vadd.f32 %v549, %v637
        %v639 = vpop.f32.mrf.mxu0
        %v640 = vadd.f32 %v551, %v639
        %641 = vmatmul.bf16.gmra.mxu0 %v373
        %v642 = vpop.f32.mrf.mxu0
        %v643 = vadd.f32 %v554, %v642
        %v644 = vpop.f32.mrf.mxu0
        %v645 = vadd.f32 %v556, %v644
        %646 = vmatmul.bf16.gmra.mxu0 %v375
        %v647 = vpop.f32.mrf.mxu0
        %v648 = vadd.f32 %v559, %v647
        %v649 = vpop.f32.mrf.mxu0
        %v650 = vadd.f32 %v561, %v649
        %651 = vmatmul.bf16.gmra.mxu0 %v377
        %v652 = vpop.f32.mrf.mxu0
        %v653 = vadd.f32 %v564, %v652
        %v654 = vpop.f32.mrf.mxu0
        %v655 = vadd.f32 %v566, %v654
        %656 = vmatmul.bf16.gmra.mxu0 %v379
        %v657 = vpop.f32.mrf.mxu0
        %v658 = vadd.f32 %v569, %v657
        %v659 = vpop.f32.mrf.mxu0
        %v660 = vadd.f32 %v571, %v659
        %661 = vmatmul.bf16.gmra.mxu0 %v381
        %v662 = vpop.f32.mrf.mxu0
        %v663 = vadd.f32 %v574, %v662
        %v664 = vpop.f32.mrf.mxu0
        %v665 = vadd.f32 %v576, %v664
        %666 = vmatmul.bf16.gmra.mxu0 %v383
        %v667 = vpop.f32.mrf.mxu0
        %v668 = vadd.f32 %v579, %v667
        %v669 = vpop.f32.mrf.mxu0
        %v670 = vadd.f32 %v581, %v669
        %671 = vmatmul.bf16.gmra.mxu0 %v385
        %v672 = vpop.f32.mrf.mxu0
        %v673 = vadd.f32 %v584, %v672
        %v674 = vpop.f32.mrf.mxu0
        %v675 = vadd.f32 %v586, %v674
        %676 = vmatmul.bf16.gmra.mxu0 %v387
        %v677 = vpop.f32.mrf.mxu0
        %v678 = vadd.f32 %v589, %v677
        %v679 = vpop.f32.mrf.mxu0
        %v680 = vadd.f32 %v591, %v679
        %681 = vmatmul.bf16.gmra.mxu0 %v389
        %v682 = vpop.f32.mrf.mxu0
        %v683 = vadd.f32 %v594, %v682
        %v684 = vpop.f32.mrf.mxu0
        %v685 = vadd.f32 %v596, %v684
        %686 = vmatmul.bf16.gmra.mxu0 %v391
        %v687 = vpop.f32.mrf.mxu0
        %v688 = vadd.f32 %v599, %v687
        %v689 = vpop.f32.mrf.mxu0
        %v690 = vadd.f32 %v601, %v689
        %691 = vmatmul.bf16.gmra.mxu0 %v393
        %v692 = vpop.f32.mrf.mxu0
        %v693 = vadd.f32 %v604, %v692
        %v694 = vpop.f32.mrf.mxu0
        %v695 = vadd.f32 %v606, %v694
        %696 = vmatmul.bf16.gmra.mxu0 %v395
        %v697 = vpop.f32.mrf.mxu0
        %v698 = vadd.f32 %v609, %v697
        %v699 = vpop.f32.mrf.mxu0
        %v700 = vadd.f32 %v611, %v699
        %701 = vdwg.mxu0
        %v702 = vmax.f32 %v623, 0.0
        %v703 = vmax.f32 %v625, 0.0
        %v704 = vmax.f32 %v628, 0.0
        %v705 = vmax.f32 %v630, 0.0
        %v706 = vmax.f32 %v633, 0.0
        %v707 = vmax.f32 %v635, 0.0
        %v708 = vmax.f32 %v638, 0.0
        %v709 = vmax.f32 %v640, 0.0
        %v710 = vmax.f32 %v643, 0.0
        %v711 = vmax.f32 %v645, 0.0
        %v712 = vmax.f32 %v648, 0.0
        %v713 = vmax.f32 %v650, 0.0
        %v714 = vmax.f32 %v653, 0.0
        %v715 = vmax.f32 %v655, 0.0
        %v716 = vmax.f32 %v658, 0.0
        %v717 = vmax.f32 %v660, 0.0
        %v718 = vmax.f32 %v663, 0.0
        %v719 = vmax.f32 %v665, 0.0
        %v720 = vmax.f32 %v668, 0.0
        %v721 = vmax.f32 %v670, 0.0
        %v722 = vmax.f32 %v673, 0.0
        %v723 = vmax.f32 %v675, 0.0
        %v724 = vmax.f32 %v678, 0.0
        %v725 = vmax.f32 %v680, 0.0
        %v726 = vmax.f32 %v683, 0.0
        %v727 = vmax.f32 %v685, 0.0
        %v728 = vmax.f32 %v688, 0.0
        %v729 = vmax.f32 %v690, 0.0
        %v730 = vmax.f32 %v693, 0.0
        %v731 = vmax.f32 %v695, 0.0
        %v732 = vmax.f32 %v698, 0.0
        %v733 = vmax.f32 %v700, 0.0
        %v734 = vpack.c.bf16 %v702, %v702
        %v735 = vpack.c.bf16 %v703, %v703
        %v736 = vpack.c.bf16 %v704, %v704
        %v737 = vpack.c.bf16 %v705, %v705
        %v738 = vpack.c.bf16 %v706, %v706
        %v739 = vpack.c.bf16 %v707, %v707
        %v740 = vpack.c.bf16 %v708, %v708
        %v741 = vpack.c.bf16 %v709, %v709
        %v742 = vpack.c.bf16 %v710, %v710
        %v743 = vpack.c.bf16 %v711, %v711
        %v744 = vpack.c.bf16 %v712, %v712
        %v745 = vpack.c.bf16 %v713, %v713
        %v746 = vpack.c.bf16 %v714, %v714
        %v747 = vpack.c.bf16 %v715, %v715
        %v748 = vpack.c.bf16 %v716, %v716
        %v749 = vpack.c.bf16 %v717, %v717
        %v750 = vpack.c.bf16 %v718, %v718
        %v751 = vpack.c.bf16 %v719, %v719
        %v752 = vpack.c.bf16 %v720, %v720
        %v753 = vpack.c.bf16 %v721, %v721
        %v754 = vpack.c.bf16 %v722, %v722
        %v755 = vpack.c.bf16 %v723, %v723
        %v756 = vpack.c.bf16 %v724, %v724
        %v757 = vpack.c.bf16 %v725, %v725
        %v758 = vpack.c.bf16 %v726, %v726
        %v759 = vpack.c.bf16 %v727, %v727
        %v760 = vpack.c.bf16 %v728, %v728
        %v761 = vpack.c.bf16 %v729, %v729
        %v762 = vpack.c.bf16 %v730, %v730
        %v763 = vpack.c.bf16 %v731, %v731
        %v764 = vpack.c.bf16 %v732, %v732
        %v765 = vpack.c.bf16 %v733, %v733
        %vm766 = vcmask 257024
        %767 = vst.msk [vmem:[%s177] sm:$0xf] %vm766, %v734
        %768 = vst.msk [vmem:[%s177 + $0x4] sm:$0xf] %vm766, %v735
        %769 = vst.msk [vmem:[%s177 + $0x8] sm:$0xf] %vm766, %v736
        %770 = vst.msk [vmem:[%s177 + $0xc] sm:$0xf] %vm766, %v737
        %771 = vst.msk [vmem:[%s177 + $0x10] sm:$0xf] %vm766, %v738
        %772 = vst.msk [vmem:[%s177 + $0x14] sm:$0xf] %vm766, %v739
        %773 = vst.msk [vmem:[%s177 + $0x18] sm:$0xf] %vm766, %v740
        %774 = vst.msk [vmem:[%s177 + $0x1c] sm:$0xf] %vm766, %v741
        %775 = vst.msk [vmem:[%s177 + $0x20] sm:$0xf] %vm766, %v742
        %776 = vst.msk [vmem:[%s177 + $0x24] sm:$0xf] %vm766, %v743
        %777 = vst.msk [vmem:[%s177 + $0x28] sm:$0xf] %vm766, %v744
        %778 = vst.msk [vmem:[%s177 + $0x2c] sm:$0xf] %vm766, %v745
        %779 = vst.msk [vmem:[%s177 + $0x30] sm:$0xf] %vm766, %v746
        %780 = vst.msk [vmem:[%s177 + $0x34] sm:$0xf] %vm766, %v747
        %781 = vst.msk [vmem:[%s177 + $0x38] sm:$0xf] %vm766, %v748
        %782 = vst.msk [vmem:[%s177 + $0x3c] sm:$0xf] %vm766, %v749
        %783 = vst.msk [vmem:[%s177 + $0x40] sm:$0xf] %vm766, %v750
        %784 = vst.msk [vmem:[%s177 + $0x44] sm:$0xf] %vm766, %v751
        %785 = vst.msk [vmem:[%s177 + $0x48] sm:$0xf] %vm766, %v752
        %786 = vst.msk [vmem:[%s177 + $0x4c] sm:$0xf] %vm766, %v753
        %787 = vst.msk [vmem:[%s177 + $0x50] sm:$0xf] %vm766, %v754
        %788 = vst.msk [vmem:[%s177 + $0x54] sm:$0xf] %vm766, %v755
        %789 = vst.msk [vmem:[%s177 + $0x58] sm:$0xf] %vm766, %v756
        %790 = vst.msk [vmem:[%s177 + $0x5c] sm:$0xf] %vm766, %v757
        %791 = vst.msk [vmem:[%s177 + $0x60] sm:$0xf] %vm766, %v758
        %792 = vst.msk [vmem:[%s177 + $0x64] sm:$0xf] %vm766, %v759
        %793 = vst.msk [vmem:[%s177 + $0x68] sm:$0xf] %vm766, %v760
        %794 = vst.msk [vmem:[%s177 + $0x6c] sm:$0xf] %vm766, %v761
        %795 = vst.msk [vmem:[%s177 + $0x70] sm:$0xf] %vm766, %v762
        %796 = vst.msk [vmem:[%s177 + $0x74] sm:$0xf] %vm766, %v763
        %797 = vst.msk [vmem:[%s177 + $0x78] sm:$0xf] %vm766, %v764
        %798 = vst.msk [vmem:[%s177 + $0x7c] sm:$0xf] %vm766, %v765
        %s799 = sand.u32 %s90, 1
        %s800 = sand.u32 %s90, 1
        %s801 = smul.addr %s800, 128
        %s802 = scalar_lea.vmem [#allocation2], %s801
        // Predicated region
        $region33: #{duel_qfunc_forward.4} parent=31 // pred_check
          %p803 = pneg %p100
        $region34: #{duel_qfunc_forward.4} parent=31 // pred_check_branch
          %805 = sbr.rel (%p803) target = $region36
        $region35: #{duel_qfunc_forward.4} parent=31 // pred_region
          %s806 = smul.u32 32, %s14
          %s807 = ssub.s32 100, %s806
          %p808 = scmp.lt.s32.totalorder %s807, 32
          %s809 = scalar_select %p808, %s807, 32
          %s810 = smul.u32 4, %s809
          %p811 = scmp.ne.s32.totalorder 0, %s810
          %s812 = smul.addr %s806, 4
          %s813 = scalar_lea.vmem %s3, %s812
          // Predicated region
          $region37: #{duel_qfunc_forward.4} parent=35 // pred_check
            %p814 = pneg %p811
          $region38: #{duel_qfunc_forward.4} parent=35 // pred_check_branch
            %816 = sbr.rel (%p814) target = $region40
          $region39: #{duel_qfunc_forward.4} parent=35 // pred_region
            // Predicated region
            $region41: #{duel_qfunc_forward.4} parent=39 // pred_check
              _
            $region42: #{duel_qfunc_forward.4} parent=39 // pred_check_branch
              %818 = sbr.rel target = $region44
            $region43: #{duel_qfunc_forward.4} parent=39 // pred_region
              // Predicated region
              $region63: #{duel_qfunc_forward.4} parent=43 // pred_check
                _
              $region64: #{duel_qfunc_forward.4} parent=43 // pred_check_branch
                %930 = sbr.rel (0) target = $region66
              $region65: #{duel_qfunc_forward.4} parent=43 // pred_region
                %s932 = ssub.s32 16, 1
                %s933 = sshrl.u32 %s809, 5
                // While loop
                $region67: #{duel_qfunc_forward.4} parent=65 // loop_pre_header
                  _
                $region68: #{duel_qfunc_forward.4} parent=65 // loop_header
                  %s935 = sphi 0, %s937
                  %p936 = scmp.ge.s32.totalorder %s935, %s933
                  %s940 = sphi 0, %s1009
                  %s941 = sphi %s802, %s1012
                  %s942 = sphi %s813, %s1013
                $region69: #{duel_qfunc_forward.4} parent=65 // loop_header_branch
                  %939 = sbr.rel (%p936) target = $region73
                $region70: #{duel_qfunc_forward.4} parent=65 // loop_body
                  %v943 = vld [vmem:[%s941] sm:%s932]
                  %944 = vst [vmem:[%s942] sm:%s932] %v943
                  %v945 = vld [vmem:[%s941 + $0x4] sm:%s932]
                  %946 = vst [vmem:[%s942 + $0x4] sm:%s932] %v945
                  %v947 = vld [vmem:[%s941 + $0x8] sm:%s932]
                  %948 = vst [vmem:[%s942 + $0x8] sm:%s932] %v947
                  %v949 = vld [vmem:[%s941 + $0xc] sm:%s932]
                  %950 = vst [vmem:[%s942 + $0xc] sm:%s932] %v949
                  %v951 = vld [vmem:[%s941 + $0x10] sm:%s932]
                  %952 = vst [vmem:[%s942 + $0x10] sm:%s932] %v951
                  %v953 = vld [vmem:[%s941 + $0x14] sm:%s932]
                  %954 = vst [vmem:[%s942 + $0x14] sm:%s932] %v953
                  %v955 = vld [vmem:[%s941 + $0x18] sm:%s932]
                  %956 = vst [vmem:[%s942 + $0x18] sm:%s932] %v955
                  %v957 = vld [vmem:[%s941 + $0x1c] sm:%s932]
                  %958 = vst [vmem:[%s942 + $0x1c] sm:%s932] %v957
                  %v959 = vld [vmem:[%s941 + $0x20] sm:%s932]
                  %960 = vst [vmem:[%s942 + $0x20] sm:%s932] %v959
                  %v961 = vld [vmem:[%s941 + $0x24] sm:%s932]
                  %962 = vst [vmem:[%s942 + $0x24] sm:%s932] %v961
                  %v963 = vld [vmem:[%s941 + $0x28] sm:%s932]
                  %964 = vst [vmem:[%s942 + $0x28] sm:%s932] %v963
                  %v965 = vld [vmem:[%s941 + $0x2c] sm:%s932]
                  %966 = vst [vmem:[%s942 + $0x2c] sm:%s932] %v965
                  %v967 = vld [vmem:[%s941 + $0x30] sm:%s932]
                  %968 = vst [vmem:[%s942 + $0x30] sm:%s932] %v967
                  %v969 = vld [vmem:[%s941 + $0x34] sm:%s932]
                  %970 = vst [vmem:[%s942 + $0x34] sm:%s932] %v969
                  %v971 = vld [vmem:[%s941 + $0x38] sm:%s932]
                  %972 = vst [vmem:[%s942 + $0x38] sm:%s932] %v971
                  %v973 = vld [vmem:[%s941 + $0x3c] sm:%s932]
                  %974 = vst [vmem:[%s942 + $0x3c] sm:%s932] %v973
                  %v975 = vld [vmem:[%s941 + $0x40] sm:%s932]
                  %976 = vst [vmem:[%s942 + $0x40] sm:%s932] %v975
                  %v977 = vld [vmem:[%s941 + $0x44] sm:%s932]
                  %978 = vst [vmem:[%s942 + $0x44] sm:%s932] %v977
                  %v979 = vld [vmem:[%s941 + $0x48] sm:%s932]
                  %980 = vst [vmem:[%s942 + $0x48] sm:%s932] %v979
                  %v981 = vld [vmem:[%s941 + $0x4c] sm:%s932]
                  %982 = vst [vmem:[%s942 + $0x4c] sm:%s932] %v981
                  %v983 = vld [vmem:[%s941 + $0x50] sm:%s932]
                  %984 = vst [vmem:[%s942 + $0x50] sm:%s932] %v983
                  %v985 = vld [vmem:[%s941 + $0x54] sm:%s932]
                  %986 = vst [vmem:[%s942 + $0x54] sm:%s932] %v985
                  %v987 = vld [vmem:[%s941 + $0x58] sm:%s932]
                  %988 = vst [vmem:[%s942 + $0x58] sm:%s932] %v987
                  %v989 = vld [vmem:[%s941 + $0x5c] sm:%s932]
                  %990 = vst [vmem:[%s942 + $0x5c] sm:%s932] %v989
                  %v991 = vld [vmem:[%s941 + $0x60] sm:%s932]
                  %992 = vst [vmem:[%s942 + $0x60] sm:%s932] %v991
                  %v993 = vld [vmem:[%s941 + $0x64] sm:%s932]
                  %994 = vst [vmem:[%s942 + $0x64] sm:%s932] %v993
                  %v995 = vld [vmem:[%s941 + $0x68] sm:%s932]
                  %996 = vst [vmem:[%s942 + $0x68] sm:%s932] %v995
                  %v997 = vld [vmem:[%s941 + $0x6c] sm:%s932]
                  %998 = vst [vmem:[%s942 + $0x6c] sm:%s932] %v997
                  %v999 = vld [vmem:[%s941 + $0x70] sm:%s932]
                  %1000 = vst [vmem:[%s942 + $0x70] sm:%s932] %v999
                  %v1001 = vld [vmem:[%s941 + $0x74] sm:%s932]
                  %1002 = vst [vmem:[%s942 + $0x74] sm:%s932] %v1001
                  %v1003 = vld [vmem:[%s941 + $0x78] sm:%s932]
                  %1004 = vst [vmem:[%s942 + $0x78] sm:%s932] %v1003
                  %v1005 = vld [vmem:[%s941 + $0x7c] sm:%s932]
                  %1006 = vst [vmem:[%s942 + $0x7c] sm:%s932] %v1005
                  %s1007 = sadd.s32 1, %s940
                  %p1008 = scmp.ge.s32.totalorder %s1007, %s933
                  %s1009 = scalar_select %p1008, 0, %s1007
                  %s1010 = smul.u32 %s1009, 128
                  %s1011 = smul.u32 %s1009, 128
                  %s1012 = scalar_lea.vmem %s802, %s1010 [#allocation2]
                  %s1013 = scalar_lea.vmem %s813, %s1011
                $region71: #{duel_qfunc_forward.4} parent=65 // loop_footer
                  %s937 = sadd.s32 %s935, 1
                $region72: #{duel_qfunc_forward.4} parent=65 // loop_footer_branch
                  %934 = sbr.rel target = $region68
                $region73: #{duel_qfunc_forward.4} parent=65 // loop_exit
                  _
                %s1014 = sshrl.u32 %s809, 5
                %s1015 = sand.u32 %s809, 31
                %s1016 = smul.u32 %s1014, 32
                %s1017 = smul.u32 4, %s1016
                %s1018 = scalar_lea.vmem %s802, %s1017 [#allocation2]
                %s1019 = smul.u32 4, %s1016
                %s1020 = scalar_lea.vmem %s813, %s1019
                // While loop
                $region74: #{duel_qfunc_forward.4} parent=65 // loop_pre_header
                  _
                $region75: #{duel_qfunc_forward.4} parent=65 // loop_header
                  %s1022 = sphi 0, %s1024
                  %p1023 = scmp.ge.s32.totalorder %s1022, %s1015
                  %s1027 = sphi 0, %s1034
                  %s1028 = sphi %s1018, %s1037
                  %s1029 = sphi %s1020, %s1038
                $region76: #{duel_qfunc_forward.4} parent=65 // loop_header_branch
                  %1026 = sbr.rel (%p1023) target = $region80
                $region77: #{duel_qfunc_forward.4} parent=65 // loop_body
                  %v1030 = vld [vmem:[%s1028] sm:%s932]
                  %1031 = vst [vmem:[%s1029] sm:%s932] %v1030
                  %s1032 = sadd.s32 1, %s1027
                  %p1033 = scmp.ge.s32.totalorder %s1032, %s1015
                  %s1034 = scalar_select %p1033, 0, %s1032
                  %s1035 = smul.u32 %s1034, 4
                  %s1036 = smul.u32 %s1034, 4
                  %s1037 = scalar_lea.vmem %s1018, %s1035 [#allocation2]
                  %s1038 = scalar_lea.vmem %s1020, %s1036
                $region78: #{duel_qfunc_forward.4} parent=65 // loop_footer
                  %s1024 = sadd.s32 %s1022, 1
                $region79: #{duel_qfunc_forward.4} parent=65 // loop_footer_branch
                  %1021 = sbr.rel target = $region75
                $region80: #{duel_qfunc_forward.4} parent=65 // loop_exit
                  _
              $region66: #{duel_qfunc_forward.4} parent=43 // pred_fallthru
                _
            $region44: #{duel_qfunc_forward.4} parent=39 // pred_fallthru
              _
            // Predicated region
            $region45: #{duel_qfunc_forward.4} parent=39 // pred_check
              _
            $region46: #{duel_qfunc_forward.4} parent=39 // pred_check_branch
              %820 = sbr.rel (0) target = $region48
            $region47: #{duel_qfunc_forward.4} parent=39 // pred_region
              %s822 = ssub.s32 16, 1
              %s823 = sshrl.u32 %s809, 5
              // While loop
              $region49: #{duel_qfunc_forward.4} parent=47 // loop_pre_header
                _
              $region50: #{duel_qfunc_forward.4} parent=47 // loop_header
                %s825 = sphi 0, %s827
                %p826 = scmp.ge.s32.totalorder %s825, %s823
                %s830 = sphi 0, %s899
                %s831 = sphi %s802, %s902
                %s832 = sphi %s813, %s903
              $region51: #{duel_qfunc_forward.4} parent=47 // loop_header_branch
                %829 = sbr.rel (%p826) target = $region55
              $region52: #{duel_qfunc_forward.4} parent=47 // loop_body
                %v833 = vld [vmem:[%s831] sm:%s822]
                %834 = vst [vmem:[%s832] sm:%s822] %v833
                %v835 = vld [vmem:[%s831 + $0x4] sm:%s822]
                %836 = vst [vmem:[%s832 + $0x4] sm:%s822] %v835
                %v837 = vld [vmem:[%s831 + $0x8] sm:%s822]
                %838 = vst [vmem:[%s832 + $0x8] sm:%s822] %v837
                %v839 = vld [vmem:[%s831 + $0xc] sm:%s822]
                %840 = vst [vmem:[%s832 + $0xc] sm:%s822] %v839
                %v841 = vld [vmem:[%s831 + $0x10] sm:%s822]
                %842 = vst [vmem:[%s832 + $0x10] sm:%s822] %v841
                %v843 = vld [vmem:[%s831 + $0x14] sm:%s822]
                %844 = vst [vmem:[%s832 + $0x14] sm:%s822] %v843
                %v845 = vld [vmem:[%s831 + $0x18] sm:%s822]
                %846 = vst [vmem:[%s832 + $0x18] sm:%s822] %v845
                %v847 = vld [vmem:[%s831 + $0x1c] sm:%s822]
                %848 = vst [vmem:[%s832 + $0x1c] sm:%s822] %v847
                %v849 = vld [vmem:[%s831 + $0x20] sm:%s822]
                %850 = vst [vmem:[%s832 + $0x20] sm:%s822] %v849
                %v851 = vld [vmem:[%s831 + $0x24] sm:%s822]
                %852 = vst [vmem:[%s832 + $0x24] sm:%s822] %v851
                %v853 = vld [vmem:[%s831 + $0x28] sm:%s822]
                %854 = vst [vmem:[%s832 + $0x28] sm:%s822] %v853
                %v855 = vld [vmem:[%s831 + $0x2c] sm:%s822]
                %856 = vst [vmem:[%s832 + $0x2c] sm:%s822] %v855
                %v857 = vld [vmem:[%s831 + $0x30] sm:%s822]
                %858 = vst [vmem:[%s832 + $0x30] sm:%s822] %v857
                %v859 = vld [vmem:[%s831 + $0x34] sm:%s822]
                %860 = vst [vmem:[%s832 + $0x34] sm:%s822] %v859
                %v861 = vld [vmem:[%s831 + $0x38] sm:%s822]
                %862 = vst [vmem:[%s832 + $0x38] sm:%s822] %v861
                %v863 = vld [vmem:[%s831 + $0x3c] sm:%s822]
                %864 = vst [vmem:[%s832 + $0x3c] sm:%s822] %v863
                %v865 = vld [vmem:[%s831 + $0x40] sm:%s822]
                %866 = vst [vmem:[%s832 + $0x40] sm:%s822] %v865
                %v867 = vld [vmem:[%s831 + $0x44] sm:%s822]
                %868 = vst [vmem:[%s832 + $0x44] sm:%s822] %v867
                %v869 = vld [vmem:[%s831 + $0x48] sm:%s822]
                %870 = vst [vmem:[%s832 + $0x48] sm:%s822] %v869
                %v871 = vld [vmem:[%s831 + $0x4c] sm:%s822]
                %872 = vst [vmem:[%s832 + $0x4c] sm:%s822] %v871
                %v873 = vld [vmem:[%s831 + $0x50] sm:%s822]
                %874 = vst [vmem:[%s832 + $0x50] sm:%s822] %v873
                %v875 = vld [vmem:[%s831 + $0x54] sm:%s822]
                %876 = vst [vmem:[%s832 + $0x54] sm:%s822] %v875
                %v877 = vld [vmem:[%s831 + $0x58] sm:%s822]
                %878 = vst [vmem:[%s832 + $0x58] sm:%s822] %v877
                %v879 = vld [vmem:[%s831 + $0x5c] sm:%s822]
                %880 = vst [vmem:[%s832 + $0x5c] sm:%s822] %v879
                %v881 = vld [vmem:[%s831 + $0x60] sm:%s822]
                %882 = vst [vmem:[%s832 + $0x60] sm:%s822] %v881
                %v883 = vld [vmem:[%s831 + $0x64] sm:%s822]
                %884 = vst [vmem:[%s832 + $0x64] sm:%s822] %v883
                %v885 = vld [vmem:[%s831 + $0x68] sm:%s822]
                %886 = vst [vmem:[%s832 + $0x68] sm:%s822] %v885
                %v887 = vld [vmem:[%s831 + $0x6c] sm:%s822]
                %888 = vst [vmem:[%s832 + $0x6c] sm:%s822] %v887
                %v889 = vld [vmem:[%s831 + $0x70] sm:%s822]
                %890 = vst [vmem:[%s832 + $0x70] sm:%s822] %v889
                %v891 = vld [vmem:[%s831 + $0x74] sm:%s822]
                %892 = vst [vmem:[%s832 + $0x74] sm:%s822] %v891
                %v893 = vld [vmem:[%s831 + $0x78] sm:%s822]
                %894 = vst [vmem:[%s832 + $0x78] sm:%s822] %v893
                %v895 = vld [vmem:[%s831 + $0x7c] sm:%s822]
                %896 = vst [vmem:[%s832 + $0x7c] sm:%s822] %v895
                %s897 = sadd.s32 1, %s830
                %p898 = scmp.ge.s32.totalorder %s897, %s823
                %s899 = scalar_select %p898, 0, %s897
                %s900 = smul.u32 %s899, 128
                %s901 = smul.u32 %s899, 128
                %s902 = scalar_lea.vmem %s802, %s900 [#allocation2]
                %s903 = scalar_lea.vmem %s813, %s901
              $region53: #{duel_qfunc_forward.4} parent=47 // loop_footer
                %s827 = sadd.s32 %s825, 1
              $region54: #{duel_qfunc_forward.4} parent=47 // loop_footer_branch
                %824 = sbr.rel target = $region50
              $region55: #{duel_qfunc_forward.4} parent=47 // loop_exit
                _
              %s904 = sshrl.u32 %s809, 5
              %s905 = sand.u32 %s809, 31
              %s906 = smul.u32 %s904, 32
              %s907 = smul.u32 4, %s906
              %s908 = scalar_lea.vmem %s802, %s907 [#allocation2]
              %s909 = smul.u32 4, %s906
              %s910 = scalar_lea.vmem %s813, %s909
              // While loop
              $region56: #{duel_qfunc_forward.4} parent=47 // loop_pre_header
                _
              $region57: #{duel_qfunc_forward.4} parent=47 // loop_header
                %s912 = sphi 0, %s914
                %p913 = scmp.ge.s32.totalorder %s912, %s905
                %s917 = sphi 0, %s924
                %s918 = sphi %s908, %s927
                %s919 = sphi %s910, %s928
              $region58: #{duel_qfunc_forward.4} parent=47 // loop_header_branch
                %916 = sbr.rel (%p913) target = $region62
              $region59: #{duel_qfunc_forward.4} parent=47 // loop_body
                %v920 = vld [vmem:[%s918] sm:%s822]
                %921 = vst [vmem:[%s919] sm:%s822] %v920
                %s922 = sadd.s32 1, %s917
                %p923 = scmp.ge.s32.totalorder %s922, %s905
                %s924 = scalar_select %p923, 0, %s922
                %s925 = smul.u32 %s924, 4
                %s926 = smul.u32 %s924, 4
                %s927 = scalar_lea.vmem %s908, %s925 [#allocation2]
                %s928 = scalar_lea.vmem %s910, %s926
              $region60: #{duel_qfunc_forward.4} parent=47 // loop_footer
                %s914 = sadd.s32 %s912, 1
              $region61: #{duel_qfunc_forward.4} parent=47 // loop_footer_branch
                %911 = sbr.rel target = $region57
              $region62: #{duel_qfunc_forward.4} parent=47 // loop_exit
                _
            $region48: #{duel_qfunc_forward.4} parent=39 // pred_fallthru
              _
          $region40: #{duel_qfunc_forward.4} parent=35 // pred_fallthru
            _
          %1039 = vnop
        $region36: #{duel_qfunc_forward.4} parent=31 // pred_fallthru
          _
      $region32: #{duel_qfunc_forward.4} parent=5 // pred_fallthru
        _
      %p1040 = scmp.le.s32.totalorder 2, %s9
      // Predicated region
      $region81: #{duel_qfunc_forward.4} parent=5 // pred_check
        %p1041 = pneg %p1040
      $region82: #{duel_qfunc_forward.4} parent=5 // pred_check_branch
        %1043 = sbr.rel (%p1041) target = $region84
      $region83: #{duel_qfunc_forward.4} parent=5 // pred_region
        %s1044 = ssub.s32 %s9, 2
        // Predicated region
        $region85: #{duel_qfunc_forward.4} parent=83 // pred_check
          %p1045 = pneg %p106
        $region86: #{duel_qfunc_forward.4} parent=83 // pred_check_branch
          %1047 = sbr.rel (%p1045) target = $region88
        $region87: #{duel_qfunc_forward.4} parent=83 // pred_region
          %s1048 = sand.u32 %s91, 1
          %s1049 = sand.u32 %s91, 1
          %s1050 = smul.addr %s1049, 128
          %s1051 = scalar_lea.vmem [#allocation2], %s1050
        $region88: #{duel_qfunc_forward.4} parent=83 // pred_fallthru
          _
      $region84: #{duel_qfunc_forward.4} parent=5 // pred_fallthru
        _
    $region6: #{duel_qfunc_forward.4} parent=1 // loop_footer
      %s13 = sadd.s32 1, %s9
    $region7: #{duel_qfunc_forward.4} parent=1 // loop_footer_branch
      %8 = sbr.rel target = $region3
    $region8: #{duel_qfunc_forward.4} parent=1 // loop_exit
      _

// kernel: duel_qfunc_forward.5
$region0: #{duel_qfunc_forward.5}
  #allocation0 [shape = 'u32[]', space=smem, size = 0x4, offset = 0x4, fixed_abs, tag = 'smem constant byte address 0x4 - core index']
  #allocation1 [shape = 'u32[72,128]{1,0:T(1,128)}', space=vmem, size = 0x9000, scoped, tag = 'internal scratch']
  %s0 = inlined_call_operand.vmem [shape: bf16[162,512], index: 0, kind: input, shape index: {}]
  %s1 = inlined_call_operand.vmem [shape: bf16[512,64], index: 1, kind: input, shape index: {}]
  %s2 = inlined_call_operand.vmem [shape: f32[1,64], index: 2, kind: input, shape index: {}]
  %s3 = inlined_call_operand.vmem [shape: bf16[162,64], index: 3, kind: output, shape index: {}]
  %s4 = sld [smem:[#allocation0]]
  $region22: #{duel_qfunc_forward.5} parent=0
    _
  %s6 = ssub.s32 1, %s4
  %s7 = scalar_select 0, %s6, %s4
  // Predicated region
  $region2: #{duel_qfunc_forward.5} parent=0 // pred_check
    _
  $region3: #{duel_qfunc_forward.5} parent=0 // pred_check_branch
    %9 = sbr.rel (0) target = $region5
  $region4: #{duel_qfunc_forward.5} parent=0 // pred_region
    _
  $region5: #{duel_qfunc_forward.5} parent=0 // pred_fallthru
    _
  // Predicated region
  $region6: #{duel_qfunc_forward.5} parent=0 // pred_check
    _
  $region7: #{duel_qfunc_forward.5} parent=0 // pred_check_branch
    %11 = sbr.rel (0) target = $region9
  $region8: #{duel_qfunc_forward.5} parent=0 // pred_region
    _
  $region9: #{duel_qfunc_forward.5} parent=0 // pred_fallthru
    _
  // Predicated region
  $region10: #{duel_qfunc_forward.5} parent=0 // pred_check
    _
  $region11: #{duel_qfunc_forward.5} parent=0 // pred_check_branch
    %13 = sbr.rel (0) target = $region13
  $region12: #{duel_qfunc_forward.5} parent=0 // pred_region
    _
  $region13: #{duel_qfunc_forward.5} parent=0 // pred_fallthru
    _
  %v14 = vld [vmem:[%s0] sm:$0xff]
  %v15 = vld [vmem:[%s0 + $0x8] sm:$0xff]
  %v16 = vld [vmem:[%s0 + $0x10] sm:$0xff]
  %v17 = vld [vmem:[%s0 + $0x18] sm:$0xff]
  %v18 = vld [vmem:[%s0 + $0x20] sm:$0xff]
  %v19 = vld [vmem:[%s0 + $0x28] sm:$0xff]
  %v20 = vld [vmem:[%s0 + $0x30] sm:$0xff]
  %v21 = vld [vmem:[%s0 + $0x38] sm:$0xff]
  %v22 = vld [vmem:[%s0 + $0x40] sm:$0xff]
  %v23 = vld [vmem:[%s0 + $0x48] sm:$0xff]
  %v24 = vld [vmem:[%s0 + $0x50] sm:$0xff]
  %v25 = vld [vmem:[%s0 + $0x58] sm:$0xff]
  %v26 = vld [vmem:[%s0 + $0x60] sm:$0xff]
  %v27 = vld [vmem:[%s0 + $0x68] sm:$0xff]
  %v28 = vld [vmem:[%s0 + $0x70] sm:$0xff]
  %v29 = vld [vmem:[%s0 + $0x78] sm:$0xff]
  %v30 = vld [vmem:[%s0 + $0x80] sm:$0xff]
  %v31 = vld [vmem:[%s0 + $0x88] sm:$0xff]
  %v32 = vld [vmem:[%s0 + $0x90] sm:$0xff]
  %v33 = vld [vmem:[%s0 + $0x98] sm:$0xff]
  %v34 = vld [vmem:[%s0 + $0xa0] sm:$0xff]
  %v35 = vld [vmem:[%s0 + $0xa8] sm:$0xff]
  %v36 = vld [vmem:[%s0 + $0xb0] sm:$0xff]
  %v37 = vld [vmem:[%s0 + $0xb8] sm:$0xff]
  %v38 = vld [vmem:[%s0 + $0xc0] sm:$0xff]
  %v39 = vld [vmem:[%s0 + $0xc8] sm:$0xff]
  %v40 = vld [vmem:[%s0 + $0xd0] sm:$0xff]
  %v41 = vld [vmem:[%s0 + $0xd8] sm:$0xff]
  %v42 = vld [vmem:[%s0 + $0xe0] sm:$0xff]
  %v43 = vld [vmem:[%s0 + $0xe8] sm:$0xff]
  %v44 = vld [vmem:[%s0 + $0xf0] sm:$0xff]
  %v45 = vld [vmem:[%s0 + $0xf8] sm:$0xff]
  %v46 = vld [vmem:[%s0 + $0x100] sm:$0xff]
  %v47 = vld [vmem:[%s0 + $0x108] sm:$0xff]
  %v48 = vld [vmem:[%s0 + $0x110] sm:$0xff]
  %v49 = vld [vmem:[%s0 + $0x118] sm:$0xff]
  %v50 = vld [vmem:[%s0 + $0x120] sm:$0xff]
  %v51 = vld [vmem:[%s0 + $0x128] sm:$0xff]
  %v52 = vld [vmem:[%s0 + $0x130] sm:$0xff]
  %v53 = vld [vmem:[%s0 + $0x138] sm:$0xff]
  %v54 = vld [vmem:[%s0 + $0x140] sm:$0xff]
  %v55 = vld [vmem:[%s0 + $0x148] sm:$0xff]
  %v56 = vld [vmem:[%s1] sm:$0xf]
  %v57 = vld [vmem:[%s1 + $0x4] sm:$0xf]
  %v58 = vld [vmem:[%s1 + $0x8] sm:$0xf]
  %v59 = vld [vmem:[%s1 + $0xc] sm:$0xf]
  %v60 = vld [vmem:[%s1 + $0x10] sm:$0xf]
  %v61 = vld [vmem:[%s1 + $0x14] sm:$0xf]
  %v62 = vld [vmem:[%s1 + $0x18] sm:$0xf]
  %v63 = vld [vmem:[%s1 + $0x1c] sm:$0xf]
  %v64 = vld [vmem:[%s1 + $0x20] sm:$0xf]
  %v65 = vld [vmem:[%s1 + $0x24] sm:$0xf]
  %v66 = vld [vmem:[%s1 + $0x28] sm:$0xf]
  %v67 = vld [vmem:[%s1 + $0x2c] sm:$0xf]
  %v68 = vld [vmem:[%s1 + $0x30] sm:$0xf]
  %v69 = vld [vmem:[%s1 + $0x34] sm:$0xf]
  %v70 = vld [vmem:[%s1 + $0x38] sm:$0xf]
  %v71 = vld [vmem:[%s1 + $0x3c] sm:$0xf]
  %v72 = vld [vmem:[%s1 + $0x40] sm:$0xf]
  %v73 = vld [vmem:[%s1 + $0x44] sm:$0xf]
  %v74 = vld [vmem:[%s1 + $0x48] sm:$0xf]
  %v75 = vld [vmem:[%s1 + $0x4c] sm:$0xf]
  %v76 = vld [vmem:[%s1 + $0x50] sm:$0xf]
  %v77 = vld [vmem:[%s1 + $0x54] sm:$0xf]
  %v78 = vld [vmem:[%s1 + $0x58] sm:$0xf]
  %v79 = vld [vmem:[%s1 + $0x5c] sm:$0xf]
  %v80 = vld [vmem:[%s1 + $0x60] sm:$0xf]
  %v81 = vld [vmem:[%s1 + $0x64] sm:$0xf]
  %v82 = vld [vmem:[%s1 + $0x68] sm:$0xf]
  %v83 = vld [vmem:[%s1 + $0x6c] sm:$0xf]
  %v84 = vld [vmem:[%s1 + $0x70] sm:$0xf]
  %v85 = vld [vmem:[%s1 + $0x74] sm:$0xf]
  %v86 = vld [vmem:[%s1 + $0x78] sm:$0xf]
  %v87 = vld [vmem:[%s1 + $0x7c] sm:$0xf]
  %v88 = vld [vmem:[%s1 + $0x80] sm:$0xf]
  %v89 = vld [vmem:[%s1 + $0x84] sm:$0xf]
  %v90 = vld [vmem:[%s1 + $0x88] sm:$0xf]
  %v91 = vld [vmem:[%s1 + $0x8c] sm:$0xf]
  %v92 = vld [vmem:[%s1 + $0x90] sm:$0xf]
  %v93 = vld [vmem:[%s1 + $0x94] sm:$0xf]
  %v94 = vld [vmem:[%s1 + $0x98] sm:$0xf]
  %v95 = vld [vmem:[%s1 + $0x9c] sm:$0xf]
  %v96 = vld [vmem:[%s1 + $0xa0] sm:$0xf]
  %v97 = vld [vmem:[%s1 + $0xa4] sm:$0xf]
  %v98 = vld [vmem:[%s1 + $0xa8] sm:$0xf]
  %v99 = vld [vmem:[%s1 + $0xac] sm:$0xf]
  %v100 = vld [vmem:[%s1 + $0xb0] sm:$0xf]
  %v101 = vld [vmem:[%s1 + $0xb4] sm:$0xf]
  %v102 = vld [vmem:[%s1 + $0xb8] sm:$0xf]
  %v103 = vld [vmem:[%s1 + $0xbc] sm:$0xf]
  %v104 = vld [vmem:[%s1 + $0xc0] sm:$0xf]
  %v105 = vld [vmem:[%s1 + $0xc4] sm:$0xf]
  %v106 = vld [vmem:[%s1 + $0xc8] sm:$0xf]
  %v107 = vld [vmem:[%s1 + $0xcc] sm:$0xf]
  %v108 = vld [vmem:[%s1 + $0xd0] sm:$0xf]
  %v109 = vld [vmem:[%s1 + $0xd4] sm:$0xf]
  %v110 = vld [vmem:[%s1 + $0xd8] sm:$0xf]
  %v111 = vld [vmem:[%s1 + $0xdc] sm:$0xf]
  %v112 = vld [vmem:[%s1 + $0xe0] sm:$0xf]
  %v113 = vld [vmem:[%s1 + $0xe4] sm:$0xf]
  %v114 = vld [vmem:[%s1 + $0xe8] sm:$0xf]
  %v115 = vld [vmem:[%s1 + $0xec] sm:$0xf]
  %v116 = vld [vmem:[%s1 + $0xf0] sm:$0xf]
  %v117 = vld [vmem:[%s1 + $0xf4] sm:$0xf]
  %v118 = vld [vmem:[%s1 + $0xf8] sm:$0xf]
  %v119 = vld [vmem:[%s1 + $0xfc] sm:$0xf]
  %v120 = vld [vmem:[%s2] sm:$0x1]
  %v122 = vperm.slane %v120, 0
  %v166 = vunpack.c.l.b16 %v14
  %v167 = vunpack.c.h.b16 %v14
  %v168 = vunpack.c.l.b16 %v15
  %v169 = vunpack.c.h.b16 %v15
  %v170 = vunpack.c.l.b16 %v16
  %v171 = vunpack.c.h.b16 %v16
  %v172 = vunpack.c.l.b16 %v17
  %v173 = vunpack.c.h.b16 %v17
  %v174 = vunpack.c.l.b16 %v18
  %v175 = vunpack.c.h.b16 %v18
  %v176 = vunpack.c.l.b16 %v19
  %v177 = vunpack.c.h.b16 %v19
  %v178 = vunpack.c.l.b16 %v20
  %v179 = vunpack.c.h.b16 %v20
  %v180 = vunpack.c.l.b16 %v21
  %v181 = vunpack.c.h.b16 %v21
  %v182 = vunpack.c.l.b16 %v22
  %v183 = vunpack.c.h.b16 %v22
  %v184 = vunpack.c.l.b16 %v23
  %v185 = vunpack.c.h.b16 %v23
  %v186 = vunpack.c.l.b16 %v24
  %v187 = vunpack.c.h.b16 %v24
  %v188 = vunpack.c.l.b16 %v25
  %v189 = vunpack.c.h.b16 %v25
  %v190 = vunpack.c.l.b16 %v26
  %v191 = vunpack.c.h.b16 %v26
  %v192 = vunpack.c.l.b16 %v27
  %v193 = vunpack.c.h.b16 %v27
  %v194 = vunpack.c.l.b16 %v28
  %v195 = vunpack.c.h.b16 %v28
  %v196 = vunpack.c.l.b16 %v29
  %v197 = vunpack.c.h.b16 %v29
  %v198 = vunpack.c.l.b16 %v30
  %v199 = vunpack.c.h.b16 %v30
  %v200 = vunpack.c.l.b16 %v31
  %v201 = vunpack.c.h.b16 %v31
  %v202 = vunpack.c.l.b16 %v32
  %v203 = vunpack.c.h.b16 %v32
  %v204 = vunpack.c.l.b16 %v33
  %v205 = vunpack.c.h.b16 %v33
  %v206 = vunpack.c.l.b16 %v34
  %v207 = vunpack.c.h.b16 %v34
  %v208 = vunpack.c.l.b16 %v35
  %v209 = vunpack.c.h.b16 %v35
  %v210 = vunpack.c.l.b16 %v36
  %v211 = vunpack.c.h.b16 %v36
  %v212 = vunpack.c.l.b16 %v37
  %v213 = vunpack.c.h.b16 %v37
  %v214 = vunpack.c.l.b16 %v38
  %v215 = vunpack.c.h.b16 %v38
  %v216 = vunpack.c.l.b16 %v39
  %v217 = vunpack.c.h.b16 %v39
  %v218 = vunpack.c.l.b16 %v40
  %v219 = vunpack.c.h.b16 %v40
  %v220 = vunpack.c.l.b16 %v41
  %v221 = vunpack.c.h.b16 %v41
  %v222 = vunpack.c.l.b16 %v42
  %v223 = vunpack.c.h.b16 %v42
  %v224 = vunpack.c.l.b16 %v43
  %v225 = vunpack.c.h.b16 %v43
  %v226 = vunpack.c.l.b16 %v44
  %v227 = vunpack.c.h.b16 %v44
  %v228 = vunpack.c.l.b16 %v45
  %v229 = vunpack.c.h.b16 %v45
  %v230 = vunpack.c.l.b16 %v46
  %v231 = vunpack.c.h.b16 %v46
  %v232 = vunpack.c.l.b16 %v47
  %v233 = vunpack.c.h.b16 %v47
  %v234 = vunpack.c.l.b16 %v48
  %v235 = vunpack.c.h.b16 %v48
  %v236 = vunpack.c.l.b16 %v49
  %v237 = vunpack.c.h.b16 %v49
  %v238 = vunpack.c.l.b16 %v50
  %v239 = vunpack.c.h.b16 %v50
  %v240 = vunpack.c.l.b16 %v51
  %v241 = vunpack.c.h.b16 %v51
  %v242 = vunpack.c.l.b16 %v52
  %v243 = vunpack.c.h.b16 %v52
  %v244 = vunpack.c.l.b16 %v53
  %v245 = vunpack.c.h.b16 %v53
  %v246 = vunpack.c.l.b16 %v54
  %v247 = vunpack.c.h.b16 %v54
  %v248 = vunpack.c.l.b16 %v55
  %v249 = vunpack.c.h.b16 %v55
  %v250 = vpack.c.b16 %v170, %v166
  %v251 = vpack.c.b16 %v171, %v167
  %v252 = vpack.c.b16 %v172, %v168
  %v253 = vpack.c.b16 %v173, %v169
  %v254 = vpack.c.b16 %v178, %v174
  %v255 = vpack.c.b16 %v179, %v175
  %v256 = vpack.c.b16 %v180, %v176
  %v257 = vpack.c.b16 %v181, %v177
  %v258 = vpack.c.b16 %v186, %v182
  %v259 = vpack.c.b16 %v187, %v183
  %v260 = vpack.c.b16 %v188, %v184
  %v261 = vpack.c.b16 %v189, %v185
  %v262 = vpack.c.b16 %v194, %v190
  %v263 = vpack.c.b16 %v195, %v191
  %v264 = vpack.c.b16 %v196, %v192
  %v265 = vpack.c.b16 %v197, %v193
  %v266 = vpack.c.b16 %v202, %v198
  %v267 = vpack.c.b16 %v203, %v199
  %v268 = vpack.c.b16 %v204, %v200
  %v269 = vpack.c.b16 %v205, %v201
  %v270 = vpack.c.b16 %v210, %v206
  %v271 = vpack.c.b16 %v211, %v207
  %v272 = vpack.c.b16 %v212, %v208
  %v273 = vpack.c.b16 %v213, %v209
  %v274 = vpack.c.b16 %v218, %v214
  %v275 = vpack.c.b16 %v219, %v215
  %v276 = vpack.c.b16 %v220, %v216
  %v277 = vpack.c.b16 %v221, %v217
  %v278 = vpack.c.b16 %v226, %v222
  %v279 = vpack.c.b16 %v227, %v223
  %v280 = vpack.c.b16 %v228, %v224
  %v281 = vpack.c.b16 %v229, %v225
  %v282 = vpack.c.b16 %v234, %v230
  %v283 = vpack.c.b16 %v235, %v231
  %v284 = vpack.c.b16 %v236, %v232
  %v285 = vpack.c.b16 %v237, %v233
  %v286 = vpack.c.b16 %v242, %v238
  %v287 = vpack.c.b16 %v243, %v239
  %v288 = vpack.c.b16 %v244, %v240
  %v289 = vpack.c.b16 %v245, %v241
  %v290 = vpack.c.b16 %v246, %v246
  %v291 = vpack.c.b16 %v247, %v247
  %v292 = vpack.c.b16 %v248, %v248
  %v293 = vpack.c.b16 %v249, %v249
  %v402 = vunpack.c.l.b16 %v56
  %v403 = vunpack.c.l.b16 %v57
  %v404 = vunpack.c.l.b16 %v58
  %v405 = vunpack.c.l.b16 %v59
  %v406 = vunpack.c.l.b16 %v60
  %v407 = vunpack.c.l.b16 %v61
  %v408 = vunpack.c.l.b16 %v62
  %v409 = vunpack.c.l.b16 %v63
  %v410 = vunpack.c.l.b16 %v64
  %v411 = vunpack.c.l.b16 %v65
  %v412 = vunpack.c.l.b16 %v66
  %v413 = vunpack.c.l.b16 %v67
  %v414 = vunpack.c.l.b16 %v68
  %v415 = vunpack.c.l.b16 %v69
  %v416 = vunpack.c.l.b16 %v70
  %v417 = vunpack.c.l.b16 %v71
  %v418 = vunpack.c.l.b16 %v72
  %v419 = vunpack.c.l.b16 %v73
  %v420 = vunpack.c.l.b16 %v74
  %v421 = vunpack.c.l.b16 %v75
  %v422 = vunpack.c.l.b16 %v76
  %v423 = vunpack.c.l.b16 %v77
  %v424 = vunpack.c.l.b16 %v78
  %v425 = vunpack.c.l.b16 %v79
  %v426 = vunpack.c.l.b16 %v80
  %v427 = vunpack.c.l.b16 %v81
  %v428 = vunpack.c.l.b16 %v82
  %v429 = vunpack.c.l.b16 %v83
  %v430 = vunpack.c.l.b16 %v84
  %v431 = vunpack.c.l.b16 %v85
  %v432 = vunpack.c.l.b16 %v86
  %v433 = vunpack.c.l.b16 %v87
  %v434 = vunpack.c.l.b16 %v88
  %v435 = vunpack.c.l.b16 %v89
  %v436 = vunpack.c.l.b16 %v90
  %v437 = vunpack.c.l.b16 %v91
  %v438 = vunpack.c.l.b16 %v92
  %v439 = vunpack.c.l.b16 %v93
  %v440 = vunpack.c.l.b16 %v94
  %v441 = vunpack.c.l.b16 %v95
  %v442 = vunpack.c.l.b16 %v96
  %v443 = vunpack.c.l.b16 %v97
  %v444 = vunpack.c.l.b16 %v98
  %v445 = vunpack.c.l.b16 %v99
  %v446 = vunpack.c.l.b16 %v100
  %v447 = vunpack.c.l.b16 %v101
  %v448 = vunpack.c.l.b16 %v102
  %v449 = vunpack.c.l.b16 %v103
  %v450 = vunpack.c.l.b16 %v104
  %v451 = vunpack.c.l.b16 %v105
  %v452 = vunpack.c.l.b16 %v106
  %v453 = vunpack.c.l.b16 %v107
  %v454 = vunpack.c.l.b16 %v108
  %v455 = vunpack.c.l.b16 %v109
  %v456 = vunpack.c.l.b16 %v110
  %v457 = vunpack.c.l.b16 %v111
  %v458 = vunpack.c.l.b16 %v112
  %v459 = vunpack.c.l.b16 %v113
  %v460 = vunpack.c.l.b16 %v114
  %v461 = vunpack.c.l.b16 %v115
  %v462 = vunpack.c.l.b16 %v116
  %v463 = vunpack.c.l.b16 %v117
  %v464 = vunpack.c.l.b16 %v118
  %v465 = vunpack.c.l.b16 %v119
  %v466 = vpack.c.b16 %v403, %v402
  %v467 = vpack.c.b16 %v405, %v404
  %v468 = vpack.c.b16 %v407, %v406
  %v469 = vpack.c.b16 %v409, %v408
  %v470 = vpack.c.b16 %v411, %v410
  %v471 = vpack.c.b16 %v413, %v412
  %v472 = vpack.c.b16 %v415, %v414
  %v473 = vpack.c.b16 %v417, %v416
  %v474 = vpack.c.b16 %v419, %v418
  %v475 = vpack.c.b16 %v421, %v420
  %v476 = vpack.c.b16 %v423, %v422
  %v477 = vpack.c.b16 %v425, %v424
  %v478 = vpack.c.b16 %v427, %v426
  %v479 = vpack.c.b16 %v429, %v428
  %v480 = vpack.c.b16 %v431, %v430
  %v481 = vpack.c.b16 %v433, %v432
  %v482 = vpack.c.b16 %v435, %v434
  %v483 = vpack.c.b16 %v437, %v436
  %v484 = vpack.c.b16 %v439, %v438
  %v485 = vpack.c.b16 %v441, %v440
  %v486 = vpack.c.b16 %v443, %v442
  %v487 = vpack.c.b16 %v445, %v444
  %v488 = vpack.c.b16 %v447, %v446
  %v489 = vpack.c.b16 %v449, %v448
  %v490 = vpack.c.b16 %v451, %v450
  %v491 = vpack.c.b16 %v453, %v452
  %v492 = vpack.c.b16 %v455, %v454
  %v493 = vpack.c.b16 %v457, %v456
  %v494 = vpack.c.b16 %v459, %v458
  %v495 = vpack.c.b16 %v461, %v460
  %v496 = vpack.c.b16 %v463, %v462
  %v497 = vpack.c.b16 %v465, %v464
  %530 = vmatpush.bf16.msra.mxu0 %v473
  %531 = vmatpush.bf16.msra.mxu0 %v472
  %532 = vmatpush.bf16.msra.mxu0 %v471
  %533 = vmatpush.bf16.msra.mxu0 %v470
  %534 = vmatpush.bf16.msra.mxu0 %v469
  %535 = vmatpush.bf16.msra.mxu0 %v468
  %536 = vmatpush.bf16.msra.mxu0 %v467
  %537 = vmatpush.bf16.msra.mxu0 %v466
  %538 = vmatmul.bf16.gmra.mxu0 %v250
  %v539 = vpop.f32.mrf.mxu0
  %v540 = vadd.f32 %v122, %v539
  %v541 = vpop.f32.mrf.mxu0
  %v542 = vadd.f32 %v122, %v541
  %543 = vmatmul.bf16.gmra.mxu0 %v254
  %v544 = vpop.f32.mrf.mxu0
  %v545 = vadd.f32 %v122, %v544
  %v546 = vpop.f32.mrf.mxu0
  %v547 = vadd.f32 %v122, %v546
  %548 = vmatmul.bf16.gmra.mxu0 %v258
  %v549 = vpop.f32.mrf.mxu0
  %v550 = vadd.f32 %v122, %v549
  %v551 = vpop.f32.mrf.mxu0
  %v552 = vadd.f32 %v122, %v551
  %553 = vmatmul.bf16.gmra.mxu0 %v262
  %v554 = vpop.f32.mrf.mxu0
  %v555 = vadd.f32 %v122, %v554
  %v556 = vpop.f32.mrf.mxu0
  %v557 = vadd.f32 %v122, %v556
  %558 = vmatmul.bf16.gmra.mxu0 %v266
  %v559 = vpop.f32.mrf.mxu0
  %v560 = vadd.f32 %v122, %v559
  %v561 = vpop.f32.mrf.mxu0
  %v562 = vadd.f32 %v122, %v561
  %563 = vmatmul.bf16.gmra.mxu0 %v270
  %v564 = vpop.f32.mrf.mxu0
  %v565 = vadd.f32 %v122, %v564
  %v566 = vpop.f32.mrf.mxu0
  %v567 = vadd.f32 %v122, %v566
  %568 = vmatmul.bf16.gmra.mxu0 %v274
  %v569 = vpop.f32.mrf.mxu0
  %v570 = vadd.f32 %v122, %v569
  %v571 = vpop.f32.mrf.mxu0
  %v572 = vadd.f32 %v122, %v571
  %573 = vmatmul.bf16.gmra.mxu0 %v278
  %v574 = vpop.f32.mrf.mxu0
  %v575 = vadd.f32 %v122, %v574
  %v576 = vpop.f32.mrf.mxu0
  %v577 = vadd.f32 %v122, %v576
  %578 = vmatmul.bf16.gmra.mxu0 %v282
  %v579 = vpop.f32.mrf.mxu0
  %v580 = vadd.f32 %v122, %v579
  %v581 = vpop.f32.mrf.mxu0
  %v582 = vadd.f32 %v122, %v581
  %583 = vmatmul.bf16.gmra.mxu0 %v286
  %v584 = vpop.f32.mrf.mxu0
  %v585 = vadd.f32 %v122, %v584
  %v586 = vpop.f32.mrf.mxu0
  %v587 = vadd.f32 %v122, %v586
  %588 = vmatmul.bf16.gmra.mxu0 %v290
  %v589 = vpop.f32.mrf.mxu0
  %v590 = vadd.f32 %v122, %v589
  %v591 = vpop.f32.mrf.mxu0
  %592 = vdwg.mxu0
  %593 = vmatpush.bf16.msra.mxu0 %v481
  %594 = vmatpush.bf16.msra.mxu0 %v480
  %595 = vmatpush.bf16.msra.mxu0 %v479
  %596 = vmatpush.bf16.msra.mxu0 %v478
  %597 = vmatpush.bf16.msra.mxu0 %v477
  %598 = vmatpush.bf16.msra.mxu0 %v476
  %599 = vmatpush.bf16.msra.mxu0 %v475
  %600 = vmatpush.bf16.msra.mxu0 %v474
  %601 = vmatmul.bf16.gmra.mxu0 %v251
  %v602 = vpop.f32.mrf.mxu0
  %v603 = vadd.f32 %v540, %v602
  %v604 = vpop.f32.mrf.mxu0
  %v605 = vadd.f32 %v542, %v604
  %606 = vmatmul.bf16.gmra.mxu0 %v255
  %v607 = vpop.f32.mrf.mxu0
  %v608 = vadd.f32 %v545, %v607
  %v609 = vpop.f32.mrf.mxu0
  %v610 = vadd.f32 %v547, %v609
  %611 = vmatmul.bf16.gmra.mxu0 %v259
  %v612 = vpop.f32.mrf.mxu0
  %v613 = vadd.f32 %v550, %v612
  %v614 = vpop.f32.mrf.mxu0
  %v615 = vadd.f32 %v552, %v614
  %616 = vmatmul.bf16.gmra.mxu0 %v263
  %v617 = vpop.f32.mrf.mxu0
  %v618 = vadd.f32 %v555, %v617
  %v619 = vpop.f32.mrf.mxu0
  %v620 = vadd.f32 %v557, %v619
  %621 = vmatmul.bf16.gmra.mxu0 %v267
  %v622 = vpop.f32.mrf.mxu0
  %v623 = vadd.f32 %v560, %v622
  %v624 = vpop.f32.mrf.mxu0
  %v625 = vadd.f32 %v562, %v624
  %626 = vmatmul.bf16.gmra.mxu0 %v271
  %v627 = vpop.f32.mrf.mxu0
  %v628 = vadd.f32 %v565, %v627
  %v629 = vpop.f32.mrf.mxu0
  %v630 = vadd.f32 %v567, %v629
  %631 = vmatmul.bf16.gmra.mxu0 %v275
  %v632 = vpop.f32.mrf.mxu0
  %v633 = vadd.f32 %v570, %v632
  %v634 = vpop.f32.mrf.mxu0
  %v635 = vadd.f32 %v572, %v634
  %636 = vmatmul.bf16.gmra.mxu0 %v279
  %v637 = vpop.f32.mrf.mxu0
  %v638 = vadd.f32 %v575, %v637
  %v639 = vpop.f32.mrf.mxu0
  %v640 = vadd.f32 %v577, %v639
  %641 = vmatmul.bf16.gmra.mxu0 %v283
  %v642 = vpop.f32.mrf.mxu0
  %v643 = vadd.f32 %v580, %v642
  %v644 = vpop.f32.mrf.mxu0
  %v645 = vadd.f32 %v582, %v644
  %646 = vmatmul.bf16.gmra.mxu0 %v287
  %v647 = vpop.f32.mrf.mxu0
  %v648 = vadd.f32 %v585, %v647
  %v649 = vpop.f32.mrf.mxu0
  %v650 = vadd.f32 %v587, %v649
  %651 = vmatmul.bf16.gmra.mxu0 %v291
  %v652 = vpop.f32.mrf.mxu0
  %v653 = vadd.f32 %v590, %v652
  %v654 = vpop.f32.mrf.mxu0
  %655 = vdwg.mxu0
  %656 = vmatpush.bf16.msra.mxu0 %v489
  %657 = vmatpush.bf16.msra.mxu0 %v488
  %658 = vmatpush.bf16.msra.mxu0 %v487
  %659 = vmatpush.bf16.msra.mxu0 %v486
  %660 = vmatpush.bf16.msra.mxu0 %v485
  %661 = vmatpush.bf16.msra.mxu0 %v484
  %662 = vmatpush.bf16.msra.mxu0 %v483
  %663 = vmatpush.bf16.msra.mxu0 %v482
  %664 = vmatmul.bf16.gmra.mxu0 %v252
  %v665 = vpop.f32.mrf.mxu0
  %v666 = vadd.f32 %v603, %v665
  %v667 = vpop.f32.mrf.mxu0
  %v668 = vadd.f32 %v605, %v667
  %669 = vmatmul.bf16.gmra.mxu0 %v256
  %v670 = vpop.f32.mrf.mxu0
  %v671 = vadd.f32 %v608, %v670
  %v672 = vpop.f32.mrf.mxu0
  %v673 = vadd.f32 %v610, %v672
  %674 = vmatmul.bf16.gmra.mxu0 %v260
  %v675 = vpop.f32.mrf.mxu0
  %v676 = vadd.f32 %v613, %v675
  %v677 = vpop.f32.mrf.mxu0
  %v678 = vadd.f32 %v615, %v677
  %679 = vmatmul.bf16.gmra.mxu0 %v264
  %v680 = vpop.f32.mrf.mxu0
  %v681 = vadd.f32 %v618, %v680
  %v682 = vpop.f32.mrf.mxu0
  %v683 = vadd.f32 %v620, %v682
  %684 = vmatmul.bf16.gmra.mxu0 %v268
  %v685 = vpop.f32.mrf.mxu0
  %v686 = vadd.f32 %v623, %v685
  %v687 = vpop.f32.mrf.mxu0
  %v688 = vadd.f32 %v625, %v687
  %689 = vmatmul.bf16.gmra.mxu0 %v272
  %v690 = vpop.f32.mrf.mxu0
  %v691 = vadd.f32 %v628, %v690
  %v692 = vpop.f32.mrf.mxu0
  %v693 = vadd.f32 %v630, %v692
  %694 = vmatmul.bf16.gmra.mxu0 %v276
  %v695 = vpop.f32.mrf.mxu0
  %v696 = vadd.f32 %v633, %v695
  %v697 = vpop.f32.mrf.mxu0
  %v698 = vadd.f32 %v635, %v697
  %699 = vmatmul.bf16.gmra.mxu0 %v280
  %v700 = vpop.f32.mrf.mxu0
  %v701 = vadd.f32 %v638, %v700
  %v702 = vpop.f32.mrf.mxu0
  %v703 = vadd.f32 %v640, %v702
  %704 = vmatmul.bf16.gmra.mxu0 %v284
  %v705 = vpop.f32.mrf.mxu0
  %v706 = vadd.f32 %v643, %v705
  %v707 = vpop.f32.mrf.mxu0
  %v708 = vadd.f32 %v645, %v707
  %709 = vmatmul.bf16.gmra.mxu0 %v288
  %v710 = vpop.f32.mrf.mxu0
  %v711 = vadd.f32 %v648, %v710
  %v712 = vpop.f32.mrf.mxu0
  %v713 = vadd.f32 %v650, %v712
  %714 = vmatmul.bf16.gmra.mxu0 %v292
  %v715 = vpop.f32.mrf.mxu0
  %v716 = vadd.f32 %v653, %v715
  %v717 = vpop.f32.mrf.mxu0
  %718 = vdwg.mxu0
  %719 = vmatpush.bf16.msra.mxu0 %v497
  %720 = vmatpush.bf16.msra.mxu0 %v496
  %721 = vmatpush.bf16.msra.mxu0 %v495
  %722 = vmatpush.bf16.msra.mxu0 %v494
  %723 = vmatpush.bf16.msra.mxu0 %v493
  %724 = vmatpush.bf16.msra.mxu0 %v492
  %725 = vmatpush.bf16.msra.mxu0 %v491
  %726 = vmatpush.bf16.msra.mxu0 %v490
  %727 = vmatmul.bf16.gmra.mxu0 %v253
  %v728 = vpop.f32.mrf.mxu0
  %v729 = vadd.f32 %v666, %v728
  %v730 = vpop.f32.mrf.mxu0
  %v731 = vadd.f32 %v668, %v730
  %732 = vmatmul.bf16.gmra.mxu0 %v257
  %v733 = vpop.f32.mrf.mxu0
  %v734 = vadd.f32 %v671, %v733
  %v735 = vpop.f32.mrf.mxu0
  %v736 = vadd.f32 %v673, %v735
  %737 = vmatmul.bf16.gmra.mxu0 %v261
  %v738 = vpop.f32.mrf.mxu0
  %v739 = vadd.f32 %v676, %v738
  %v740 = vpop.f32.mrf.mxu0
  %v741 = vadd.f32 %v678, %v740
  %742 = vmatmul.bf16.gmra.mxu0 %v265
  %v743 = vpop.f32.mrf.mxu0
  %v744 = vadd.f32 %v681, %v743
  %v745 = vpop.f32.mrf.mxu0
  %v746 = vadd.f32 %v683, %v745
  %747 = vmatmul.bf16.gmra.mxu0 %v269
  %v748 = vpop.f32.mrf.mxu0
  %v749 = vadd.f32 %v686, %v748
  %v750 = vpop.f32.mrf.mxu0
  %v751 = vadd.f32 %v688, %v750
  %752 = vmatmul.bf16.gmra.mxu0 %v273
  %v753 = vpop.f32.mrf.mxu0
  %v754 = vadd.f32 %v691, %v753
  %v755 = vpop.f32.mrf.mxu0
  %v756 = vadd.f32 %v693, %v755
  %757 = vmatmul.bf16.gmra.mxu0 %v277
  %v758 = vpop.f32.mrf.mxu0
  %v759 = vadd.f32 %v696, %v758
  %v760 = vpop.f32.mrf.mxu0
  %v761 = vadd.f32 %v698, %v760
  %762 = vmatmul.bf16.gmra.mxu0 %v281
  %v763 = vpop.f32.mrf.mxu0
  %v764 = vadd.f32 %v701, %v763
  %v765 = vpop.f32.mrf.mxu0
  %v766 = vadd.f32 %v703, %v765
  %767 = vmatmul.bf16.gmra.mxu0 %v285
  %v768 = vpop.f32.mrf.mxu0
  %v769 = vadd.f32 %v706, %v768
  %v770 = vpop.f32.mrf.mxu0
  %v771 = vadd.f32 %v708, %v770
  %772 = vmatmul.bf16.gmra.mxu0 %v289
  %v773 = vpop.f32.mrf.mxu0
  %v774 = vadd.f32 %v711, %v773
  %v775 = vpop.f32.mrf.mxu0
  %v776 = vadd.f32 %v713, %v775
  %777 = vmatmul.bf16.gmra.mxu0 %v293
  %v778 = vpop.f32.mrf.mxu0
  %v779 = vadd.f32 %v716, %v778
  %v780 = vpop.f32.mrf.mxu0
  %781 = vdwg.mxu0
  %v782 = vmax.f32 %v729, 0.0
  %v783 = vmax.f32 %v731, 0.0
  %v784 = vmax.f32 %v734, 0.0
  %v785 = vmax.f32 %v736, 0.0
  %v786 = vmax.f32 %v739, 0.0
  %v787 = vmax.f32 %v741, 0.0
  %v788 = vmax.f32 %v744, 0.0
  %v789 = vmax.f32 %v746, 0.0
  %v790 = vmax.f32 %v749, 0.0
  %v791 = vmax.f32 %v751, 0.0
  %v792 = vmax.f32 %v754, 0.0
  %v793 = vmax.f32 %v756, 0.0
  %v794 = vmax.f32 %v759, 0.0
  %v795 = vmax.f32 %v761, 0.0
  %v796 = vmax.f32 %v764, 0.0
  %v797 = vmax.f32 %v766, 0.0
  %v798 = vmax.f32 %v769, 0.0
  %v799 = vmax.f32 %v771, 0.0
  %v800 = vmax.f32 %v774, 0.0
  %v801 = vmax.f32 %v776, 0.0
  %v802 = vmax.f32 %v779, 0.0
  %v803 = vpack.c.bf16 %v782, %v782
  %v804 = vpack.c.bf16 %v783, %v783
  %v805 = vpack.c.bf16 %v784, %v784
  %v806 = vpack.c.bf16 %v785, %v785
  %v807 = vpack.c.bf16 %v786, %v786
  %v808 = vpack.c.bf16 %v787, %v787
  %v809 = vpack.c.bf16 %v788, %v788
  %v810 = vpack.c.bf16 %v789, %v789
  %v811 = vpack.c.bf16 %v790, %v790
  %v812 = vpack.c.bf16 %v791, %v791
  %v813 = vpack.c.bf16 %v792, %v792
  %v814 = vpack.c.bf16 %v793, %v793
  %v815 = vpack.c.bf16 %v794, %v794
  %v816 = vpack.c.bf16 %v795, %v795
  %v817 = vpack.c.bf16 %v796, %v796
  %v818 = vpack.c.bf16 %v797, %v797
  %v819 = vpack.c.bf16 %v798, %v798
  %v820 = vpack.c.bf16 %v799, %v799
  %v821 = vpack.c.bf16 %v800, %v800
  %v822 = vpack.c.bf16 %v801, %v801
  %v823 = vpack.c.bf16 %v802, %v802
  %vm824 = vcmask 519168
  %825 = vst.msk [vmem:[%s3] sm:$0xf] %vm824, %v803
  %826 = vst.msk [vmem:[%s3 + $0x4] sm:$0xf] %vm824, %v804
  %827 = vst.msk [vmem:[%s3 + $0x8] sm:$0xf] %vm824, %v805
  %828 = vst.msk [vmem:[%s3 + $0xc] sm:$0xf] %vm824, %v806
  %829 = vst.msk [vmem:[%s3 + $0x10] sm:$0xf] %vm824, %v807
  %830 = vst.msk [vmem:[%s3 + $0x14] sm:$0xf] %vm824, %v808
  %831 = vst.msk [vmem:[%s3 + $0x18] sm:$0xf] %vm824, %v809
  %832 = vst.msk [vmem:[%s3 + $0x1c] sm:$0xf] %vm824, %v810
  %833 = vst.msk [vmem:[%s3 + $0x20] sm:$0xf] %vm824, %v811
  %834 = vst.msk [vmem:[%s3 + $0x24] sm:$0xf] %vm824, %v812
  %835 = vst.msk [vmem:[%s3 + $0x28] sm:$0xf] %vm824, %v813
  %836 = vst.msk [vmem:[%s3 + $0x2c] sm:$0xf] %vm824, %v814
  %837 = vst.msk [vmem:[%s3 + $0x30] sm:$0xf] %vm824, %v815
  %838 = vst.msk [vmem:[%s3 + $0x34] sm:$0xf] %vm824, %v816
  %839 = vst.msk [vmem:[%s3 + $0x38] sm:$0xf] %vm824, %v817
  %840 = vst.msk [vmem:[%s3 + $0x3c] sm:$0xf] %vm824, %v818
  %841 = vst.msk [vmem:[%s3 + $0x40] sm:$0xf] %vm824, %v819
  %842 = vst.msk [vmem:[%s3 + $0x44] sm:$0xf] %vm824, %v820
  %843 = vst.msk [vmem:[%s3 + $0x48] sm:$0xf] %vm824, %v821
  %844 = vst.msk [vmem:[%s3 + $0x4c] sm:$0xf] %vm824, %v822
  %845 = vst.msk [vmem:[%s3 + $0x50] sm:$0xf] %vm824, %v823
  // Predicated region
  $region14: #{duel_qfunc_forward.5} parent=0 // pred_check
    _
  $region15: #{duel_qfunc_forward.5} parent=0 // pred_check_branch
    %847 = sbr.rel (0) target = $region17
  $region16: #{duel_qfunc_forward.5} parent=0 // pred_region
    _
  $region17: #{duel_qfunc_forward.5} parent=0 // pred_fallthru
    _
  // Predicated region
  $region18: #{duel_qfunc_forward.5} parent=0 // pred_check
    _
  $region19: #{duel_qfunc_forward.5} parent=0 // pred_check_branch
    %849 = sbr.rel (0) target = $region21
  $region20: #{duel_qfunc_forward.5} parent=0 // pred_region
    _
  $region21: #{duel_qfunc_forward.5} parent=0 // pred_fallthru
    _

// kernel: duel_qfunc_forward.6
$region0: #{duel_qfunc_forward.6}
  #allocation0 [shape = 'u32[]', space=smem, size = 0x4, offset = 0x4, fixed_abs, tag = 'smem constant byte address 0x4 - core index']
  #allocation1 [shape = 'u32[72,128]{1,0:T(1,128)}', space=vmem, size = 0x9000, scoped, tag = 'internal scratch']
  %s0 = inlined_call_operand.vmem [shape: bf16[98,576], index: 0, kind: input, shape index: {}]
  %s1 = inlined_call_operand.vmem [shape: bf16[576,32], index: 1, kind: input, shape index: {}]
  %s2 = inlined_call_operand.vmem [shape: f32[1,32], index: 2, kind: input, shape index: {}]
  %s3 = inlined_call_operand.vmem [shape: bf16[98,32], index: 3, kind: output, shape index: {}]
  %s4 = sld [smem:[#allocation0]]
  $region22: #{duel_qfunc_forward.6} parent=0
    _
  %s6 = ssub.s32 1, %s4
  %s7 = scalar_select 0, %s6, %s4
  // Predicated region
  $region2: #{duel_qfunc_forward.6} parent=0 // pred_check
    _
  $region3: #{duel_qfunc_forward.6} parent=0 // pred_check_branch
    %9 = sbr.rel (0) target = $region5
  $region4: #{duel_qfunc_forward.6} parent=0 // pred_region
    _
  $region5: #{duel_qfunc_forward.6} parent=0 // pred_fallthru
    _
  // Predicated region
  $region6: #{duel_qfunc_forward.6} parent=0 // pred_check
    _
  $region7: #{duel_qfunc_forward.6} parent=0 // pred_check_branch
    %11 = sbr.rel (0) target = $region9
  $region8: #{duel_qfunc_forward.6} parent=0 // pred_region
    _
  $region9: #{duel_qfunc_forward.6} parent=0 // pred_fallthru
    _
  // Predicated region
  $region10: #{duel_qfunc_forward.6} parent=0 // pred_check
    _
  $region11: #{duel_qfunc_forward.6} parent=0 // pred_check_branch
    %13 = sbr.rel (0) target = $region13
  $region12: #{duel_qfunc_forward.6} parent=0 // pred_region
    _
  $region13: #{duel_qfunc_forward.6} parent=0 // pred_fallthru
    _
  %v15 = vld [vmem:[%s0] sm:$0xff]
  %v16 = vld [vmem:[%s0 + $0x8] sm:$0xff]
  %v17 = vld [vmem:[%s0 + $0x10] sm:$0xf]
  %v18 = vld [vmem:[%s0 + $0x14] sm:$0xff]
  %v19 = vld [vmem:[%s0 + $0x1c] sm:$0xff]
  %v20 = vld [vmem:[%s0 + $0x24] sm:$0xf]
  %v21 = vld [vmem:[%s0 + $0x28] sm:$0xff]
  %v22 = vld [vmem:[%s0 + $0x30] sm:$0xff]
  %v23 = vld [vmem:[%s0 + $0x38] sm:$0xf]
  %v24 = vld [vmem:[%s0 + $0x3c] sm:$0xff]
  %v25 = vld [vmem:[%s0 + $0x44] sm:$0xff]
  %v26 = vld [vmem:[%s0 + $0x4c] sm:$0xf]
  %v27 = vld [vmem:[%s0 + $0x50] sm:$0xff]
  %v28 = vld [vmem:[%s0 + $0x58] sm:$0xff]
  %v29 = vld [vmem:[%s0 + $0x60] sm:$0xf]
  %v30 = vld [vmem:[%s0 + $0x64] sm:$0xff]
  %v31 = vld [vmem:[%s0 + $0x6c] sm:$0xff]
  %v32 = vld [vmem:[%s0 + $0x74] sm:$0xf]
  %v33 = vld [vmem:[%s0 + $0x78] sm:$0xff]
  %v34 = vld [vmem:[%s0 + $0x80] sm:$0xff]
  %v35 = vld [vmem:[%s0 + $0x88] sm:$0xf]
  %v36 = vld [vmem:[%s0 + $0x8c] sm:$0xff]
  %v37 = vld [vmem:[%s0 + $0x94] sm:$0xff]
  %v38 = vld [vmem:[%s0 + $0x9c] sm:$0xf]
  %v39 = vld [vmem:[%s0 + $0xa0] sm:$0xff]
  %v40 = vld [vmem:[%s0 + $0xa8] sm:$0xff]
  %v41 = vld [vmem:[%s0 + $0xb0] sm:$0xf]
  %v42 = vld [vmem:[%s0 + $0xb4] sm:$0xff]
  %v43 = vld [vmem:[%s0 + $0xbc] sm:$0xff]
  %v44 = vld [vmem:[%s0 + $0xc4] sm:$0xf]
  %v45 = vld [vmem:[%s0 + $0xc8] sm:$0xff]
  %v46 = vld [vmem:[%s0 + $0xd0] sm:$0xff]
  %v47 = vld [vmem:[%s0 + $0xd8] sm:$0xf]
  %v48 = vld [vmem:[%s0 + $0xdc] sm:$0xff]
  %v49 = vld [vmem:[%s0 + $0xe4] sm:$0xff]
  %v50 = vld [vmem:[%s0 + $0xec] sm:$0xf]
  %v51 = vld [vmem:[%s0 + $0xf0] sm:$0xff]
  %v52 = vld [vmem:[%s0 + $0xf8] sm:$0xff]
  %v53 = vld [vmem:[%s0 + $0x100] sm:$0xf]
  %v54 = vld [vmem:[%s1] sm:$0xf]
  %v55 = vld [vmem:[%s1 + $0x4] sm:$0xf]
  %v56 = vld [vmem:[%s1 + $0x8] sm:$0xf]
  %v57 = vld [vmem:[%s1 + $0xc] sm:$0xf]
  %v58 = vld [vmem:[%s1 + $0x10] sm:$0xf]
  %v59 = vld [vmem:[%s1 + $0x14] sm:$0xf]
  %v60 = vld [vmem:[%s1 + $0x18] sm:$0xf]
  %v61 = vld [vmem:[%s1 + $0x1c] sm:$0xf]
  %v62 = vld [vmem:[%s1 + $0x20] sm:$0xf]
  %v63 = vld [vmem:[%s1 + $0x24] sm:$0xf]
  %v64 = vld [vmem:[%s1 + $0x28] sm:$0xf]
  %v65 = vld [vmem:[%s1 + $0x2c] sm:$0xf]
  %v66 = vld [vmem:[%s1 + $0x30] sm:$0xf]
  %v67 = vld [vmem:[%s1 + $0x34] sm:$0xf]
  %v68 = vld [vmem:[%s1 + $0x38] sm:$0xf]
  %v69 = vld [vmem:[%s1 + $0x3c] sm:$0xf]
  %v70 = vld [vmem:[%s1 + $0x40] sm:$0xf]
  %v71 = vld [vmem:[%s1 + $0x44] sm:$0xf]
  %v72 = vld [vmem:[%s1 + $0x48] sm:$0xf]
  %v73 = vld [vmem:[%s1 + $0x4c] sm:$0xf]
  %v74 = vld [vmem:[%s1 + $0x50] sm:$0xf]
  %v75 = vld [vmem:[%s1 + $0x54] sm:$0xf]
  %v76 = vld [vmem:[%s1 + $0x58] sm:$0xf]
  %v77 = vld [vmem:[%s1 + $0x5c] sm:$0xf]
  %v78 = vld [vmem:[%s1 + $0x60] sm:$0xf]
  %v79 = vld [vmem:[%s1 + $0x64] sm:$0xf]
  %v80 = vld [vmem:[%s1 + $0x68] sm:$0xf]
  %v81 = vld [vmem:[%s1 + $0x6c] sm:$0xf]
  %v82 = vld [vmem:[%s1 + $0x70] sm:$0xf]
  %v83 = vld [vmem:[%s1 + $0x74] sm:$0xf]
  %v84 = vld [vmem:[%s1 + $0x78] sm:$0xf]
  %v85 = vld [vmem:[%s1 + $0x7c] sm:$0xf]
  %v86 = vld [vmem:[%s1 + $0x80] sm:$0xf]
  %v87 = vld [vmem:[%s1 + $0x84] sm:$0xf]
  %v88 = vld [vmem:[%s1 + $0x88] sm:$0xf]
  %v89 = vld [vmem:[%s1 + $0x8c] sm:$0xf]
  %v90 = vld [vmem:[%s1 + $0x90] sm:$0xf]
  %v91 = vld [vmem:[%s1 + $0x94] sm:$0xf]
  %v92 = vld [vmem:[%s1 + $0x98] sm:$0xf]
  %v93 = vld [vmem:[%s1 + $0x9c] sm:$0xf]
  %v94 = vld [vmem:[%s1 + $0xa0] sm:$0xf]
  %v95 = vld [vmem:[%s1 + $0xa4] sm:$0xf]
  %v96 = vld [vmem:[%s1 + $0xa8] sm:$0xf]
  %v97 = vld [vmem:[%s1 + $0xac] sm:$0xf]
  %v98 = vld [vmem:[%s1 + $0xb0] sm:$0xf]
  %v99 = vld [vmem:[%s1 + $0xb4] sm:$0xf]
  %v100 = vld [vmem:[%s1 + $0xb8] sm:$0xf]
  %v101 = vld [vmem:[%s1 + $0xbc] sm:$0xf]
  %v102 = vld [vmem:[%s1 + $0xc0] sm:$0xf]
  %v103 = vld [vmem:[%s1 + $0xc4] sm:$0xf]
  %v104 = vld [vmem:[%s1 + $0xc8] sm:$0xf]
  %v105 = vld [vmem:[%s1 + $0xcc] sm:$0xf]
  %v106 = vld [vmem:[%s1 + $0xd0] sm:$0xf]
  %v107 = vld [vmem:[%s1 + $0xd4] sm:$0xf]
  %v108 = vld [vmem:[%s1 + $0xd8] sm:$0xf]
  %v109 = vld [vmem:[%s1 + $0xdc] sm:$0xf]
  %v110 = vld [vmem:[%s1 + $0xe0] sm:$0xf]
  %v111 = vld [vmem:[%s1 + $0xe4] sm:$0xf]
  %v112 = vld [vmem:[%s1 + $0xe8] sm:$0xf]
  %v113 = vld [vmem:[%s1 + $0xec] sm:$0xf]
  %v114 = vld [vmem:[%s1 + $0xf0] sm:$0xf]
  %v115 = vld [vmem:[%s1 + $0xf4] sm:$0xf]
  %v116 = vld [vmem:[%s1 + $0xf8] sm:$0xf]
  %v117 = vld [vmem:[%s1 + $0xfc] sm:$0xf]
  %v118 = vld [vmem:[%s1 + $0x100] sm:$0xf]
  %v119 = vld [vmem:[%s1 + $0x104] sm:$0xf]
  %v120 = vld [vmem:[%s1 + $0x108] sm:$0xf]
  %v121 = vld [vmem:[%s1 + $0x10c] sm:$0xf]
  %v122 = vld [vmem:[%s1 + $0x110] sm:$0xf]
  %v123 = vld [vmem:[%s1 + $0x114] sm:$0xf]
  %v124 = vld [vmem:[%s1 + $0x118] sm:$0xf]
  %v125 = vld [vmem:[%s1 + $0x11c] sm:$0xf]
  %v126 = vld [vmem:[%s2] sm:$0x1]
  %v128 = vperm.slane %v126, 0
  %v169 = vunpack.c.l.b16 %v15
  %v170 = vunpack.c.h.b16 %v15
  %v171 = vunpack.c.l.b16 %v16
  %v172 = vunpack.c.h.b16 %v16
  %v173 = vunpack.c.l.b16 %v17
  %v174 = vunpack.c.l.b16 %v18
  %v175 = vunpack.c.h.b16 %v18
  %v176 = vunpack.c.l.b16 %v19
  %v177 = vunpack.c.h.b16 %v19
  %v178 = vunpack.c.l.b16 %v20
  %v179 = vunpack.c.l.b16 %v21
  %v180 = vunpack.c.h.b16 %v21
  %v181 = vunpack.c.l.b16 %v22
  %v182 = vunpack.c.h.b16 %v22
  %v183 = vunpack.c.l.b16 %v23
  %v184 = vunpack.c.l.b16 %v24
  %v185 = vunpack.c.h.b16 %v24
  %v186 = vunpack.c.l.b16 %v25
  %v187 = vunpack.c.h.b16 %v25
  %v188 = vunpack.c.l.b16 %v26
  %v189 = vunpack.c.l.b16 %v27
  %v190 = vunpack.c.h.b16 %v27
  %v191 = vunpack.c.l.b16 %v28
  %v192 = vunpack.c.h.b16 %v28
  %v193 = vunpack.c.l.b16 %v29
  %v194 = vunpack.c.l.b16 %v30
  %v195 = vunpack.c.h.b16 %v30
  %v196 = vunpack.c.l.b16 %v31
  %v197 = vunpack.c.h.b16 %v31
  %v198 = vunpack.c.l.b16 %v32
  %v199 = vunpack.c.l.b16 %v33
  %v200 = vunpack.c.h.b16 %v33
  %v201 = vunpack.c.l.b16 %v34
  %v202 = vunpack.c.h.b16 %v34
  %v203 = vunpack.c.l.b16 %v35
  %v204 = vunpack.c.l.b16 %v36
  %v205 = vunpack.c.h.b16 %v36
  %v206 = vunpack.c.l.b16 %v37
  %v207 = vunpack.c.h.b16 %v37
  %v208 = vunpack.c.l.b16 %v38
  %v209 = vunpack.c.l.b16 %v39
  %v210 = vunpack.c.h.b16 %v39
  %v211 = vunpack.c.l.b16 %v40
  %v212 = vunpack.c.h.b16 %v40
  %v213 = vunpack.c.l.b16 %v41
  %v214 = vunpack.c.l.b16 %v42
  %v215 = vunpack.c.h.b16 %v42
  %v216 = vunpack.c.l.b16 %v43
  %v217 = vunpack.c.h.b16 %v43
  %v218 = vunpack.c.l.b16 %v44
  %v219 = vunpack.c.l.b16 %v45
  %v220 = vunpack.c.h.b16 %v45
  %v221 = vunpack.c.l.b16 %v46
  %v222 = vunpack.c.h.b16 %v46
  %v223 = vunpack.c.l.b16 %v47
  %v224 = vunpack.c.l.b16 %v48
  %v225 = vunpack.c.h.b16 %v48
  %v226 = vunpack.c.l.b16 %v49
  %v227 = vunpack.c.h.b16 %v49
  %v228 = vunpack.c.l.b16 %v50
  %v229 = vunpack.c.l.b16 %v51
  %v230 = vunpack.c.h.b16 %v51
  %v231 = vunpack.c.l.b16 %v52
  %v232 = vunpack.c.h.b16 %v52
  %v233 = vunpack.c.l.b16 %v53
  %v234 = vpack.c.b16 %v174, %v169
  %v235 = vpack.c.b16 %v175, %v170
  %v236 = vpack.c.b16 %v176, %v171
  %v237 = vpack.c.b16 %v177, %v172
  %v238 = vpack.c.b16 %v178, %v173
  %v239 = vpack.c.b16 %v184, %v179
  %v240 = vpack.c.b16 %v185, %v180
  %v241 = vpack.c.b16 %v186, %v181
  %v242 = vpack.c.b16 %v187, %v182
  %v243 = vpack.c.b16 %v188, %v183
  %v244 = vpack.c.b16 %v194, %v189
  %v245 = vpack.c.b16 %v195, %v190
  %v246 = vpack.c.b16 %v196, %v191
  %v247 = vpack.c.b16 %v197, %v192
  %v248 = vpack.c.b16 %v198, %v193
  %v249 = vpack.c.b16 %v204, %v199
  %v250 = vpack.c.b16 %v205, %v200
  %v251 = vpack.c.b16 %v206, %v201
  %v252 = vpack.c.b16 %v207, %v202
  %v253 = vpack.c.b16 %v208, %v203
  %v254 = vpack.c.b16 %v214, %v209
  %v255 = vpack.c.b16 %v215, %v210
  %v256 = vpack.c.b16 %v216, %v211
  %v257 = vpack.c.b16 %v217, %v212
  %v258 = vpack.c.b16 %v218, %v213
  %v259 = vpack.c.b16 %v224, %v219
  %v260 = vpack.c.b16 %v225, %v220
  %v261 = vpack.c.b16 %v226, %v221
  %v262 = vpack.c.b16 %v227, %v222
  %v263 = vpack.c.b16 %v228, %v223
  %v264 = vpack.c.b16 %v229, %v229
  %v265 = vpack.c.b16 %v230, %v230
  %v266 = vpack.c.b16 %v231, %v231
  %v267 = vpack.c.b16 %v232, %v232
  %v268 = vpack.c.b16 %v233, %v233
  %v369 = vunpack.c.l.b16 %v54
  %v370 = vunpack.c.l.b16 %v55
  %v371 = vunpack.c.l.b16 %v56
  %v372 = vunpack.c.l.b16 %v57
  %v373 = vunpack.c.l.b16 %v58
  %v374 = vunpack.c.l.b16 %v59
  %v375 = vunpack.c.l.b16 %v60
  %v376 = vunpack.c.l.b16 %v61
  %v377 = vunpack.c.l.b16 %v62
  %v378 = vunpack.c.l.b16 %v63
  %v379 = vunpack.c.l.b16 %v64
  %v380 = vunpack.c.l.b16 %v65
  %v381 = vunpack.c.l.b16 %v66
  %v382 = vunpack.c.l.b16 %v67
  %v383 = vunpack.c.l.b16 %v68
  %v384 = vunpack.c.l.b16 %v69
  %v385 = vunpack.c.l.b16 %v70
  %v386 = vunpack.c.l.b16 %v71
  %v387 = vunpack.c.l.b16 %v72
  %v388 = vunpack.c.l.b16 %v73
  %v389 = vunpack.c.l.b16 %v74
  %v390 = vunpack.c.l.b16 %v75
  %v391 = vunpack.c.l.b16 %v76
  %v392 = vunpack.c.l.b16 %v77
  %v393 = vunpack.c.l.b16 %v78
  %v394 = vunpack.c.l.b16 %v79
  %v395 = vunpack.c.l.b16 %v80
  %v396 = vunpack.c.l.b16 %v81
  %v397 = vunpack.c.l.b16 %v82
  %v398 = vunpack.c.l.b16 %v83
  %v399 = vunpack.c.l.b16 %v84
  %v400 = vunpack.c.l.b16 %v85
  %v401 = vunpack.c.l.b16 %v86
  %v402 = vunpack.c.l.b16 %v87
  %v403 = vunpack.c.l.b16 %v88
  %v404 = vunpack.c.l.b16 %v89
  %v405 = vunpack.c.l.b16 %v90
  %v406 = vunpack.c.l.b16 %v91
  %v407 = vunpack.c.l.b16 %v92
  %v408 = vunpack.c.l.b16 %v93
  %v409 = vunpack.c.l.b16 %v94
  %v410 = vunpack.c.l.b16 %v95
  %v411 = vunpack.c.l.b16 %v96
  %v412 = vunpack.c.l.b16 %v97
  %v413 = vunpack.c.l.b16 %v98
  %v414 = vunpack.c.l.b16 %v99
  %v415 = vunpack.c.l.b16 %v100
  %v416 = vunpack.c.l.b16 %v101
  %v417 = vunpack.c.l.b16 %v102
  %v418 = vunpack.c.l.b16 %v103
  %v419 = vunpack.c.l.b16 %v104
  %v420 = vunpack.c.l.b16 %v105
  %v421 = vunpack.c.l.b16 %v106
  %v422 = vunpack.c.l.b16 %v107
  %v423 = vunpack.c.l.b16 %v108
  %v424 = vunpack.c.l.b16 %v109
  %v425 = vunpack.c.l.b16 %v110
  %v426 = vunpack.c.l.b16 %v111
  %v427 = vunpack.c.l.b16 %v112
  %v428 = vunpack.c.l.b16 %v113
  %v429 = vunpack.c.l.b16 %v114
  %v430 = vunpack.c.l.b16 %v115
  %v431 = vunpack.c.l.b16 %v116
  %v432 = vunpack.c.l.b16 %v117
  %v433 = vunpack.c.l.b16 %v118
  %v434 = vunpack.c.l.b16 %v119
  %v435 = vunpack.c.l.b16 %v120
  %v436 = vunpack.c.l.b16 %v121
  %v437 = vunpack.c.l.b16 %v122
  %v438 = vunpack.c.l.b16 %v123
  %v439 = vunpack.c.l.b16 %v124
  %v440 = vunpack.c.l.b16 %v125
  %v441 = vpack.c.b16 %v370, %v369
  %v442 = vpack.c.b16 %v372, %v371
  %v443 = vpack.c.b16 %v374, %v373
  %v444 = vpack.c.b16 %v376, %v375
  %v445 = vpack.c.b16 %v378, %v377
  %v446 = vpack.c.b16 %v380, %v379
  %v447 = vpack.c.b16 %v382, %v381
  %v448 = vpack.c.b16 %v384, %v383
  %v449 = vpack.c.b16 %v386, %v385
  %v450 = vpack.c.b16 %v388, %v387
  %v451 = vpack.c.b16 %v390, %v389
  %v452 = vpack.c.b16 %v392, %v391
  %v453 = vpack.c.b16 %v394, %v393
  %v454 = vpack.c.b16 %v396, %v395
  %v455 = vpack.c.b16 %v398, %v397
  %v456 = vpack.c.b16 %v400, %v399
  %v457 = vpack.c.b16 %v402, %v401
  %v458 = vpack.c.b16 %v404, %v403
  %v459 = vpack.c.b16 %v406, %v405
  %v460 = vpack.c.b16 %v408, %v407
  %v461 = vpack.c.b16 %v410, %v409
  %v462 = vpack.c.b16 %v412, %v411
  %v463 = vpack.c.b16 %v414, %v413
  %v464 = vpack.c.b16 %v416, %v415
  %v465 = vpack.c.b16 %v418, %v417
  %v466 = vpack.c.b16 %v420, %v419
  %v467 = vpack.c.b16 %v422, %v421
  %v468 = vpack.c.b16 %v424, %v423
  %v469 = vpack.c.b16 %v426, %v425
  %v470 = vpack.c.b16 %v428, %v427
  %v471 = vpack.c.b16 %v430, %v429
  %v472 = vpack.c.b16 %v432, %v431
  %v473 = vpack.c.b16 %v434, %v433
  %v474 = vpack.c.b16 %v436, %v435
  %v475 = vpack.c.b16 %v438, %v437
  %v476 = vpack.c.b16 %v440, %v439
  %vm513 = vcmask 523264
  %v515 = vsel %vm513, %v238, 0
  %v518 = vsel %vm513, %v243, 0
  %v521 = vsel %vm513, %v248, 0
  %v524 = vsel %vm513, %v253, 0
  %v527 = vsel %vm513, %v258, 0
  %v530 = vsel %vm513, %v263, 0
  %v533 = vsel %vm513, %v268, 0
  %535 = vmatpush.bf16.msra.mxu0 %v448
  %536 = vmatpush.bf16.msra.mxu0 %v447
  %537 = vmatpush.bf16.msra.mxu0 %v446
  %538 = vmatpush.bf16.msra.mxu0 %v445
  %539 = vmatpush.bf16.msra.mxu0 %v444
  %540 = vmatpush.bf16.msra.mxu0 %v443
  %541 = vmatpush.bf16.msra.mxu0 %v442
  %542 = vmatpush.bf16.msra.mxu0 %v441
  %543 = vmatmul.bf16.gmra.mxu0 %v234
  %v544 = vpop.f32.mrf.mxu0
  %v545 = vadd.f32 %v128, %v544
  %v546 = vpop.f32.mrf.mxu0
  %v547 = vadd.f32 %v128, %v546
  %548 = vmatmul.bf16.gmra.mxu0 %v239
  %v549 = vpop.f32.mrf.mxu0
  %v550 = vadd.f32 %v128, %v549
  %v551 = vpop.f32.mrf.mxu0
  %v552 = vadd.f32 %v128, %v551
  %553 = vmatmul.bf16.gmra.mxu0 %v244
  %v554 = vpop.f32.mrf.mxu0
  %v555 = vadd.f32 %v128, %v554
  %v556 = vpop.f32.mrf.mxu0
  %v557 = vadd.f32 %v128, %v556
  %558 = vmatmul.bf16.gmra.mxu0 %v249
  %v559 = vpop.f32.mrf.mxu0
  %v560 = vadd.f32 %v128, %v559
  %v561 = vpop.f32.mrf.mxu0
  %v562 = vadd.f32 %v128, %v561
  %563 = vmatmul.bf16.gmra.mxu0 %v254
  %v564 = vpop.f32.mrf.mxu0
  %v565 = vadd.f32 %v128, %v564
  %v566 = vpop.f32.mrf.mxu0
  %v567 = vadd.f32 %v128, %v566
  %568 = vmatmul.bf16.gmra.mxu0 %v259
  %v569 = vpop.f32.mrf.mxu0
  %v570 = vadd.f32 %v128, %v569
  %v571 = vpop.f32.mrf.mxu0
  %v572 = vadd.f32 %v128, %v571
  %573 = vmatmul.bf16.gmra.mxu0 %v264
  %v574 = vpop.f32.mrf.mxu0
  %v575 = vadd.f32 %v128, %v574
  %v576 = vpop.f32.mrf.mxu0
  %577 = vdwg.mxu0
  %578 = vmatpush.bf16.msra.mxu0 %v456
  %579 = vmatpush.bf16.msra.mxu0 %v455
  %580 = vmatpush.bf16.msra.mxu0 %v454
  %581 = vmatpush.bf16.msra.mxu0 %v453
  %582 = vmatpush.bf16.msra.mxu0 %v452
  %583 = vmatpush.bf16.msra.mxu0 %v451
  %584 = vmatpush.bf16.msra.mxu0 %v450
  %585 = vmatpush.bf16.msra.mxu0 %v449
  %586 = vmatmul.bf16.gmra.mxu0 %v235
  %v587 = vpop.f32.mrf.mxu0
  %v588 = vadd.f32 %v545, %v587
  %v589 = vpop.f32.mrf.mxu0
  %v590 = vadd.f32 %v547, %v589
  %591 = vmatmul.bf16.gmra.mxu0 %v240
  %v592 = vpop.f32.mrf.mxu0
  %v593 = vadd.f32 %v550, %v592
  %v594 = vpop.f32.mrf.mxu0
  %v595 = vadd.f32 %v552, %v594
  %596 = vmatmul.bf16.gmra.mxu0 %v245
  %v597 = vpop.f32.mrf.mxu0
  %v598 = vadd.f32 %v555, %v597
  %v599 = vpop.f32.mrf.mxu0
  %v600 = vadd.f32 %v557, %v599
  %601 = vmatmul.bf16.gmra.mxu0 %v250
  %v602 = vpop.f32.mrf.mxu0
  %v603 = vadd.f32 %v560, %v602
  %v604 = vpop.f32.mrf.mxu0
  %v605 = vadd.f32 %v562, %v604
  %606 = vmatmul.bf16.gmra.mxu0 %v255
  %v607 = vpop.f32.mrf.mxu0
  %v608 = vadd.f32 %v565, %v607
  %v609 = vpop.f32.mrf.mxu0
  %v610 = vadd.f32 %v567, %v609
  %611 = vmatmul.bf16.gmra.mxu0 %v260
  %v612 = vpop.f32.mrf.mxu0
  %v613 = vadd.f32 %v570, %v612
  %v614 = vpop.f32.mrf.mxu0
  %v615 = vadd.f32 %v572, %v614
  %616 = vmatmul.bf16.gmra.mxu0 %v265
  %v617 = vpop.f32.mrf.mxu0
  %v618 = vadd.f32 %v575, %v617
  %v619 = vpop.f32.mrf.mxu0
  %620 = vdwg.mxu0
  %621 = vmatpush.bf16.msra.mxu0 %v464
  %622 = vmatpush.bf16.msra.mxu0 %v463
  %623 = vmatpush.bf16.msra.mxu0 %v462
  %624 = vmatpush.bf16.msra.mxu0 %v461
  %625 = vmatpush.bf16.msra.mxu0 %v460
  %626 = vmatpush.bf16.msra.mxu0 %v459
  %627 = vmatpush.bf16.msra.mxu0 %v458
  %628 = vmatpush.bf16.msra.mxu0 %v457
  %629 = vmatmul.bf16.gmra.mxu0 %v236
  %v630 = vpop.f32.mrf.mxu0
  %v631 = vadd.f32 %v588, %v630
  %v632 = vpop.f32.mrf.mxu0
  %v633 = vadd.f32 %v590, %v632
  %634 = vmatmul.bf16.gmra.mxu0 %v241
  %v635 = vpop.f32.mrf.mxu0
  %v636 = vadd.f32 %v593, %v635
  %v637 = vpop.f32.mrf.mxu0
  %v638 = vadd.f32 %v595, %v637
  %639 = vmatmul.bf16.gmra.mxu0 %v246
  %v640 = vpop.f32.mrf.mxu0
  %v641 = vadd.f32 %v598, %v640
  %v642 = vpop.f32.mrf.mxu0
  %v643 = vadd.f32 %v600, %v642
  %644 = vmatmul.bf16.gmra.mxu0 %v251
  %v645 = vpop.f32.mrf.mxu0
  %v646 = vadd.f32 %v603, %v645
  %v647 = vpop.f32.mrf.mxu0
  %v648 = vadd.f32 %v605, %v647
  %649 = vmatmul.bf16.gmra.mxu0 %v256
  %v650 = vpop.f32.mrf.mxu0
  %v651 = vadd.f32 %v608, %v650
  %v652 = vpop.f32.mrf.mxu0
  %v653 = vadd.f32 %v610, %v652
  %654 = vmatmul.bf16.gmra.mxu0 %v261
  %v655 = vpop.f32.mrf.mxu0
  %v656 = vadd.f32 %v613, %v655
  %v657 = vpop.f32.mrf.mxu0
  %v658 = vadd.f32 %v615, %v657
  %659 = vmatmul.bf16.gmra.mxu0 %v266
  %v660 = vpop.f32.mrf.mxu0
  %v661 = vadd.f32 %v618, %v660
  %v662 = vpop.f32.mrf.mxu0
  %663 = vdwg.mxu0
  %664 = vmatpush.bf16.msra.mxu0 %v472
  %665 = vmatpush.bf16.msra.mxu0 %v471
  %666 = vmatpush.bf16.msra.mxu0 %v470
  %667 = vmatpush.bf16.msra.mxu0 %v469
  %668 = vmatpush.bf16.msra.mxu0 %v468
  %669 = vmatpush.bf16.msra.mxu0 %v467
  %670 = vmatpush.bf16.msra.mxu0 %v466
  %671 = vmatpush.bf16.msra.mxu0 %v465
  %672 = vmatmul.bf16.gmra.mxu0 %v237
  %v673 = vpop.f32.mrf.mxu0
  %v674 = vadd.f32 %v631, %v673
  %v675 = vpop.f32.mrf.mxu0
  %v676 = vadd.f32 %v633, %v675
  %677 = vmatmul.bf16.gmra.mxu0 %v242
  %v678 = vpop.f32.mrf.mxu0
  %v679 = vadd.f32 %v636, %v678
  %v680 = vpop.f32.mrf.mxu0
  %v681 = vadd.f32 %v638, %v680
  %682 = vmatmul.bf16.gmra.mxu0 %v247
  %v683 = vpop.f32.mrf.mxu0
  %v684 = vadd.f32 %v641, %v683
  %v685 = vpop.f32.mrf.mxu0
  %v686 = vadd.f32 %v643, %v685
  %687 = vmatmul.bf16.gmra.mxu0 %v252
  %v688 = vpop.f32.mrf.mxu0
  %v689 = vadd.f32 %v646, %v688
  %v690 = vpop.f32.mrf.mxu0
  %v691 = vadd.f32 %v648, %v690
  %692 = vmatmul.bf16.gmra.mxu0 %v257
  %v693 = vpop.f32.mrf.mxu0
  %v694 = vadd.f32 %v651, %v693
  %v695 = vpop.f32.mrf.mxu0
  %v696 = vadd.f32 %v653, %v695
  %697 = vmatmul.bf16.gmra.mxu0 %v262
  %v698 = vpop.f32.mrf.mxu0
  %v699 = vadd.f32 %v656, %v698
  %v700 = vpop.f32.mrf.mxu0
  %v701 = vadd.f32 %v658, %v700
  %702 = vmatmul.bf16.gmra.mxu0 %v267
  %v703 = vpop.f32.mrf.mxu0
  %v704 = vadd.f32 %v661, %v703
  %v705 = vpop.f32.mrf.mxu0
  %706 = vdwg.mxu0
  %707 = vmatpush.bf16.msra.mxu0 0
  %708 = vmatpush.bf16.msra.mxu0 0
  %709 = vmatpush.bf16.msra.mxu0 0
  %710 = vmatpush.bf16.msra.mxu0 0
  %711 = vmatpush.bf16.msra.mxu0 %v476
  %712 = vmatpush.bf16.msra.mxu0 %v475
  %713 = vmatpush.bf16.msra.mxu0 %v474
  %714 = vmatpush.bf16.msra.mxu0 %v473
  %715 = vmatmul.bf16.gmra.mxu0 %v515
  %v716 = vpop.f32.mrf.mxu0
  %v717 = vadd.f32 %v674, %v716
  %v718 = vpop.f32.mrf.mxu0
  %v719 = vadd.f32 %v676, %v718
  %720 = vmatmul.bf16.gmra.mxu0 %v518
  %v721 = vpop.f32.mrf.mxu0
  %v722 = vadd.f32 %v679, %v721
  %v723 = vpop.f32.mrf.mxu0
  %v724 = vadd.f32 %v681, %v723
  %725 = vmatmul.bf16.gmra.mxu0 %v521
  %v726 = vpop.f32.mrf.mxu0
  %v727 = vadd.f32 %v684, %v726
  %v728 = vpop.f32.mrf.mxu0
  %v729 = vadd.f32 %v686, %v728
  %730 = vmatmul.bf16.gmra.mxu0 %v524
  %v731 = vpop.f32.mrf.mxu0
  %v732 = vadd.f32 %v689, %v731
  %v733 = vpop.f32.mrf.mxu0
  %v734 = vadd.f32 %v691, %v733
  %735 = vmatmul.bf16.gmra.mxu0 %v527
  %v736 = vpop.f32.mrf.mxu0
  %v737 = vadd.f32 %v694, %v736
  %v738 = vpop.f32.mrf.mxu0
  %v739 = vadd.f32 %v696, %v738
  %740 = vmatmul.bf16.gmra.mxu0 %v530
  %v741 = vpop.f32.mrf.mxu0
  %v742 = vadd.f32 %v699, %v741
  %v743 = vpop.f32.mrf.mxu0
  %v744 = vadd.f32 %v701, %v743
  %745 = vmatmul.bf16.gmra.mxu0 %v533
  %v746 = vpop.f32.mrf.mxu0
  %v747 = vadd.f32 %v704, %v746
  %v748 = vpop.f32.mrf.mxu0
  %749 = vdwg.mxu0
  %v750 = vmax.f32 %v717, 0.0
  %v751 = vmax.f32 %v719, 0.0
  %v752 = vmax.f32 %v722, 0.0
  %v753 = vmax.f32 %v724, 0.0
  %v754 = vmax.f32 %v727, 0.0
  %v755 = vmax.f32 %v729, 0.0
  %v756 = vmax.f32 %v732, 0.0
  %v757 = vmax.f32 %v734, 0.0
  %v758 = vmax.f32 %v737, 0.0
  %v759 = vmax.f32 %v739, 0.0
  %v760 = vmax.f32 %v742, 0.0
  %v761 = vmax.f32 %v744, 0.0
  %v762 = vmax.f32 %v747, 0.0
  %v763 = vpack.c.bf16 %v750, %v750
  %v764 = vpack.c.bf16 %v751, %v751
  %v765 = vpack.c.bf16 %v752, %v752
  %v766 = vpack.c.bf16 %v753, %v753
  %v767 = vpack.c.bf16 %v754, %v754
  %v768 = vpack.c.bf16 %v755, %v755
  %v769 = vpack.c.bf16 %v756, %v756
  %v770 = vpack.c.bf16 %v757, %v757
  %v771 = vpack.c.bf16 %v758, %v758
  %v772 = vpack.c.bf16 %v759, %v759
  %v773 = vpack.c.bf16 %v760, %v760
  %v774 = vpack.c.bf16 %v761, %v761
  %v775 = vpack.c.bf16 %v762, %v762
  %vm776 = vcmask 257024
  %777 = vst.msk [vmem:[%s3] sm:$0xf] %vm776, %v763
  %778 = vst.msk [vmem:[%s3 + $0x4] sm:$0xf] %vm776, %v764
  %779 = vst.msk [vmem:[%s3 + $0x8] sm:$0xf] %vm776, %v765
  %780 = vst.msk [vmem:[%s3 + $0xc] sm:$0xf] %vm776, %v766
  %781 = vst.msk [vmem:[%s3 + $0x10] sm:$0xf] %vm776, %v767
  %782 = vst.msk [vmem:[%s3 + $0x14] sm:$0xf] %vm776, %v768
  %783 = vst.msk [vmem:[%s3 + $0x18] sm:$0xf] %vm776, %v769
  %784 = vst.msk [vmem:[%s3 + $0x1c] sm:$0xf] %vm776, %v770
  %785 = vst.msk [vmem:[%s3 + $0x20] sm:$0xf] %vm776, %v771
  %786 = vst.msk [vmem:[%s3 + $0x24] sm:$0xf] %vm776, %v772
  %787 = vst.msk [vmem:[%s3 + $0x28] sm:$0xf] %vm776, %v773
  %788 = vst.msk [vmem:[%s3 + $0x2c] sm:$0xf] %vm776, %v774
  %789 = vst.msk [vmem:[%s3 + $0x30] sm:$0xf] %vm776, %v775
  // Predicated region
  $region14: #{duel_qfunc_forward.6} parent=0 // pred_check
    _
  $region15: #{duel_qfunc_forward.6} parent=0 // pred_check_branch
    %791 = sbr.rel (0) target = $region17
  $region16: #{duel_qfunc_forward.6} parent=0 // pred_region
    _
  $region17: #{duel_qfunc_forward.6} parent=0 // pred_fallthru
    _
  // Predicated region
  $region18: #{duel_qfunc_forward.6} parent=0 // pred_check
    _
  $region19: #{duel_qfunc_forward.6} parent=0 // pred_check_branch
    %793 = sbr.rel (0) target = $region21
  $region20: #{duel_qfunc_forward.6} parent=0 // pred_region
    _
  $region21: #{duel_qfunc_forward.6} parent=0 // pred_fallthru
    _

// kernel: duel_qfunc_forward.7
$region0: #{duel_qfunc_forward.7}
  #allocation0 [shape = 'u32[]', space=smem, size = 0x4, offset = 0x4, fixed_abs, tag = 'smem constant byte address 0x4 - core index']
  #allocation1 [shape = 'u32[72,128]{1,0:T(1,128)}', space=vmem, size = 0x9000, scoped, tag = 'internal scratch']
  %s0 = inlined_call_operand.vmem [shape: bf16[2,1568], index: 0, kind: input, shape index: {}]
  %s1 = inlined_call_operand.vmem [shape: bf16[1568,512], index: 1, kind: input, shape index: {}]
  %s2 = inlined_call_operand.vmem [shape: f32[1,512], index: 2, kind: input, shape index: {}]
  %s3 = inlined_call_operand.vmem [shape: f32[512,4], index: 3, kind: input, shape index: {}]
  %s4 = inlined_call_operand.vmem [shape: f32[1,4], index: 4, kind: input, shape index: {}]
  %s5 = inlined_call_operand.hbm [shape: f32[2,3], index: 5, kind: output, shape index: {}]
  %s6 = sld [smem:[#allocation0]]
  $region30: #{duel_qfunc_forward.7} parent=0
    _
  %s8 = ssub.s32 1, %s6
  %s9 = scalar_select 0, %s8, %s6
  $region1: #{duel_qfunc_forward.7} parent=0
    #allocation2 [shape = 'u8[4096]{0}', space=vmem, size = 0x1000, scoped, tag = 'output window, operand 0, single buffered']
    #allocation3 [shape = 's32[1]{0}', space=sflag, size = 0x4, scoped, tag = 'scoped memory for duel_qfunc_forward.7']
    %10 = vsyncpa [#allocation3], 0
    // Predicated region
    $region2: #{duel_qfunc_forward.7} parent=1 // pred_check
      _
    $region3: #{duel_qfunc_forward.7} parent=1 // pred_check_branch
      %12 = sbr.rel (0) target = $region5
    $region4: #{duel_qfunc_forward.7} parent=1 // pred_region
      _
    $region5: #{duel_qfunc_forward.7} parent=1 // pred_fallthru
      _
    // Predicated region
    $region6: #{duel_qfunc_forward.7} parent=1 // pred_check
      _
    $region7: #{duel_qfunc_forward.7} parent=1 // pred_check_branch
      %14 = sbr.rel (0) target = $region9
    $region8: #{duel_qfunc_forward.7} parent=1 // pred_region
      _
    $region9: #{duel_qfunc_forward.7} parent=1 // pred_fallthru
      _
    // Predicated region
    $region10: #{duel_qfunc_forward.7} parent=1 // pred_check
      _
    $region11: #{duel_qfunc_forward.7} parent=1 // pred_check_branch
      %16 = sbr.rel (0) target = $region13
    $region12: #{duel_qfunc_forward.7} parent=1 // pred_region
      _
    $region13: #{duel_qfunc_forward.7} parent=1 // pred_fallthru
      _
    // Predicated region
    $region14: #{duel_qfunc_forward.7} parent=1 // pred_check
      _
    $region15: #{duel_qfunc_forward.7} parent=1 // pred_check_branch
      %18 = sbr.rel (0) target = $region17
    $region16: #{duel_qfunc_forward.7} parent=1 // pred_region
      _
    $region17: #{duel_qfunc_forward.7} parent=1 // pred_fallthru
      _
    // Predicated region
    $region18: #{duel_qfunc_forward.7} parent=1 // pred_check
      _
    $region19: #{duel_qfunc_forward.7} parent=1 // pred_check_branch
      %20 = sbr.rel (0) target = $region21
    $region20: #{duel_qfunc_forward.7} parent=1 // pred_region
      _
    $region21: #{duel_qfunc_forward.7} parent=1 // pred_fallthru
      _
    %v22 = vld [vmem:[%s0] sm:$0xff]
    %v23 = vld [vmem:[%s0 + $0x8] sm:$0x1f]
    %v24 = vld [vmem:[%s0 + $0xd] sm:$0xff]
    %v25 = vld [vmem:[%s0 + $0x15] sm:$0x1f]
    %v26 = vld [vmem:[%s0 + $0x1a] sm:$0xff]
    %v27 = vld [vmem:[%s0 + $0x22] sm:$0x1f]
    %v28 = vld [vmem:[%s0 + $0x27] sm:$0xff]
    %v29 = vld [vmem:[%s0 + $0x2f] sm:$0x1f]
    %v30 = vld [vmem:[%s1] sm:$0xff]
    %v31 = vld [vmem:[%s1 + $0x8] sm:$0xff]
    %v32 = vld [vmem:[%s1 + $0x10] sm:$0xff]
    %v33 = vld [vmem:[%s1 + $0x18] sm:$0xff]
    %v34 = vld [vmem:[%s1 + $0x20] sm:$0xff]
    %v35 = vld [vmem:[%s1 + $0x28] sm:$0xff]
    %v36 = vld [vmem:[%s1 + $0x30] sm:$0xff]
    %v37 = vld [vmem:[%s1 + $0x38] sm:$0xff]
    %v38 = vld [vmem:[%s1 + $0x40] sm:$0xff]
    %v39 = vld [vmem:[%s1 + $0x48] sm:$0xff]
    %v40 = vld [vmem:[%s1 + $0x50] sm:$0xff]
    %v41 = vld [vmem:[%s1 + $0x58] sm:$0xff]
    %v42 = vld [vmem:[%s1 + $0x60] sm:$0xff]
    %v43 = vld [vmem:[%s1 + $0x68] sm:$0xff]
    %v44 = vld [vmem:[%s1 + $0x70] sm:$0xff]
    %v45 = vld [vmem:[%s1 + $0x78] sm:$0xff]
    %v46 = vld [vmem:[%s1 + $0x80] sm:$0xff]
    %v47 = vld [vmem:[%s1 + $0x88] sm:$0xff]
    %v48 = vld [vmem:[%s1 + $0x90] sm:$0xff]
    %v49 = vld [vmem:[%s1 + $0x98] sm:$0xff]
    %v50 = vld [vmem:[%s1 + $0xa0] sm:$0xff]
    %v51 = vld [vmem:[%s1 + $0xa8] sm:$0xff]
    %v52 = vld [vmem:[%s1 + $0xb0] sm:$0xff]
    %v53 = vld [vmem:[%s1 + $0xb8] sm:$0xff]
    %v54 = vld [vmem:[%s1 + $0xc0] sm:$0xff]
    %v55 = vld [vmem:[%s1 + $0xc8] sm:$0xff]
    %v56 = vld [vmem:[%s1 + $0xd0] sm:$0xff]
    %v57 = vld [vmem:[%s1 + $0xd8] sm:$0xff]
    %v58 = vld [vmem:[%s1 + $0xe0] sm:$0xff]
    %v59 = vld [vmem:[%s1 + $0xe8] sm:$0xff]
    %v60 = vld [vmem:[%s1 + $0xf0] sm:$0xff]
    %v61 = vld [vmem:[%s1 + $0xf8] sm:$0xff]
    %v62 = vld [vmem:[%s1 + $0x100] sm:$0xff]
    %v63 = vld [vmem:[%s1 + $0x108] sm:$0xff]
    %v64 = vld [vmem:[%s1 + $0x110] sm:$0xff]
    %v65 = vld [vmem:[%s1 + $0x118] sm:$0xff]
    %v66 = vld [vmem:[%s1 + $0x120] sm:$0xff]
    %v67 = vld [vmem:[%s1 + $0x128] sm:$0xff]
    %v68 = vld [vmem:[%s1 + $0x130] sm:$0xff]
    %v69 = vld [vmem:[%s1 + $0x138] sm:$0xff]
    %v70 = vld [vmem:[%s1 + $0x140] sm:$0xff]
    %v71 = vld [vmem:[%s1 + $0x148] sm:$0xff]
    %v72 = vld [vmem:[%s1 + $0x150] sm:$0xff]
    %v73 = vld [vmem:[%s1 + $0x158] sm:$0xff]
    %v74 = vld [vmem:[%s1 + $0x160] sm:$0xff]
    %v75 = vld [vmem:[%s1 + $0x168] sm:$0xff]
    %v76 = vld [vmem:[%s1 + $0x170] sm:$0xff]
    %v77 = vld [vmem:[%s1 + $0x178] sm:$0xff]
    %v78 = vld [vmem:[%s1 + $0x180] sm:$0xff]
    %v79 = vld [vmem:[%s1 + $0x188] sm:$0xff]
    %v80 = vld [vmem:[%s1 + $0x190] sm:$0xff]
    %v81 = vld [vmem:[%s1 + $0x198] sm:$0xff]
    %v82 = vld [vmem:[%s1 + $0x1a0] sm:$0xff]
    %v83 = vld [vmem:[%s1 + $0x1a8] sm:$0xff]
    %v84 = vld [vmem:[%s1 + $0x1b0] sm:$0xff]
    %v85 = vld [vmem:[%s1 + $0x1b8] sm:$0xff]
    %v86 = vld [vmem:[%s1 + $0x1c0] sm:$0xff]
    %v87 = vld [vmem:[%s1 + $0x1c8] sm:$0xff]
    %v88 = vld [vmem:[%s1 + $0x1d0] sm:$0xff]
    %v89 = vld [vmem:[%s1 + $0x1d8] sm:$0xff]
    %v90 = vld [vmem:[%s1 + $0x1e0] sm:$0xff]
    %v91 = vld [vmem:[%s1 + $0x1e8] sm:$0xff]
    %v92 = vld [vmem:[%s1 + $0x1f0] sm:$0xff]
    %v93 = vld [vmem:[%s1 + $0x1f8] sm:$0xff]
    %v94 = vld [vmem:[%s1 + $0x200] sm:$0xff]
    %v95 = vld [vmem:[%s1 + $0x208] sm:$0xff]
    %v96 = vld [vmem:[%s1 + $0x210] sm:$0xff]
    %v97 = vld [vmem:[%s1 + $0x218] sm:$0xff]
    %v98 = vld [vmem:[%s1 + $0x220] sm:$0xff]
    %v99 = vld [vmem:[%s1 + $0x228] sm:$0xff]
    %v100 = vld [vmem:[%s1 + $0x230] sm:$0xff]
    %v101 = vld [vmem:[%s1 + $0x238] sm:$0xff]
    %v102 = vld [vmem:[%s1 + $0x240] sm:$0xff]
    %v103 = vld [vmem:[%s1 + $0x248] sm:$0xff]
    %v104 = vld [vmem:[%s1 + $0x250] sm:$0xff]
    %v105 = vld [vmem:[%s1 + $0x258] sm:$0xff]
    %v106 = vld [vmem:[%s1 + $0x260] sm:$0xff]
    %v107 = vld [vmem:[%s1 + $0x268] sm:$0xff]
    %v108 = vld [vmem:[%s1 + $0x270] sm:$0xff]
    %v109 = vld [vmem:[%s1 + $0x278] sm:$0xff]
    %v110 = vld [vmem:[%s1 + $0x280] sm:$0xff]
    %v111 = vld [vmem:[%s1 + $0x288] sm:$0xff]
    %v112 = vld [vmem:[%s1 + $0x290] sm:$0xff]
    %v113 = vld [vmem:[%s1 + $0x298] sm:$0xff]
    %v114 = vld [vmem:[%s1 + $0x2a0] sm:$0xff]
    %v115 = vld [vmem:[%s1 + $0x2a8] sm:$0xff]
    %v116 = vld [vmem:[%s1 + $0x2b0] sm:$0xff]
    %v117 = vld [vmem:[%s1 + $0x2b8] sm:$0xff]
    %v118 = vld [vmem:[%s1 + $0x2c0] sm:$0xff]
    %v119 = vld [vmem:[%s1 + $0x2c8] sm:$0xff]
    %v120 = vld [vmem:[%s1 + $0x2d0] sm:$0xff]
    %v121 = vld [vmem:[%s1 + $0x2d8] sm:$0xff]
    %v122 = vld [vmem:[%s1 + $0x2e0] sm:$0xff]
    %v123 = vld [vmem:[%s1 + $0x2e8] sm:$0xff]
    %v124 = vld [vmem:[%s1 + $0x2f0] sm:$0xff]
    %v125 = vld [vmem:[%s1 + $0x2f8] sm:$0xff]
    %v126 = vld [vmem:[%s1 + $0x300] sm:$0xff]
    %v127 = vld [vmem:[%s1 + $0x308] sm:$0xff]
    %v128 = vld [vmem:[%s1 + $0x310] sm:$0xff]
    %v129 = vld [vmem:[%s1 + $0x318] sm:$0xff]
    %v130 = vld [vmem:[%s1 + $0x320] sm:$0xff]
    %v131 = vld [vmem:[%s1 + $0x328] sm:$0xff]
    %v132 = vld [vmem:[%s1 + $0x330] sm:$0xff]
    %v133 = vld [vmem:[%s1 + $0x338] sm:$0xff]
    %v134 = vld [vmem:[%s1 + $0x340] sm:$0xff]
    %v135 = vld [vmem:[%s1 + $0x348] sm:$0xff]
    %v136 = vld [vmem:[%s1 + $0x350] sm:$0xff]
    %v137 = vld [vmem:[%s1 + $0x358] sm:$0xff]
    %v138 = vld [vmem:[%s1 + $0x360] sm:$0xff]
    %v139 = vld [vmem:[%s1 + $0x368] sm:$0xff]
    %v140 = vld [vmem:[%s1 + $0x370] sm:$0xff]
    %v141 = vld [vmem:[%s1 + $0x378] sm:$0xff]
    %v142 = vld [vmem:[%s1 + $0x380] sm:$0xff]
    %v143 = vld [vmem:[%s1 + $0x388] sm:$0xff]
    %v144 = vld [vmem:[%s1 + $0x390] sm:$0xff]
    %v145 = vld [vmem:[%s1 + $0x398] sm:$0xff]
    %v146 = vld [vmem:[%s1 + $0x3a0] sm:$0xff]
    %v147 = vld [vmem:[%s1 + $0x3a8] sm:$0xff]
    %v148 = vld [vmem:[%s1 + $0x3b0] sm:$0xff]
    %v149 = vld [vmem:[%s1 + $0x3b8] sm:$0xff]
    %v150 = vld [vmem:[%s1 + $0x3c0] sm:$0xff]
    %v151 = vld [vmem:[%s1 + $0x3c8] sm:$0xff]
    %v152 = vld [vmem:[%s1 + $0x3d0] sm:$0xff]
    %v153 = vld [vmem:[%s1 + $0x3d8] sm:$0xff]
    %v154 = vld [vmem:[%s1 + $0x3e0] sm:$0xff]
    %v155 = vld [vmem:[%s1 + $0x3e8] sm:$0xff]
    %v156 = vld [vmem:[%s1 + $0x3f0] sm:$0xff]
    %v157 = vld [vmem:[%s1 + $0x3f8] sm:$0xff]
    %v158 = vld [vmem:[%s1 + $0x400] sm:$0xff]
    %v159 = vld [vmem:[%s1 + $0x408] sm:$0xff]
    %v160 = vld [vmem:[%s1 + $0x410] sm:$0xff]
    %v161 = vld [vmem:[%s1 + $0x418] sm:$0xff]
    %v162 = vld [vmem:[%s1 + $0x420] sm:$0xff]
    %v163 = vld [vmem:[%s1 + $0x428] sm:$0xff]
    %v164 = vld [vmem:[%s1 + $0x430] sm:$0xff]
    %v165 = vld [vmem:[%s1 + $0x438] sm:$0xff]
    %v166 = vld [vmem:[%s1 + $0x440] sm:$0xff]
    %v167 = vld [vmem:[%s1 + $0x448] sm:$0xff]
    %v168 = vld [vmem:[%s1 + $0x450] sm:$0xff]
    %v169 = vld [vmem:[%s1 + $0x458] sm:$0xff]
    %v170 = vld [vmem:[%s1 + $0x460] sm:$0xff]
    %v171 = vld [vmem:[%s1 + $0x468] sm:$0xff]
    %v172 = vld [vmem:[%s1 + $0x470] sm:$0xff]
    %v173 = vld [vmem:[%s1 + $0x478] sm:$0xff]
    %v174 = vld [vmem:[%s1 + $0x480] sm:$0xff]
    %v175 = vld [vmem:[%s1 + $0x488] sm:$0xff]
    %v176 = vld [vmem:[%s1 + $0x490] sm:$0xff]
    %v177 = vld [vmem:[%s1 + $0x498] sm:$0xff]
    %v178 = vld [vmem:[%s1 + $0x4a0] sm:$0xff]
    %v179 = vld [vmem:[%s1 + $0x4a8] sm:$0xff]
    %v180 = vld [vmem:[%s1 + $0x4b0] sm:$0xff]
    %v181 = vld [vmem:[%s1 + $0x4b8] sm:$0xff]
    %v182 = vld [vmem:[%s1 + $0x4c0] sm:$0xff]
    %v183 = vld [vmem:[%s1 + $0x4c8] sm:$0xff]
    %v184 = vld [vmem:[%s1 + $0x4d0] sm:$0xff]
    %v185 = vld [vmem:[%s1 + $0x4d8] sm:$0xff]
    %v186 = vld [vmem:[%s1 + $0x4e0] sm:$0xff]
    %v187 = vld [vmem:[%s1 + $0x4e8] sm:$0xff]
    %v188 = vld [vmem:[%s1 + $0x4f0] sm:$0xff]
    %v189 = vld [vmem:[%s1 + $0x4f8] sm:$0xff]
    %v190 = vld [vmem:[%s1 + $0x500] sm:$0xff]
    %v191 = vld [vmem:[%s1 + $0x508] sm:$0xff]
    %v192 = vld [vmem:[%s1 + $0x510] sm:$0xff]
    %v193 = vld [vmem:[%s1 + $0x518] sm:$0xff]
    %v194 = vld [vmem:[%s1 + $0x520] sm:$0xff]
    %v195 = vld [vmem:[%s1 + $0x528] sm:$0xff]
    %v196 = vld [vmem:[%s1 + $0x530] sm:$0xff]
    %v197 = vld [vmem:[%s1 + $0x538] sm:$0xff]
    %v198 = vld [vmem:[%s1 + $0x540] sm:$0xff]
    %v199 = vld [vmem:[%s1 + $0x548] sm:$0xff]
    %v200 = vld [vmem:[%s1 + $0x550] sm:$0xff]
    %v201 = vld [vmem:[%s1 + $0x558] sm:$0xff]
    %v202 = vld [vmem:[%s1 + $0x560] sm:$0xff]
    %v203 = vld [vmem:[%s1 + $0x568] sm:$0xff]
    %v204 = vld [vmem:[%s1 + $0x570] sm:$0xff]
    %v205 = vld [vmem:[%s1 + $0x578] sm:$0xff]
    %v206 = vld [vmem:[%s1 + $0x580] sm:$0xff]
    %v207 = vld [vmem:[%s1 + $0x588] sm:$0xff]
    %v208 = vld [vmem:[%s1 + $0x590] sm:$0xff]
    %v209 = vld [vmem:[%s1 + $0x598] sm:$0xff]
    %v210 = vld [vmem:[%s1 + $0x5a0] sm:$0xff]
    %v211 = vld [vmem:[%s1 + $0x5a8] sm:$0xff]
    %v212 = vld [vmem:[%s1 + $0x5b0] sm:$0xff]
    %v213 = vld [vmem:[%s1 + $0x5b8] sm:$0xff]
    %v214 = vld [vmem:[%s1 + $0x5c0] sm:$0xff]
    %v215 = vld [vmem:[%s1 + $0x5c8] sm:$0xff]
    %v216 = vld [vmem:[%s1 + $0x5d0] sm:$0xff]
    %v217 = vld [vmem:[%s1 + $0x5d8] sm:$0xff]
    %v218 = vld [vmem:[%s1 + $0x5e0] sm:$0xff]
    %v219 = vld [vmem:[%s1 + $0x5e8] sm:$0xff]
    %v220 = vld [vmem:[%s1 + $0x5f0] sm:$0xff]
    %v221 = vld [vmem:[%s1 + $0x5f8] sm:$0xff]
    %v222 = vld [vmem:[%s1 + $0x600] sm:$0xff]
    %v223 = vld [vmem:[%s1 + $0x608] sm:$0xff]
    %v224 = vld [vmem:[%s1 + $0x610] sm:$0xff]
    %v225 = vld [vmem:[%s1 + $0x618] sm:$0xff]
    %v226 = vld [vmem:[%s1 + $0x620] sm:$0xff]
    %v227 = vld [vmem:[%s1 + $0x628] sm:$0xff]
    %v228 = vld [vmem:[%s1 + $0x630] sm:$0xff]
    %v229 = vld [vmem:[%s1 + $0x638] sm:$0xff]
    %v230 = vld [vmem:[%s1 + $0x640] sm:$0xff]
    %v231 = vld [vmem:[%s1 + $0x648] sm:$0xff]
    %v232 = vld [vmem:[%s1 + $0x650] sm:$0xff]
    %v233 = vld [vmem:[%s1 + $0x658] sm:$0xff]
    %v234 = vld [vmem:[%s1 + $0x660] sm:$0xff]
    %v235 = vld [vmem:[%s1 + $0x668] sm:$0xff]
    %v236 = vld [vmem:[%s1 + $0x670] sm:$0xff]
    %v237 = vld [vmem:[%s1 + $0x678] sm:$0xff]
    %v238 = vld [vmem:[%s1 + $0x680] sm:$0xff]
    %v239 = vld [vmem:[%s1 + $0x688] sm:$0xff]
    %v240 = vld [vmem:[%s1 + $0x690] sm:$0xff]
    %v241 = vld [vmem:[%s1 + $0x698] sm:$0xff]
    %v242 = vld [vmem:[%s1 + $0x6a0] sm:$0xff]
    %v243 = vld [vmem:[%s1 + $0x6a8] sm:$0xff]
    %v244 = vld [vmem:[%s1 + $0x6b0] sm:$0xff]
    %v245 = vld [vmem:[%s1 + $0x6b8] sm:$0xff]
    %v246 = vld [vmem:[%s1 + $0x6c0] sm:$0xff]
    %v247 = vld [vmem:[%s1 + $0x6c8] sm:$0xff]
    %v248 = vld [vmem:[%s1 + $0x6d0] sm:$0xff]
    %v249 = vld [vmem:[%s1 + $0x6d8] sm:$0xff]
    %v250 = vld [vmem:[%s1 + $0x6e0] sm:$0xff]
    %v251 = vld [vmem:[%s1 + $0x6e8] sm:$0xff]
    %v252 = vld [vmem:[%s1 + $0x6f0] sm:$0xff]
    %v253 = vld [vmem:[%s1 + $0x6f8] sm:$0xff]
    %v254 = vld [vmem:[%s1 + $0x700] sm:$0xff]
    %v255 = vld [vmem:[%s1 + $0x708] sm:$0xff]
    %v256 = vld [vmem:[%s1 + $0x710] sm:$0xff]
    %v257 = vld [vmem:[%s1 + $0x718] sm:$0xff]
    %v258 = vld [vmem:[%s1 + $0x720] sm:$0xff]
    %v259 = vld [vmem:[%s1 + $0x728] sm:$0xff]
    %v260 = vld [vmem:[%s1 + $0x730] sm:$0xff]
    %v261 = vld [vmem:[%s1 + $0x738] sm:$0xff]
    %v262 = vld [vmem:[%s1 + $0x740] sm:$0xff]
    %v263 = vld [vmem:[%s1 + $0x748] sm:$0xff]
    %v264 = vld [vmem:[%s1 + $0x750] sm:$0xff]
    %v265 = vld [vmem:[%s1 + $0x758] sm:$0xff]
    %v266 = vld [vmem:[%s1 + $0x760] sm:$0xff]
    %v267 = vld [vmem:[%s1 + $0x768] sm:$0xff]
    %v268 = vld [vmem:[%s1 + $0x770] sm:$0xff]
    %v269 = vld [vmem:[%s1 + $0x778] sm:$0xff]
    %v270 = vld [vmem:[%s1 + $0x780] sm:$0xff]
    %v271 = vld [vmem:[%s1 + $0x788] sm:$0xff]
    %v272 = vld [vmem:[%s1 + $0x790] sm:$0xff]
    %v273 = vld [vmem:[%s1 + $0x798] sm:$0xff]
    %v274 = vld [vmem:[%s1 + $0x7a0] sm:$0xff]
    %v275 = vld [vmem:[%s1 + $0x7a8] sm:$0xff]
    %v276 = vld [vmem:[%s1 + $0x7b0] sm:$0xff]
    %v277 = vld [vmem:[%s1 + $0x7b8] sm:$0xff]
    %v278 = vld [vmem:[%s1 + $0x7c0] sm:$0xff]
    %v279 = vld [vmem:[%s1 + $0x7c8] sm:$0xff]
    %v280 = vld [vmem:[%s1 + $0x7d0] sm:$0xff]
    %v281 = vld [vmem:[%s1 + $0x7d8] sm:$0xff]
    %v282 = vld [vmem:[%s1 + $0x7e0] sm:$0xff]
    %v283 = vld [vmem:[%s1 + $0x7e8] sm:$0xff]
    %v284 = vld [vmem:[%s1 + $0x7f0] sm:$0xff]
    %v285 = vld [vmem:[%s1 + $0x7f8] sm:$0xff]
    %v286 = vld [vmem:[%s1 + $0x800] sm:$0xff]
    %v287 = vld [vmem:[%s1 + $0x808] sm:$0xff]
    %v288 = vld [vmem:[%s1 + $0x810] sm:$0xff]
    %v289 = vld [vmem:[%s1 + $0x818] sm:$0xff]
    %v290 = vld [vmem:[%s1 + $0x820] sm:$0xff]
    %v291 = vld [vmem:[%s1 + $0x828] sm:$0xff]
    %v292 = vld [vmem:[%s1 + $0x830] sm:$0xff]
    %v293 = vld [vmem:[%s1 + $0x838] sm:$0xff]
    %v294 = vld [vmem:[%s1 + $0x840] sm:$0xff]
    %v295 = vld [vmem:[%s1 + $0x848] sm:$0xff]
    %v296 = vld [vmem:[%s1 + $0x850] sm:$0xff]
    %v297 = vld [vmem:[%s1 + $0x858] sm:$0xff]
    %v298 = vld [vmem:[%s1 + $0x860] sm:$0xff]
    %v299 = vld [vmem:[%s1 + $0x868] sm:$0xff]
    %v300 = vld [vmem:[%s1 + $0x870] sm:$0xff]
    %v301 = vld [vmem:[%s1 + $0x878] sm:$0xff]
    %v302 = vld [vmem:[%s1 + $0x880] sm:$0xff]
    %v303 = vld [vmem:[%s1 + $0x888] sm:$0xff]
    %v304 = vld [vmem:[%s1 + $0x890] sm:$0xff]
    %v305 = vld [vmem:[%s1 + $0x898] sm:$0xff]
    %v306 = vld [vmem:[%s1 + $0x8a0] sm:$0xff]
    %v307 = vld [vmem:[%s1 + $0x8a8] sm:$0xff]
    %v308 = vld [vmem:[%s1 + $0x8b0] sm:$0xff]
    %v309 = vld [vmem:[%s1 + $0x8b8] sm:$0xff]
    %v310 = vld [vmem:[%s1 + $0x8c0] sm:$0xff]
    %v311 = vld [vmem:[%s1 + $0x8c8] sm:$0xff]
    %v312 = vld [vmem:[%s1 + $0x8d0] sm:$0xff]
    %v313 = vld [vmem:[%s1 + $0x8d8] sm:$0xff]
    %v314 = vld [vmem:[%s1 + $0x8e0] sm:$0xff]
    %v315 = vld [vmem:[%s1 + $0x8e8] sm:$0xff]
    %v316 = vld [vmem:[%s1 + $0x8f0] sm:$0xff]
    %v317 = vld [vmem:[%s1 + $0x8f8] sm:$0xff]
    %v318 = vld [vmem:[%s1 + $0x900] sm:$0xff]
    %v319 = vld [vmem:[%s1 + $0x908] sm:$0xff]
    %v320 = vld [vmem:[%s1 + $0x910] sm:$0xff]
    %v321 = vld [vmem:[%s1 + $0x918] sm:$0xff]
    %v322 = vld [vmem:[%s1 + $0x920] sm:$0xff]
    %v323 = vld [vmem:[%s1 + $0x928] sm:$0xff]
    %v324 = vld [vmem:[%s1 + $0x930] sm:$0xff]
    %v325 = vld [vmem:[%s1 + $0x938] sm:$0xff]
    %v326 = vld [vmem:[%s1 + $0x940] sm:$0xff]
    %v327 = vld [vmem:[%s1 + $0x948] sm:$0xff]
    %v328 = vld [vmem:[%s1 + $0x950] sm:$0xff]
    %v329 = vld [vmem:[%s1 + $0x958] sm:$0xff]
    %v330 = vld [vmem:[%s1 + $0x960] sm:$0xff]
    %v331 = vld [vmem:[%s1 + $0x968] sm:$0xff]
    %v332 = vld [vmem:[%s1 + $0x970] sm:$0xff]
    %v333 = vld [vmem:[%s1 + $0x978] sm:$0xff]
    %v334 = vld [vmem:[%s1 + $0x980] sm:$0xff]
    %v335 = vld [vmem:[%s1 + $0x988] sm:$0xff]
    %v336 = vld [vmem:[%s1 + $0x990] sm:$0xff]
    %v337 = vld [vmem:[%s1 + $0x998] sm:$0xff]
    %v338 = vld [vmem:[%s1 + $0x9a0] sm:$0xff]
    %v339 = vld [vmem:[%s1 + $0x9a8] sm:$0xff]
    %v340 = vld [vmem:[%s1 + $0x9b0] sm:$0xff]
    %v341 = vld [vmem:[%s1 + $0x9b8] sm:$0xff]
    %v342 = vld [vmem:[%s1 + $0x9c0] sm:$0xff]
    %v343 = vld [vmem:[%s1 + $0x9c8] sm:$0xff]
    %v344 = vld [vmem:[%s1 + $0x9d0] sm:$0xff]
    %v345 = vld [vmem:[%s1 + $0x9d8] sm:$0xff]
    %v346 = vld [vmem:[%s1 + $0x9e0] sm:$0xff]
    %v347 = vld [vmem:[%s1 + $0x9e8] sm:$0xff]
    %v348 = vld [vmem:[%s1 + $0x9f0] sm:$0xff]
    %v349 = vld [vmem:[%s1 + $0x9f8] sm:$0xff]
    %v350 = vld [vmem:[%s1 + $0xa00] sm:$0xff]
    %v351 = vld [vmem:[%s1 + $0xa08] sm:$0xff]
    %v352 = vld [vmem:[%s1 + $0xa10] sm:$0xff]
    %v353 = vld [vmem:[%s1 + $0xa18] sm:$0xff]
    %v354 = vld [vmem:[%s1 + $0xa20] sm:$0xff]
    %v355 = vld [vmem:[%s1 + $0xa28] sm:$0xff]
    %v356 = vld [vmem:[%s1 + $0xa30] sm:$0xff]
    %v357 = vld [vmem:[%s1 + $0xa38] sm:$0xff]
    %v358 = vld [vmem:[%s1 + $0xa40] sm:$0xff]
    %v359 = vld [vmem:[%s1 + $0xa48] sm:$0xff]
    %v360 = vld [vmem:[%s1 + $0xa50] sm:$0xff]
    %v361 = vld [vmem:[%s1 + $0xa58] sm:$0xff]
    %v362 = vld [vmem:[%s1 + $0xa60] sm:$0xff]
    %v363 = vld [vmem:[%s1 + $0xa68] sm:$0xff]
    %v364 = vld [vmem:[%s1 + $0xa70] sm:$0xff]
    %v365 = vld [vmem:[%s1 + $0xa78] sm:$0xff]
    %v366 = vld [vmem:[%s1 + $0xa80] sm:$0xff]
    %v367 = vld [vmem:[%s1 + $0xa88] sm:$0xff]
    %v368 = vld [vmem:[%s1 + $0xa90] sm:$0xff]
    %v369 = vld [vmem:[%s1 + $0xa98] sm:$0xff]
    %v370 = vld [vmem:[%s1 + $0xaa0] sm:$0xff]
    %v371 = vld [vmem:[%s1 + $0xaa8] sm:$0xff]
    %v372 = vld [vmem:[%s1 + $0xab0] sm:$0xff]
    %v373 = vld [vmem:[%s1 + $0xab8] sm:$0xff]
    %v374 = vld [vmem:[%s1 + $0xac0] sm:$0xff]
    %v375 = vld [vmem:[%s1 + $0xac8] sm:$0xff]
    %v376 = vld [vmem:[%s1 + $0xad0] sm:$0xff]
    %v377 = vld [vmem:[%s1 + $0xad8] sm:$0xff]
    %v378 = vld [vmem:[%s1 + $0xae0] sm:$0xff]
    %v379 = vld [vmem:[%s1 + $0xae8] sm:$0xff]
    %v380 = vld [vmem:[%s1 + $0xaf0] sm:$0xff]
    %v381 = vld [vmem:[%s1 + $0xaf8] sm:$0xff]
    %v382 = vld [vmem:[%s1 + $0xb00] sm:$0xff]
    %v383 = vld [vmem:[%s1 + $0xb08] sm:$0xff]
    %v384 = vld [vmem:[%s1 + $0xb10] sm:$0xff]
    %v385 = vld [vmem:[%s1 + $0xb18] sm:$0xff]
    %v386 = vld [vmem:[%s1 + $0xb20] sm:$0xff]
    %v387 = vld [vmem:[%s1 + $0xb28] sm:$0xff]
    %v388 = vld [vmem:[%s1 + $0xb30] sm:$0xff]
    %v389 = vld [vmem:[%s1 + $0xb38] sm:$0xff]
    %v390 = vld [vmem:[%s1 + $0xb40] sm:$0xff]
    %v391 = vld [vmem:[%s1 + $0xb48] sm:$0xff]
    %v392 = vld [vmem:[%s1 + $0xb50] sm:$0xff]
    %v393 = vld [vmem:[%s1 + $0xb58] sm:$0xff]
    %v394 = vld [vmem:[%s1 + $0xb60] sm:$0xff]
    %v395 = vld [vmem:[%s1 + $0xb68] sm:$0xff]
    %v396 = vld [vmem:[%s1 + $0xb70] sm:$0xff]
    %v397 = vld [vmem:[%s1 + $0xb78] sm:$0xff]
    %v398 = vld [vmem:[%s1 + $0xb80] sm:$0xff]
    %v399 = vld [vmem:[%s1 + $0xb88] sm:$0xff]
    %v400 = vld [vmem:[%s1 + $0xb90] sm:$0xff]
    %v401 = vld [vmem:[%s1 + $0xb98] sm:$0xff]
    %v402 = vld [vmem:[%s1 + $0xba0] sm:$0xff]
    %v403 = vld [vmem:[%s1 + $0xba8] sm:$0xff]
    %v404 = vld [vmem:[%s1 + $0xbb0] sm:$0xff]
    %v405 = vld [vmem:[%s1 + $0xbb8] sm:$0xff]
    %v406 = vld [vmem:[%s1 + $0xbc0] sm:$0xff]
    %v407 = vld [vmem:[%s1 + $0xbc8] sm:$0xff]
    %v408 = vld [vmem:[%s1 + $0xbd0] sm:$0xff]
    %v409 = vld [vmem:[%s1 + $0xbd8] sm:$0xff]
    %v410 = vld [vmem:[%s1 + $0xbe0] sm:$0xff]
    %v411 = vld [vmem:[%s1 + $0xbe8] sm:$0xff]
    %v412 = vld [vmem:[%s1 + $0xbf0] sm:$0xff]
    %v413 = vld [vmem:[%s1 + $0xbf8] sm:$0xff]
    %v414 = vld [vmem:[%s1 + $0xc00] sm:$0xff]
    %v415 = vld [vmem:[%s1 + $0xc08] sm:$0xff]
    %v416 = vld [vmem:[%s1 + $0xc10] sm:$0xff]
    %v417 = vld [vmem:[%s1 + $0xc18] sm:$0xff]
    %v418 = vld [vmem:[%s1 + $0xc20] sm:$0xff]
    %v419 = vld [vmem:[%s1 + $0xc28] sm:$0xff]
    %v420 = vld [vmem:[%s1 + $0xc30] sm:$0xff]
    %v421 = vld [vmem:[%s1 + $0xc38] sm:$0xff]
    %v422 = vld [vmem:[%s2] sm:$0xf]
    %v424 = vperm.slane %v422, 0
    %v425 = vperm.slane %v422, 1
    %v426 = vperm.slane %v422, 2
    %v427 = vperm.slane %v422, 3
    %433 = vst [vmem:[#allocation1] ss:$9 sm:$0xff] %v22
    %s435 = scalar_lea.vmem [#allocation1], 1
    %436 = vst [vmem:[%s435] ss:$9 sm:$0xff] %v24
    %s438 = scalar_lea.vmem [#allocation1], 2
    %439 = vst [vmem:[%s438] ss:$9 sm:$0xff] %v26
    %s441 = scalar_lea.vmem [#allocation1], 3
    %442 = vst [vmem:[%s441] ss:$9 sm:$0xff] %v28
    %v443 = vld [vmem:[#allocation1] sm:$0xff]
    %v444 = vld [vmem:[#allocation1 + $0x9] sm:$0xff]
    %v445 = vld [vmem:[#allocation1 + $0x12] sm:$0xff]
    %v446 = vld [vmem:[#allocation1 + $0x1b] sm:$0xff]
    %v447 = vld [vmem:[#allocation1 + $0x24] sm:$0xff]
    %v448 = vld [vmem:[#allocation1 + $0x2d] sm:$0xff]
    %v449 = vld [vmem:[#allocation1 + $0x36] sm:$0xff]
    %v450 = vld [vmem:[#allocation1 + $0x3f] sm:$0xff]
    %452 = vst [vmem:[#allocation1] ss:$9 sm:$0xff] %v23
    %454 = vst [vmem:[%s435] ss:$9 sm:$0xff] %v25
    %456 = vst [vmem:[%s438] ss:$9 sm:$0xff] %v27
    %458 = vst [vmem:[%s441] ss:$9 sm:$0xff] %v29
    %v459 = vld [vmem:[#allocation1] sm:$0xff]
    %v460 = vld [vmem:[#allocation1 + $0x9] sm:$0xff]
    %v461 = vld [vmem:[#allocation1 + $0x12] sm:$0xff]
    %v462 = vld [vmem:[#allocation1 + $0x1b] sm:$0xff]
    %v463 = vld [vmem:[#allocation1 + $0x24] sm:$0xff]
    %v868 = vunpack.c.l.b16 %v30
    %v869 = vunpack.c.h.b16 %v30
    %v870 = vunpack.c.l.b16 %v31
    %v871 = vunpack.c.h.b16 %v31
    %v872 = vunpack.c.l.b16 %v32
    %v873 = vunpack.c.h.b16 %v32
    %v874 = vunpack.c.l.b16 %v33
    %v875 = vunpack.c.h.b16 %v33
    %v876 = vunpack.c.l.b16 %v34
    %v877 = vunpack.c.h.b16 %v34
    %v878 = vunpack.c.l.b16 %v35
    %v879 = vunpack.c.h.b16 %v35
    %v880 = vunpack.c.l.b16 %v36
    %v881 = vunpack.c.h.b16 %v36
    %v882 = vunpack.c.l.b16 %v37
    %v883 = vunpack.c.h.b16 %v37
    %v884 = vunpack.c.l.b16 %v38
    %v885 = vunpack.c.h.b16 %v38
    %v886 = vunpack.c.l.b16 %v39
    %v887 = vunpack.c.h.b16 %v39
    %v888 = vunpack.c.l.b16 %v40
    %v889 = vunpack.c.h.b16 %v40
    %v890 = vunpack.c.l.b16 %v41
    %v891 = vunpack.c.h.b16 %v41
    %v892 = vunpack.c.l.b16 %v42
    %v893 = vunpack.c.h.b16 %v42
    %v894 = vunpack.c.l.b16 %v43
    %v895 = vunpack.c.h.b16 %v43
    %v896 = vunpack.c.l.b16 %v44
    %v897 = vunpack.c.h.b16 %v44
    %v898 = vunpack.c.l.b16 %v45
    %v899 = vunpack.c.h.b16 %v45
    %v900 = vunpack.c.l.b16 %v46
    %v901 = vunpack.c.h.b16 %v46
    %v902 = vunpack.c.l.b16 %v47
    %v903 = vunpack.c.h.b16 %v47
    %v904 = vunpack.c.l.b16 %v48
    %v905 = vunpack.c.h.b16 %v48
    %v906 = vunpack.c.l.b16 %v49
    %v907 = vunpack.c.h.b16 %v49
    %v908 = vunpack.c.l.b16 %v50
    %v909 = vunpack.c.h.b16 %v50
    %v910 = vunpack.c.l.b16 %v51
    %v911 = vunpack.c.h.b16 %v51
    %v912 = vunpack.c.l.b16 %v52
    %v913 = vunpack.c.h.b16 %v52
    %v914 = vunpack.c.l.b16 %v53
    %v915 = vunpack.c.h.b16 %v53
    %v916 = vunpack.c.l.b16 %v54
    %v917 = vunpack.c.h.b16 %v54
    %v918 = vunpack.c.l.b16 %v55
    %v919 = vunpack.c.h.b16 %v55
    %v920 = vunpack.c.l.b16 %v56
    %v921 = vunpack.c.h.b16 %v56
    %v922 = vunpack.c.l.b16 %v57
    %v923 = vunpack.c.h.b16 %v57
    %v924 = vunpack.c.l.b16 %v58
    %v925 = vunpack.c.h.b16 %v58
    %v926 = vunpack.c.l.b16 %v59
    %v927 = vunpack.c.h.b16 %v59
    %v928 = vunpack.c.l.b16 %v60
    %v929 = vunpack.c.h.b16 %v60
    %v930 = vunpack.c.l.b16 %v61
    %v931 = vunpack.c.h.b16 %v61
    %v932 = vunpack.c.l.b16 %v62
    %v933 = vunpack.c.h.b16 %v62
    %v934 = vunpack.c.l.b16 %v63
    %v935 = vunpack.c.h.b16 %v63
    %v936 = vunpack.c.l.b16 %v64
    %v937 = vunpack.c.h.b16 %v64
    %v938 = vunpack.c.l.b16 %v65
    %v939 = vunpack.c.h.b16 %v65
    %v940 = vunpack.c.l.b16 %v66
    %v941 = vunpack.c.h.b16 %v66
    %v942 = vunpack.c.l.b16 %v67
    %v943 = vunpack.c.h.b16 %v67
    %v944 = vunpack.c.l.b16 %v68
    %v945 = vunpack.c.h.b16 %v68
    %v946 = vunpack.c.l.b16 %v69
    %v947 = vunpack.c.h.b16 %v69
    %v948 = vunpack.c.l.b16 %v70
    %v949 = vunpack.c.h.b16 %v70
    %v950 = vunpack.c.l.b16 %v71
    %v951 = vunpack.c.h.b16 %v71
    %v952 = vunpack.c.l.b16 %v72
    %v953 = vunpack.c.h.b16 %v72
    %v954 = vunpack.c.l.b16 %v73
    %v955 = vunpack.c.h.b16 %v73
    %v956 = vunpack.c.l.b16 %v74
    %v957 = vunpack.c.h.b16 %v74
    %v958 = vunpack.c.l.b16 %v75
    %v959 = vunpack.c.h.b16 %v75
    %v960 = vunpack.c.l.b16 %v76
    %v961 = vunpack.c.h.b16 %v76
    %v962 = vunpack.c.l.b16 %v77
    %v963 = vunpack.c.h.b16 %v77
    %v964 = vunpack.c.l.b16 %v78
    %v965 = vunpack.c.h.b16 %v78
    %v966 = vunpack.c.l.b16 %v79
    %v967 = vunpack.c.h.b16 %v79
    %v968 = vunpack.c.l.b16 %v80
    %v969 = vunpack.c.h.b16 %v80
    %v970 = vunpack.c.l.b16 %v81
    %v971 = vunpack.c.h.b16 %v81
    %v972 = vunpack.c.l.b16 %v82
    %v973 = vunpack.c.h.b16 %v82
    %v974 = vunpack.c.l.b16 %v83
    %v975 = vunpack.c.h.b16 %v83
    %v976 = vunpack.c.l.b16 %v84
    %v977 = vunpack.c.h.b16 %v84
    %v978 = vunpack.c.l.b16 %v85
    %v979 = vunpack.c.h.b16 %v85
    %v980 = vunpack.c.l.b16 %v86
    %v981 = vunpack.c.h.b16 %v86
    %v982 = vunpack.c.l.b16 %v87
    %v983 = vunpack.c.h.b16 %v87
    %v984 = vunpack.c.l.b16 %v88
    %v985 = vunpack.c.h.b16 %v88
    %v986 = vunpack.c.l.b16 %v89
    %v987 = vunpack.c.h.b16 %v89
    %v988 = vunpack.c.l.b16 %v90
    %v989 = vunpack.c.h.b16 %v90
    %v990 = vunpack.c.l.b16 %v91
    %v991 = vunpack.c.h.b16 %v91
    %v992 = vunpack.c.l.b16 %v92
    %v993 = vunpack.c.h.b16 %v92
    %v994 = vunpack.c.l.b16 %v93
    %v995 = vunpack.c.h.b16 %v93
    %v996 = vunpack.c.l.b16 %v94
    %v997 = vunpack.c.h.b16 %v94
    %v998 = vunpack.c.l.b16 %v95
    %v999 = vunpack.c.h.b16 %v95
    %v1000 = vunpack.c.l.b16 %v96
    %v1001 = vunpack.c.h.b16 %v96
    %v1002 = vunpack.c.l.b16 %v97
    %v1003 = vunpack.c.h.b16 %v97
    %v1004 = vunpack.c.l.b16 %v98
    %v1005 = vunpack.c.h.b16 %v98
    %v1006 = vunpack.c.l.b16 %v99
    %v1007 = vunpack.c.h.b16 %v99
    %v1008 = vunpack.c.l.b16 %v100
    %v1009 = vunpack.c.h.b16 %v100
    %v1010 = vunpack.c.l.b16 %v101
    %v1011 = vunpack.c.h.b16 %v101
    %v1012 = vunpack.c.l.b16 %v102
    %v1013 = vunpack.c.h.b16 %v102
    %v1014 = vunpack.c.l.b16 %v103
    %v1015 = vunpack.c.h.b16 %v103
    %v1016 = vunpack.c.l.b16 %v104
    %v1017 = vunpack.c.h.b16 %v104
    %v1018 = vunpack.c.l.b16 %v105
    %v1019 = vunpack.c.h.b16 %v105
    %v1020 = vunpack.c.l.b16 %v106
    %v1021 = vunpack.c.h.b16 %v106
    %v1022 = vunpack.c.l.b16 %v107
    %v1023 = vunpack.c.h.b16 %v107
    %v1024 = vunpack.c.l.b16 %v108
    %v1025 = vunpack.c.h.b16 %v108
    %v1026 = vunpack.c.l.b16 %v109
    %v1027 = vunpack.c.h.b16 %v109
    %v1028 = vunpack.c.l.b16 %v110
    %v1029 = vunpack.c.h.b16 %v110
    %v1030 = vunpack.c.l.b16 %v111
    %v1031 = vunpack.c.h.b16 %v111
    %v1032 = vunpack.c.l.b16 %v112
    %v1033 = vunpack.c.h.b16 %v112
    %v1034 = vunpack.c.l.b16 %v113
    %v1035 = vunpack.c.h.b16 %v113
    %v1036 = vunpack.c.l.b16 %v114
    %v1037 = vunpack.c.h.b16 %v114
    %v1038 = vunpack.c.l.b16 %v115
    %v1039 = vunpack.c.h.b16 %v115
    %v1040 = vunpack.c.l.b16 %v116
    %v1041 = vunpack.c.h.b16 %v116
    %v1042 = vunpack.c.l.b16 %v117
    %v1043 = vunpack.c.h.b16 %v117
    %v1044 = vunpack.c.l.b16 %v118
    %v1045 = vunpack.c.h.b16 %v118
    %v1046 = vunpack.c.l.b16 %v119
    %v1047 = vunpack.c.h.b16 %v119
    %v1048 = vunpack.c.l.b16 %v120
    %v1049 = vunpack.c.h.b16 %v120
    %v1050 = vunpack.c.l.b16 %v121
    %v1051 = vunpack.c.h.b16 %v121
    %v1052 = vunpack.c.l.b16 %v122
    %v1053 = vunpack.c.h.b16 %v122
    %v1054 = vunpack.c.l.b16 %v123
    %v1055 = vunpack.c.h.b16 %v123
    %v1056 = vunpack.c.l.b16 %v124
    %v1057 = vunpack.c.h.b16 %v124
    %v1058 = vunpack.c.l.b16 %v125
    %v1059 = vunpack.c.h.b16 %v125
    %v1060 = vunpack.c.l.b16 %v126
    %v1061 = vunpack.c.h.b16 %v126
    %v1062 = vunpack.c.l.b16 %v127
    %v1063 = vunpack.c.h.b16 %v127
    %v1064 = vunpack.c.l.b16 %v128
    %v1065 = vunpack.c.h.b16 %v128
    %v1066 = vunpack.c.l.b16 %v129
    %v1067 = vunpack.c.h.b16 %v129
    %v1068 = vunpack.c.l.b16 %v130
    %v1069 = vunpack.c.h.b16 %v130
    %v1070 = vunpack.c.l.b16 %v131
    %v1071 = vunpack.c.h.b16 %v131
    %v1072 = vunpack.c.l.b16 %v132
    %v1073 = vunpack.c.h.b16 %v132
    %v1074 = vunpack.c.l.b16 %v133
    %v1075 = vunpack.c.h.b16 %v133
    %v1076 = vunpack.c.l.b16 %v134
    %v1077 = vunpack.c.h.b16 %v134
    %v1078 = vunpack.c.l.b16 %v135
    %v1079 = vunpack.c.h.b16 %v135
    %v1080 = vunpack.c.l.b16 %v136
    %v1081 = vunpack.c.h.b16 %v136
    %v1082 = vunpack.c.l.b16 %v137
    %v1083 = vunpack.c.h.b16 %v137
    %v1084 = vunpack.c.l.b16 %v138
    %v1085 = vunpack.c.h.b16 %v138
    %v1086 = vunpack.c.l.b16 %v139
    %v1087 = vunpack.c.h.b16 %v139
    %v1088 = vunpack.c.l.b16 %v140
    %v1089 = vunpack.c.h.b16 %v140
    %v1090 = vunpack.c.l.b16 %v141
    %v1091 = vunpack.c.h.b16 %v141
    %v1092 = vunpack.c.l.b16 %v142
    %v1093 = vunpack.c.h.b16 %v142
    %v1094 = vunpack.c.l.b16 %v143
    %v1095 = vunpack.c.h.b16 %v143
    %v1096 = vunpack.c.l.b16 %v144
    %v1097 = vunpack.c.h.b16 %v144
    %v1098 = vunpack.c.l.b16 %v145
    %v1099 = vunpack.c.h.b16 %v145
    %v1100 = vunpack.c.l.b16 %v146
    %v1101 = vunpack.c.h.b16 %v146
    %v1102 = vunpack.c.l.b16 %v147
    %v1103 = vunpack.c.h.b16 %v147
    %v1104 = vunpack.c.l.b16 %v148
    %v1105 = vunpack.c.h.b16 %v148
    %v1106 = vunpack.c.l.b16 %v149
    %v1107 = vunpack.c.h.b16 %v149
    %v1108 = vunpack.c.l.b16 %v150
    %v1109 = vunpack.c.h.b16 %v150
    %v1110 = vunpack.c.l.b16 %v151
    %v1111 = vunpack.c.h.b16 %v151
    %v1112 = vunpack.c.l.b16 %v152
    %v1113 = vunpack.c.h.b16 %v152
    %v1114 = vunpack.c.l.b16 %v153
    %v1115 = vunpack.c.h.b16 %v153
    %v1116 = vunpack.c.l.b16 %v154
    %v1117 = vunpack.c.h.b16 %v154
    %v1118 = vunpack.c.l.b16 %v155
    %v1119 = vunpack.c.h.b16 %v155
    %v1120 = vunpack.c.l.b16 %v156
    %v1121 = vunpack.c.h.b16 %v156
    %v1122 = vunpack.c.l.b16 %v157
    %v1123 = vunpack.c.h.b16 %v157
    %v1124 = vunpack.c.l.b16 %v158
    %v1125 = vunpack.c.h.b16 %v158
    %v1126 = vunpack.c.l.b16 %v159
    %v1127 = vunpack.c.h.b16 %v159
    %v1128 = vunpack.c.l.b16 %v160
    %v1129 = vunpack.c.h.b16 %v160
    %v1130 = vunpack.c.l.b16 %v161
    %v1131 = vunpack.c.h.b16 %v161
    %v1132 = vunpack.c.l.b16 %v162
    %v1133 = vunpack.c.h.b16 %v162
    %v1134 = vunpack.c.l.b16 %v163
    %v1135 = vunpack.c.h.b16 %v163
    %v1136 = vunpack.c.l.b16 %v164
    %v1137 = vunpack.c.h.b16 %v164
    %v1138 = vunpack.c.l.b16 %v165
    %v1139 = vunpack.c.h.b16 %v165
    %v1140 = vunpack.c.l.b16 %v166
    %v1141 = vunpack.c.h.b16 %v166
    %v1142 = vunpack.c.l.b16 %v167
    %v1143 = vunpack.c.h.b16 %v167
    %v1144 = vunpack.c.l.b16 %v168
    %v1145 = vunpack.c.h.b16 %v168
    %v1146 = vunpack.c.l.b16 %v169
    %v1147 = vunpack.c.h.b16 %v169
    %v1148 = vunpack.c.l.b16 %v170
    %v1149 = vunpack.c.h.b16 %v170
    %v1150 = vunpack.c.l.b16 %v171
    %v1151 = vunpack.c.h.b16 %v171
    %v1152 = vunpack.c.l.b16 %v172
    %v1153 = vunpack.c.h.b16 %v172
    %v1154 = vunpack.c.l.b16 %v173
    %v1155 = vunpack.c.h.b16 %v173
    %v1156 = vunpack.c.l.b16 %v174
    %v1157 = vunpack.c.h.b16 %v174
    %v1158 = vunpack.c.l.b16 %v175
    %v1159 = vunpack.c.h.b16 %v175
    %v1160 = vunpack.c.l.b16 %v176
    %v1161 = vunpack.c.h.b16 %v176
    %v1162 = vunpack.c.l.b16 %v177
    %v1163 = vunpack.c.h.b16 %v177
    %v1164 = vunpack.c.l.b16 %v178
    %v1165 = vunpack.c.h.b16 %v178
    %v1166 = vunpack.c.l.b16 %v179
    %v1167 = vunpack.c.h.b16 %v179
    %v1168 = vunpack.c.l.b16 %v180
    %v1169 = vunpack.c.h.b16 %v180
    %v1170 = vunpack.c.l.b16 %v181
    %v1171 = vunpack.c.h.b16 %v181
    %v1172 = vunpack.c.l.b16 %v182
    %v1173 = vunpack.c.h.b16 %v182
    %v1174 = vunpack.c.l.b16 %v183
    %v1175 = vunpack.c.h.b16 %v183
    %v1176 = vunpack.c.l.b16 %v184
    %v1177 = vunpack.c.h.b16 %v184
    %v1178 = vunpack.c.l.b16 %v185
    %v1179 = vunpack.c.h.b16 %v185
    %v1180 = vunpack.c.l.b16 %v186
    %v1181 = vunpack.c.h.b16 %v186
    %v1182 = vunpack.c.l.b16 %v187
    %v1183 = vunpack.c.h.b16 %v187
    %v1184 = vunpack.c.l.b16 %v188
    %v1185 = vunpack.c.h.b16 %v188
    %v1186 = vunpack.c.l.b16 %v189
    %v1187 = vunpack.c.h.b16 %v189
    %v1188 = vunpack.c.l.b16 %v190
    %v1189 = vunpack.c.h.b16 %v190
    %v1190 = vunpack.c.l.b16 %v191
    %v1191 = vunpack.c.h.b16 %v191
    %v1192 = vunpack.c.l.b16 %v192
    %v1193 = vunpack.c.h.b16 %v192
    %v1194 = vunpack.c.l.b16 %v193
    %v1195 = vunpack.c.h.b16 %v193
    %v1196 = vunpack.c.l.b16 %v194
    %v1197 = vunpack.c.h.b16 %v194
    %v1198 = vunpack.c.l.b16 %v195
    %v1199 = vunpack.c.h.b16 %v195
    %v1200 = vunpack.c.l.b16 %v196
    %v1201 = vunpack.c.h.b16 %v196
    %v1202 = vunpack.c.l.b16 %v197
    %v1203 = vunpack.c.h.b16 %v197
    %v1204 = vunpack.c.l.b16 %v198
    %v1205 = vunpack.c.h.b16 %v198
    %v1206 = vunpack.c.l.b16 %v199
    %v1207 = vunpack.c.h.b16 %v199
    %v1208 = vunpack.c.l.b16 %v200
    %v1209 = vunpack.c.h.b16 %v200
    %v1210 = vunpack.c.l.b16 %v201
    %v1211 = vunpack.c.h.b16 %v201
    %v1212 = vunpack.c.l.b16 %v202
    %v1213 = vunpack.c.h.b16 %v202
    %v1214 = vunpack.c.l.b16 %v203
    %v1215 = vunpack.c.h.b16 %v203
    %v1216 = vunpack.c.l.b16 %v204
    %v1217 = vunpack.c.h.b16 %v204
    %v1218 = vunpack.c.l.b16 %v205
    %v1219 = vunpack.c.h.b16 %v205
    %v1220 = vunpack.c.l.b16 %v206
    %v1221 = vunpack.c.h.b16 %v206
    %v1222 = vunpack.c.l.b16 %v207
    %v1223 = vunpack.c.h.b16 %v207
    %v1224 = vunpack.c.l.b16 %v208
    %v1225 = vunpack.c.h.b16 %v208
    %v1226 = vunpack.c.l.b16 %v209
    %v1227 = vunpack.c.h.b16 %v209
    %v1228 = vunpack.c.l.b16 %v210
    %v1229 = vunpack.c.h.b16 %v210
    %v1230 = vunpack.c.l.b16 %v211
    %v1231 = vunpack.c.h.b16 %v211
    %v1232 = vunpack.c.l.b16 %v212
    %v1233 = vunpack.c.h.b16 %v212
    %v1234 = vunpack.c.l.b16 %v213
    %v1235 = vunpack.c.h.b16 %v213
    %v1236 = vunpack.c.l.b16 %v214
    %v1237 = vunpack.c.h.b16 %v214
    %v1238 = vunpack.c.l.b16 %v215
    %v1239 = vunpack.c.h.b16 %v215
    %v1240 = vunpack.c.l.b16 %v216
    %v1241 = vunpack.c.h.b16 %v216
    %v1242 = vunpack.c.l.b16 %v217
    %v1243 = vunpack.c.h.b16 %v217
    %v1244 = vunpack.c.l.b16 %v218
    %v1245 = vunpack.c.h.b16 %v218
    %v1246 = vunpack.c.l.b16 %v219
    %v1247 = vunpack.c.h.b16 %v219
    %v1248 = vunpack.c.l.b16 %v220
    %v1249 = vunpack.c.h.b16 %v220
    %v1250 = vunpack.c.l.b16 %v221
    %v1251 = vunpack.c.h.b16 %v221
    %v1252 = vunpack.c.l.b16 %v222
    %v1253 = vunpack.c.h.b16 %v222
    %v1254 = vunpack.c.l.b16 %v223
    %v1255 = vunpack.c.h.b16 %v223
    %v1256 = vunpack.c.l.b16 %v224
    %v1257 = vunpack.c.h.b16 %v224
    %v1258 = vunpack.c.l.b16 %v225
    %v1259 = vunpack.c.h.b16 %v225
    %v1260 = vunpack.c.l.b16 %v226
    %v1261 = vunpack.c.h.b16 %v226
    %v1262 = vunpack.c.l.b16 %v227
    %v1263 = vunpack.c.h.b16 %v227
    %v1264 = vunpack.c.l.b16 %v228
    %v1265 = vunpack.c.h.b16 %v228
    %v1266 = vunpack.c.l.b16 %v229
    %v1267 = vunpack.c.h.b16 %v229
    %v1268 = vunpack.c.l.b16 %v230
    %v1269 = vunpack.c.h.b16 %v230
    %v1270 = vunpack.c.l.b16 %v231
    %v1271 = vunpack.c.h.b16 %v231
    %v1272 = vunpack.c.l.b16 %v232
    %v1273 = vunpack.c.h.b16 %v232
    %v1274 = vunpack.c.l.b16 %v233
    %v1275 = vunpack.c.h.b16 %v233
    %v1276 = vunpack.c.l.b16 %v234
    %v1277 = vunpack.c.h.b16 %v234
    %v1278 = vunpack.c.l.b16 %v235
    %v1279 = vunpack.c.h.b16 %v235
    %v1280 = vunpack.c.l.b16 %v236
    %v1281 = vunpack.c.h.b16 %v236
    %v1282 = vunpack.c.l.b16 %v237
    %v1283 = vunpack.c.h.b16 %v237
    %v1284 = vunpack.c.l.b16 %v238
    %v1285 = vunpack.c.h.b16 %v238
    %v1286 = vunpack.c.l.b16 %v239
    %v1287 = vunpack.c.h.b16 %v239
    %v1288 = vunpack.c.l.b16 %v240
    %v1289 = vunpack.c.h.b16 %v240
    %v1290 = vunpack.c.l.b16 %v241
    %v1291 = vunpack.c.h.b16 %v241
    %v1292 = vunpack.c.l.b16 %v242
    %v1293 = vunpack.c.h.b16 %v242
    %v1294 = vunpack.c.l.b16 %v243
    %v1295 = vunpack.c.h.b16 %v243
    %v1296 = vunpack.c.l.b16 %v244
    %v1297 = vunpack.c.h.b16 %v244
    %v1298 = vunpack.c.l.b16 %v245
    %v1299 = vunpack.c.h.b16 %v245
    %v1300 = vunpack.c.l.b16 %v246
    %v1301 = vunpack.c.h.b16 %v246
    %v1302 = vunpack.c.l.b16 %v247
    %v1303 = vunpack.c.h.b16 %v247
    %v1304 = vunpack.c.l.b16 %v248
    %v1305 = vunpack.c.h.b16 %v248
    %v1306 = vunpack.c.l.b16 %v249
    %v1307 = vunpack.c.h.b16 %v249
    %v1308 = vunpack.c.l.b16 %v250
    %v1309 = vunpack.c.h.b16 %v250
    %v1310 = vunpack.c.l.b16 %v251
    %v1311 = vunpack.c.h.b16 %v251
    %v1312 = vunpack.c.l.b16 %v252
    %v1313 = vunpack.c.h.b16 %v252
    %v1314 = vunpack.c.l.b16 %v253
    %v1315 = vunpack.c.h.b16 %v253
    %v1316 = vunpack.c.l.b16 %v254
    %v1317 = vunpack.c.h.b16 %v254
    %v1318 = vunpack.c.l.b16 %v255
    %v1319 = vunpack.c.h.b16 %v255
    %v1320 = vunpack.c.l.b16 %v256
    %v1321 = vunpack.c.h.b16 %v256
    %v1322 = vunpack.c.l.b16 %v257
    %v1323 = vunpack.c.h.b16 %v257
    %v1324 = vunpack.c.l.b16 %v258
    %v1325 = vunpack.c.h.b16 %v258
    %v1326 = vunpack.c.l.b16 %v259
    %v1327 = vunpack.c.h.b16 %v259
    %v1328 = vunpack.c.l.b16 %v260
    %v1329 = vunpack.c.h.b16 %v260
    %v1330 = vunpack.c.l.b16 %v261
    %v1331 = vunpack.c.h.b16 %v261
    %v1332 = vunpack.c.l.b16 %v262
    %v1333 = vunpack.c.h.b16 %v262
    %v1334 = vunpack.c.l.b16 %v263
    %v1335 = vunpack.c.h.b16 %v263
    %v1336 = vunpack.c.l.b16 %v264
    %v1337 = vunpack.c.h.b16 %v264
    %v1338 = vunpack.c.l.b16 %v265
    %v1339 = vunpack.c.h.b16 %v265
    %v1340 = vunpack.c.l.b16 %v266
    %v1341 = vunpack.c.h.b16 %v266
    %v1342 = vunpack.c.l.b16 %v267
    %v1343 = vunpack.c.h.b16 %v267
    %v1344 = vunpack.c.l.b16 %v268
    %v1345 = vunpack.c.h.b16 %v268
    %v1346 = vunpack.c.l.b16 %v269
    %v1347 = vunpack.c.h.b16 %v269
    %v1348 = vunpack.c.l.b16 %v270
    %v1349 = vunpack.c.h.b16 %v270
    %v1350 = vunpack.c.l.b16 %v271
    %v1351 = vunpack.c.h.b16 %v271
    %v1352 = vunpack.c.l.b16 %v272
    %v1353 = vunpack.c.h.b16 %v272
    %v1354 = vunpack.c.l.b16 %v273
    %v1355 = vunpack.c.h.b16 %v273
    %v1356 = vunpack.c.l.b16 %v274
    %v1357 = vunpack.c.h.b16 %v274
    %v1358 = vunpack.c.l.b16 %v275
    %v1359 = vunpack.c.h.b16 %v275
    %v1360 = vunpack.c.l.b16 %v276
    %v1361 = vunpack.c.h.b16 %v276
    %v1362 = vunpack.c.l.b16 %v277
    %v1363 = vunpack.c.h.b16 %v277
    %v1364 = vunpack.c.l.b16 %v278
    %v1365 = vunpack.c.h.b16 %v278
    %v1366 = vunpack.c.l.b16 %v279
    %v1367 = vunpack.c.h.b16 %v279
    %v1368 = vunpack.c.l.b16 %v280
    %v1369 = vunpack.c.h.b16 %v280
    %v1370 = vunpack.c.l.b16 %v281
    %v1371 = vunpack.c.h.b16 %v281
    %v1372 = vunpack.c.l.b16 %v282
    %v1373 = vunpack.c.h.b16 %v282
    %v1374 = vunpack.c.l.b16 %v283
    %v1375 = vunpack.c.h.b16 %v283
    %v1376 = vunpack.c.l.b16 %v284
    %v1377 = vunpack.c.h.b16 %v284
    %v1378 = vunpack.c.l.b16 %v285
    %v1379 = vunpack.c.h.b16 %v285
    %v1380 = vunpack.c.l.b16 %v286
    %v1381 = vunpack.c.h.b16 %v286
    %v1382 = vunpack.c.l.b16 %v287
    %v1383 = vunpack.c.h.b16 %v287
    %v1384 = vunpack.c.l.b16 %v288
    %v1385 = vunpack.c.h.b16 %v288
    %v1386 = vunpack.c.l.b16 %v289
    %v1387 = vunpack.c.h.b16 %v289
    %v1388 = vunpack.c.l.b16 %v290
    %v1389 = vunpack.c.h.b16 %v290
    %v1390 = vunpack.c.l.b16 %v291
    %v1391 = vunpack.c.h.b16 %v291
    %v1392 = vunpack.c.l.b16 %v292
    %v1393 = vunpack.c.h.b16 %v292
    %v1394 = vunpack.c.l.b16 %v293
    %v1395 = vunpack.c.h.b16 %v293
    %v1396 = vunpack.c.l.b16 %v294
    %v1397 = vunpack.c.h.b16 %v294
    %v1398 = vunpack.c.l.b16 %v295
    %v1399 = vunpack.c.h.b16 %v295
    %v1400 = vunpack.c.l.b16 %v296
    %v1401 = vunpack.c.h.b16 %v296
    %v1402 = vunpack.c.l.b16 %v297
    %v1403 = vunpack.c.h.b16 %v297
    %v1404 = vunpack.c.l.b16 %v298
    %v1405 = vunpack.c.h.b16 %v298
    %v1406 = vunpack.c.l.b16 %v299
    %v1407 = vunpack.c.h.b16 %v299
    %v1408 = vunpack.c.l.b16 %v300
    %v1409 = vunpack.c.h.b16 %v300
    %v1410 = vunpack.c.l.b16 %v301
    %v1411 = vunpack.c.h.b16 %v301
    %v1412 = vunpack.c.l.b16 %v302
    %v1413 = vunpack.c.h.b16 %v302
    %v1414 = vunpack.c.l.b16 %v303
    %v1415 = vunpack.c.h.b16 %v303
    %v1416 = vunpack.c.l.b16 %v304
    %v1417 = vunpack.c.h.b16 %v304
    %v1418 = vunpack.c.l.b16 %v305
    %v1419 = vunpack.c.h.b16 %v305
    %v1420 = vunpack.c.l.b16 %v306
    %v1421 = vunpack.c.h.b16 %v306
    %v1422 = vunpack.c.l.b16 %v307
    %v1423 = vunpack.c.h.b16 %v307
    %v1424 = vunpack.c.l.b16 %v308
    %v1425 = vunpack.c.h.b16 %v308
    %v1426 = vunpack.c.l.b16 %v309
    %v1427 = vunpack.c.h.b16 %v309
    %v1428 = vunpack.c.l.b16 %v310
    %v1429 = vunpack.c.h.b16 %v310
    %v1430 = vunpack.c.l.b16 %v311
    %v1431 = vunpack.c.h.b16 %v311
    %v1432 = vunpack.c.l.b16 %v312
    %v1433 = vunpack.c.h.b16 %v312
    %v1434 = vunpack.c.l.b16 %v313
    %v1435 = vunpack.c.h.b16 %v313
    %v1436 = vunpack.c.l.b16 %v314
    %v1437 = vunpack.c.h.b16 %v314
    %v1438 = vunpack.c.l.b16 %v315
    %v1439 = vunpack.c.h.b16 %v315
    %v1440 = vunpack.c.l.b16 %v316
    %v1441 = vunpack.c.h.b16 %v316
    %v1442 = vunpack.c.l.b16 %v317
    %v1443 = vunpack.c.h.b16 %v317
    %v1444 = vunpack.c.l.b16 %v318
    %v1445 = vunpack.c.h.b16 %v318
    %v1446 = vunpack.c.l.b16 %v319
    %v1447 = vunpack.c.h.b16 %v319
    %v1448 = vunpack.c.l.b16 %v320
    %v1449 = vunpack.c.h.b16 %v320
    %v1450 = vunpack.c.l.b16 %v321
    %v1451 = vunpack.c.h.b16 %v321
    %v1452 = vunpack.c.l.b16 %v322
    %v1453 = vunpack.c.h.b16 %v322
    %v1454 = vunpack.c.l.b16 %v323
    %v1455 = vunpack.c.h.b16 %v323
    %v1456 = vunpack.c.l.b16 %v324
    %v1457 = vunpack.c.h.b16 %v324
    %v1458 = vunpack.c.l.b16 %v325
    %v1459 = vunpack.c.h.b16 %v325
    %v1460 = vunpack.c.l.b16 %v326
    %v1461 = vunpack.c.h.b16 %v326
    %v1462 = vunpack.c.l.b16 %v327
    %v1463 = vunpack.c.h.b16 %v327
    %v1464 = vunpack.c.l.b16 %v328
    %v1465 = vunpack.c.h.b16 %v328
    %v1466 = vunpack.c.l.b16 %v329
    %v1467 = vunpack.c.h.b16 %v329
    %v1468 = vunpack.c.l.b16 %v330
    %v1469 = vunpack.c.h.b16 %v330
    %v1470 = vunpack.c.l.b16 %v331
    %v1471 = vunpack.c.h.b16 %v331
    %v1472 = vunpack.c.l.b16 %v332
    %v1473 = vunpack.c.h.b16 %v332
    %v1474 = vunpack.c.l.b16 %v333
    %v1475 = vunpack.c.h.b16 %v333
    %v1476 = vunpack.c.l.b16 %v334
    %v1477 = vunpack.c.h.b16 %v334
    %v1478 = vunpack.c.l.b16 %v335
    %v1479 = vunpack.c.h.b16 %v335
    %v1480 = vunpack.c.l.b16 %v336
    %v1481 = vunpack.c.h.b16 %v336
    %v1482 = vunpack.c.l.b16 %v337
    %v1483 = vunpack.c.h.b16 %v337
    %v1484 = vunpack.c.l.b16 %v338
    %v1485 = vunpack.c.h.b16 %v338
    %v1486 = vunpack.c.l.b16 %v339
    %v1487 = vunpack.c.h.b16 %v339
    %v1488 = vunpack.c.l.b16 %v340
    %v1489 = vunpack.c.h.b16 %v340
    %v1490 = vunpack.c.l.b16 %v341
    %v1491 = vunpack.c.h.b16 %v341
    %v1492 = vunpack.c.l.b16 %v342
    %v1493 = vunpack.c.h.b16 %v342
    %v1494 = vunpack.c.l.b16 %v343
    %v1495 = vunpack.c.h.b16 %v343
    %v1496 = vunpack.c.l.b16 %v344
    %v1497 = vunpack.c.h.b16 %v344
    %v1498 = vunpack.c.l.b16 %v345
    %v1499 = vunpack.c.h.b16 %v345
    %v1500 = vunpack.c.l.b16 %v346
    %v1501 = vunpack.c.h.b16 %v346
    %v1502 = vunpack.c.l.b16 %v347
    %v1503 = vunpack.c.h.b16 %v347
    %v1504 = vunpack.c.l.b16 %v348
    %v1505 = vunpack.c.h.b16 %v348
    %v1506 = vunpack.c.l.b16 %v349
    %v1507 = vunpack.c.h.b16 %v349
    %v1508 = vunpack.c.l.b16 %v350
    %v1509 = vunpack.c.h.b16 %v350
    %v1510 = vunpack.c.l.b16 %v351
    %v1511 = vunpack.c.h.b16 %v351
    %v1512 = vunpack.c.l.b16 %v352
    %v1513 = vunpack.c.h.b16 %v352
    %v1514 = vunpack.c.l.b16 %v353
    %v1515 = vunpack.c.h.b16 %v353
    %v1516 = vunpack.c.l.b16 %v354
    %v1517 = vunpack.c.h.b16 %v354
    %v1518 = vunpack.c.l.b16 %v355
    %v1519 = vunpack.c.h.b16 %v355
    %v1520 = vunpack.c.l.b16 %v356
    %v1521 = vunpack.c.h.b16 %v356
    %v1522 = vunpack.c.l.b16 %v357
    %v1523 = vunpack.c.h.b16 %v357
    %v1524 = vunpack.c.l.b16 %v358
    %v1525 = vunpack.c.h.b16 %v358
    %v1526 = vunpack.c.l.b16 %v359
    %v1527 = vunpack.c.h.b16 %v359
    %v1528 = vunpack.c.l.b16 %v360
    %v1529 = vunpack.c.h.b16 %v360
    %v1530 = vunpack.c.l.b16 %v361
    %v1531 = vunpack.c.h.b16 %v361
    %v1532 = vunpack.c.l.b16 %v362
    %v1533 = vunpack.c.h.b16 %v362
    %v1534 = vunpack.c.l.b16 %v363
    %v1535 = vunpack.c.h.b16 %v363
    %v1536 = vunpack.c.l.b16 %v364
    %v1537 = vunpack.c.h.b16 %v364
    %v1538 = vunpack.c.l.b16 %v365
    %v1539 = vunpack.c.h.b16 %v365
    %v1540 = vunpack.c.l.b16 %v366
    %v1541 = vunpack.c.h.b16 %v366
    %v1542 = vunpack.c.l.b16 %v367
    %v1543 = vunpack.c.h.b16 %v367
    %v1544 = vunpack.c.l.b16 %v368
    %v1545 = vunpack.c.h.b16 %v368
    %v1546 = vunpack.c.l.b16 %v369
    %v1547 = vunpack.c.h.b16 %v369
    %v1548 = vunpack.c.l.b16 %v370
    %v1549 = vunpack.c.h.b16 %v370
    %v1550 = vunpack.c.l.b16 %v371
    %v1551 = vunpack.c.h.b16 %v371
    %v1552 = vunpack.c.l.b16 %v372
    %v1553 = vunpack.c.h.b16 %v372
    %v1554 = vunpack.c.l.b16 %v373
    %v1555 = vunpack.c.h.b16 %v373
    %v1556 = vunpack.c.l.b16 %v374
    %v1557 = vunpack.c.h.b16 %v374
    %v1558 = vunpack.c.l.b16 %v375
    %v1559 = vunpack.c.h.b16 %v375
    %v1560 = vunpack.c.l.b16 %v376
    %v1561 = vunpack.c.h.b16 %v376
    %v1562 = vunpack.c.l.b16 %v377
    %v1563 = vunpack.c.h.b16 %v377
    %v1564 = vunpack.c.l.b16 %v378
    %v1565 = vunpack.c.h.b16 %v378
    %v1566 = vunpack.c.l.b16 %v379
    %v1567 = vunpack.c.h.b16 %v379
    %v1568 = vunpack.c.l.b16 %v380
    %v1569 = vunpack.c.h.b16 %v380
    %v1570 = vunpack.c.l.b16 %v381
    %v1571 = vunpack.c.h.b16 %v381
    %v1572 = vunpack.c.l.b16 %v382
    %v1573 = vunpack.c.h.b16 %v382
    %v1574 = vunpack.c.l.b16 %v383
    %v1575 = vunpack.c.h.b16 %v383
    %v1576 = vunpack.c.l.b16 %v384
    %v1577 = vunpack.c.h.b16 %v384
    %v1578 = vunpack.c.l.b16 %v385
    %v1579 = vunpack.c.h.b16 %v385
    %v1580 = vunpack.c.l.b16 %v386
    %v1581 = vunpack.c.h.b16 %v386
    %v1582 = vunpack.c.l.b16 %v387
    %v1583 = vunpack.c.h.b16 %v387
    %v1584 = vunpack.c.l.b16 %v388
    %v1585 = vunpack.c.h.b16 %v388
    %v1586 = vunpack.c.l.b16 %v389
    %v1587 = vunpack.c.h.b16 %v389
    %v1588 = vunpack.c.l.b16 %v390
    %v1589 = vunpack.c.h.b16 %v390
    %v1590 = vunpack.c.l.b16 %v391
    %v1591 = vunpack.c.h.b16 %v391
    %v1592 = vunpack.c.l.b16 %v392
    %v1593 = vunpack.c.h.b16 %v392
    %v1594 = vunpack.c.l.b16 %v393
    %v1595 = vunpack.c.h.b16 %v393
    %v1596 = vunpack.c.l.b16 %v394
    %v1597 = vunpack.c.h.b16 %v394
    %v1598 = vunpack.c.l.b16 %v395
    %v1599 = vunpack.c.h.b16 %v395
    %v1600 = vunpack.c.l.b16 %v396
    %v1601 = vunpack.c.h.b16 %v396
    %v1602 = vunpack.c.l.b16 %v397
    %v1603 = vunpack.c.h.b16 %v397
    %v1604 = vunpack.c.l.b16 %v398
    %v1605 = vunpack.c.h.b16 %v398
    %v1606 = vunpack.c.l.b16 %v399
    %v1607 = vunpack.c.h.b16 %v399
    %v1608 = vunpack.c.l.b16 %v400
    %v1609 = vunpack.c.h.b16 %v400
    %v1610 = vunpack.c.l.b16 %v401
    %v1611 = vunpack.c.h.b16 %v401
    %v1612 = vunpack.c.l.b16 %v402
    %v1613 = vunpack.c.h.b16 %v402
    %v1614 = vunpack.c.l.b16 %v403
    %v1615 = vunpack.c.h.b16 %v403
    %v1616 = vunpack.c.l.b16 %v404
    %v1617 = vunpack.c.h.b16 %v404
    %v1618 = vunpack.c.l.b16 %v405
    %v1619 = vunpack.c.h.b16 %v405
    %v1620 = vunpack.c.l.b16 %v406
    %v1621 = vunpack.c.h.b16 %v406
    %v1622 = vunpack.c.l.b16 %v407
    %v1623 = vunpack.c.h.b16 %v407
    %v1624 = vunpack.c.l.b16 %v408
    %v1625 = vunpack.c.h.b16 %v408
    %v1626 = vunpack.c.l.b16 %v409
    %v1627 = vunpack.c.h.b16 %v409
    %v1628 = vunpack.c.l.b16 %v410
    %v1629 = vunpack.c.h.b16 %v410
    %v1630 = vunpack.c.l.b16 %v411
    %v1631 = vunpack.c.h.b16 %v411
    %v1632 = vunpack.c.l.b16 %v412
    %v1633 = vunpack.c.h.b16 %v412
    %v1634 = vunpack.c.l.b16 %v413
    %v1635 = vunpack.c.h.b16 %v413
    %v1636 = vunpack.c.l.b16 %v414
    %v1637 = vunpack.c.h.b16 %v414
    %v1638 = vunpack.c.l.b16 %v415
    %v1639 = vunpack.c.h.b16 %v415
    %v1640 = vunpack.c.l.b16 %v416
    %v1641 = vunpack.c.h.b16 %v416
    %v1642 = vunpack.c.l.b16 %v417
    %v1643 = vunpack.c.h.b16 %v417
    %v1644 = vunpack.c.l.b16 %v418
    %v1645 = vunpack.c.h.b16 %v418
    %v1646 = vunpack.c.l.b16 %v419
    %v1647 = vunpack.c.h.b16 %v419
    %v1648 = vunpack.c.l.b16 %v420
    %v1649 = vunpack.c.h.b16 %v420
    %v1650 = vunpack.c.l.b16 %v421
    %v1651 = vunpack.c.h.b16 %v421
    %v1652 = vpack.c.b16 %v872, %v868
    %v1653 = vpack.c.b16 %v873, %v869
    %v1654 = vpack.c.b16 %v874, %v870
    %v1655 = vpack.c.b16 %v875, %v871
    %v1656 = vpack.c.b16 %v880, %v876
    %v1657 = vpack.c.b16 %v881, %v877
    %v1658 = vpack.c.b16 %v882, %v878
    %v1659 = vpack.c.b16 %v883, %v879
    %v1660 = vpack.c.b16 %v888, %v884
    %v1661 = vpack.c.b16 %v889, %v885
    %v1662 = vpack.c.b16 %v890, %v886
    %v1663 = vpack.c.b16 %v891, %v887
    %v1664 = vpack.c.b16 %v896, %v892
    %v1665 = vpack.c.b16 %v897, %v893
    %v1666 = vpack.c.b16 %v898, %v894
    %v1667 = vpack.c.b16 %v899, %v895
    %v1668 = vpack.c.b16 %v904, %v900
    %v1669 = vpack.c.b16 %v905, %v901
    %v1670 = vpack.c.b16 %v906, %v902
    %v1671 = vpack.c.b16 %v907, %v903
    %v1672 = vpack.c.b16 %v912, %v908
    %v1673 = vpack.c.b16 %v913, %v909
    %v1674 = vpack.c.b16 %v914, %v910
    %v1675 = vpack.c.b16 %v915, %v911
    %v1676 = vpack.c.b16 %v920, %v916
    %v1677 = vpack.c.b16 %v921, %v917
    %v1678 = vpack.c.b16 %v922, %v918
    %v1679 = vpack.c.b16 %v923, %v919
    %v1680 = vpack.c.b16 %v928, %v924
    %v1681 = vpack.c.b16 %v929, %v925
    %v1682 = vpack.c.b16 %v930, %v926
    %v1683 = vpack.c.b16 %v931, %v927
    %v1684 = vpack.c.b16 %v936, %v932
    %v1685 = vpack.c.b16 %v937, %v933
    %v1686 = vpack.c.b16 %v938, %v934
    %v1687 = vpack.c.b16 %v939, %v935
    %v1688 = vpack.c.b16 %v944, %v940
    %v1689 = vpack.c.b16 %v945, %v941
    %v1690 = vpack.c.b16 %v946, %v942
    %v1691 = vpack.c.b16 %v947, %v943
    %v1692 = vpack.c.b16 %v952, %v948
    %v1693 = vpack.c.b16 %v953, %v949
    %v1694 = vpack.c.b16 %v954, %v950
    %v1695 = vpack.c.b16 %v955, %v951
    %v1696 = vpack.c.b16 %v960, %v956
    %v1697 = vpack.c.b16 %v961, %v957
    %v1698 = vpack.c.b16 %v962, %v958
    %v1699 = vpack.c.b16 %v963, %v959
    %v1700 = vpack.c.b16 %v968, %v964
    %v1701 = vpack.c.b16 %v969, %v965
    %v1702 = vpack.c.b16 %v970, %v966
    %v1703 = vpack.c.b16 %v971, %v967
    %v1704 = vpack.c.b16 %v976, %v972
    %v1705 = vpack.c.b16 %v977, %v973
    %v1706 = vpack.c.b16 %v978, %v974
    %v1707 = vpack.c.b16 %v979, %v975
    %v1708 = vpack.c.b16 %v984, %v980
    %v1709 = vpack.c.b16 %v985, %v981
    %v1710 = vpack.c.b16 %v986, %v982
    %v1711 = vpack.c.b16 %v987, %v983
    %v1712 = vpack.c.b16 %v992, %v988
    %v1713 = vpack.c.b16 %v993, %v989
    %v1714 = vpack.c.b16 %v994, %v990
    %v1715 = vpack.c.b16 %v995, %v991
    %v1716 = vpack.c.b16 %v1000, %v996
    %v1717 = vpack.c.b16 %v1001, %v997
    %v1718 = vpack.c.b16 %v1002, %v998
    %v1719 = vpack.c.b16 %v1003, %v999
    %v1720 = vpack.c.b16 %v1008, %v1004
    %v1721 = vpack.c.b16 %v1009, %v1005
    %v1722 = vpack.c.b16 %v1010, %v1006
    %v1723 = vpack.c.b16 %v1011, %v1007
    %v1724 = vpack.c.b16 %v1016, %v1012
    %v1725 = vpack.c.b16 %v1017, %v1013
    %v1726 = vpack.c.b16 %v1018, %v1014
    %v1727 = vpack.c.b16 %v1019, %v1015
    %v1728 = vpack.c.b16 %v1024, %v1020
    %v1729 = vpack.c.b16 %v1025, %v1021
    %v1730 = vpack.c.b16 %v1026, %v1022
    %v1731 = vpack.c.b16 %v1027, %v1023
    %v1732 = vpack.c.b16 %v1032, %v1028
    %v1733 = vpack.c.b16 %v1033, %v1029
    %v1734 = vpack.c.b16 %v1034, %v1030
    %v1735 = vpack.c.b16 %v1035, %v1031
    %v1736 = vpack.c.b16 %v1040, %v1036
    %v1737 = vpack.c.b16 %v1041, %v1037
    %v1738 = vpack.c.b16 %v1042, %v1038
    %v1739 = vpack.c.b16 %v1043, %v1039
    %v1740 = vpack.c.b16 %v1048, %v1044
    %v1741 = vpack.c.b16 %v1049, %v1045
    %v1742 = vpack.c.b16 %v1050, %v1046
    %v1743 = vpack.c.b16 %v1051, %v1047
    %v1744 = vpack.c.b16 %v1056, %v1052
    %v1745 = vpack.c.b16 %v1057, %v1053
    %v1746 = vpack.c.b16 %v1058, %v1054
    %v1747 = vpack.c.b16 %v1059, %v1055
    %v1748 = vpack.c.b16 %v1064, %v1060
    %v1749 = vpack.c.b16 %v1065, %v1061
    %v1750 = vpack.c.b16 %v1066, %v1062
    %v1751 = vpack.c.b16 %v1067, %v1063
    %v1752 = vpack.c.b16 %v1072, %v1068
    %v1753 = vpack.c.b16 %v1073, %v1069
    %v1754 = vpack.c.b16 %v1074, %v1070
    %v1755 = vpack.c.b16 %v1075, %v1071
    %v1756 = vpack.c.b16 %v1080, %v1076
    %v1757 = vpack.c.b16 %v1081, %v1077
    %v1758 = vpack.c.b16 %v1082, %v1078
    %v1759 = vpack.c.b16 %v1083, %v1079
    %v1760 = vpack.c.b16 %v1088, %v1084
    %v1761 = vpack.c.b16 %v1089, %v1085
    %v1762 = vpack.c.b16 %v1090, %v1086
    %v1763 = vpack.c.b16 %v1091, %v1087
    %v1764 = vpack.c.b16 %v1096, %v1092
    %v1765 = vpack.c.b16 %v1097, %v1093
    %v1766 = vpack.c.b16 %v1098, %v1094
    %v1767 = vpack.c.b16 %v1099, %v1095
    %v1768 = vpack.c.b16 %v1104, %v1100
    %v1769 = vpack.c.b16 %v1105, %v1101
    %v1770 = vpack.c.b16 %v1106, %v1102
    %v1771 = vpack.c.b16 %v1107, %v1103
    %v1772 = vpack.c.b16 %v1112, %v1108
    %v1773 = vpack.c.b16 %v1113, %v1109
    %v1774 = vpack.c.b16 %v1114, %v1110
    %v1775 = vpack.c.b16 %v1115, %v1111
    %v1776 = vpack.c.b16 %v1120, %v1116
    %v1777 = vpack.c.b16 %v1121, %v1117
    %v1778 = vpack.c.b16 %v1122, %v1118
    %v1779 = vpack.c.b16 %v1123, %v1119
    %v1780 = vpack.c.b16 %v1128, %v1124
    %v1781 = vpack.c.b16 %v1129, %v1125
    %v1782 = vpack.c.b16 %v1130, %v1126
    %v1783 = vpack.c.b16 %v1131, %v1127
    %v1784 = vpack.c.b16 %v1136, %v1132
    %v1785 = vpack.c.b16 %v1137, %v1133
    %v1786 = vpack.c.b16 %v1138, %v1134
    %v1787 = vpack.c.b16 %v1139, %v1135
    %v1788 = vpack.c.b16 %v1144, %v1140
    %v1789 = vpack.c.b16 %v1145, %v1141
    %v1790 = vpack.c.b16 %v1146, %v1142
    %v1791 = vpack.c.b16 %v1147, %v1143
    %v1792 = vpack.c.b16 %v1152, %v1148
    %v1793 = vpack.c.b16 %v1153, %v1149
    %v1794 = vpack.c.b16 %v1154, %v1150
    %v1795 = vpack.c.b16 %v1155, %v1151
    %v1796 = vpack.c.b16 %v1160, %v1156
    %v1797 = vpack.c.b16 %v1161, %v1157
    %v1798 = vpack.c.b16 %v1162, %v1158
    %v1799 = vpack.c.b16 %v1163, %v1159
    %v1800 = vpack.c.b16 %v1168, %v1164
    %v1801 = vpack.c.b16 %v1169, %v1165
    %v1802 = vpack.c.b16 %v1170, %v1166
    %v1803 = vpack.c.b16 %v1171, %v1167
    %v1804 = vpack.c.b16 %v1176, %v1172
    %v1805 = vpack.c.b16 %v1177, %v1173
    %v1806 = vpack.c.b16 %v1178, %v1174
    %v1807 = vpack.c.b16 %v1179, %v1175
    %v1808 = vpack.c.b16 %v1184, %v1180
    %v1809 = vpack.c.b16 %v1185, %v1181
    %v1810 = vpack.c.b16 %v1186, %v1182
    %v1811 = vpack.c.b16 %v1187, %v1183
    %v1812 = vpack.c.b16 %v1192, %v1188
    %v1813 = vpack.c.b16 %v1193, %v1189
    %v1814 = vpack.c.b16 %v1194, %v1190
    %v1815 = vpack.c.b16 %v1195, %v1191
    %v1816 = vpack.c.b16 %v1200, %v1196
    %v1817 = vpack.c.b16 %v1201, %v1197
    %v1818 = vpack.c.b16 %v1202, %v1198
    %v1819 = vpack.c.b16 %v1203, %v1199
    %v1820 = vpack.c.b16 %v1208, %v1204
    %v1821 = vpack.c.b16 %v1209, %v1205
    %v1822 = vpack.c.b16 %v1210, %v1206
    %v1823 = vpack.c.b16 %v1211, %v1207
    %v1824 = vpack.c.b16 %v1216, %v1212
    %v1825 = vpack.c.b16 %v1217, %v1213
    %v1826 = vpack.c.b16 %v1218, %v1214
    %v1827 = vpack.c.b16 %v1219, %v1215
    %v1828 = vpack.c.b16 %v1224, %v1220
    %v1829 = vpack.c.b16 %v1225, %v1221
    %v1830 = vpack.c.b16 %v1226, %v1222
    %v1831 = vpack.c.b16 %v1227, %v1223
    %v1832 = vpack.c.b16 %v1232, %v1228
    %v1833 = vpack.c.b16 %v1233, %v1229
    %v1834 = vpack.c.b16 %v1234, %v1230
    %v1835 = vpack.c.b16 %v1235, %v1231
    %v1836 = vpack.c.b16 %v1240, %v1236
    %v1837 = vpack.c.b16 %v1241, %v1237
    %v1838 = vpack.c.b16 %v1242, %v1238
    %v1839 = vpack.c.b16 %v1243, %v1239
    %v1840 = vpack.c.b16 %v1248, %v1244
    %v1841 = vpack.c.b16 %v1249, %v1245
    %v1842 = vpack.c.b16 %v1250, %v1246
    %v1843 = vpack.c.b16 %v1251, %v1247
    %v1844 = vpack.c.b16 %v1256, %v1252
    %v1845 = vpack.c.b16 %v1257, %v1253
    %v1846 = vpack.c.b16 %v1258, %v1254
    %v1847 = vpack.c.b16 %v1259, %v1255
    %v1848 = vpack.c.b16 %v1264, %v1260
    %v1849 = vpack.c.b16 %v1265, %v1261
    %v1850 = vpack.c.b16 %v1266, %v1262
    %v1851 = vpack.c.b16 %v1267, %v1263
    %v1852 = vpack.c.b16 %v1272, %v1268
    %v1853 = vpack.c.b16 %v1273, %v1269
    %v1854 = vpack.c.b16 %v1274, %v1270
    %v1855 = vpack.c.b16 %v1275, %v1271
    %v1856 = vpack.c.b16 %v1280, %v1276
    %v1857 = vpack.c.b16 %v1281, %v1277
    %v1858 = vpack.c.b16 %v1282, %v1278
    %v1859 = vpack.c.b16 %v1283, %v1279
    %v1860 = vpack.c.b16 %v1288, %v1284
    %v1861 = vpack.c.b16 %v1289, %v1285
    %v1862 = vpack.c.b16 %v1290, %v1286
    %v1863 = vpack.c.b16 %v1291, %v1287
    %v1864 = vpack.c.b16 %v1296, %v1292
    %v1865 = vpack.c.b16 %v1297, %v1293
    %v1866 = vpack.c.b16 %v1298, %v1294
    %v1867 = vpack.c.b16 %v1299, %v1295
    %v1868 = vpack.c.b16 %v1304, %v1300
    %v1869 = vpack.c.b16 %v1305, %v1301
    %v1870 = vpack.c.b16 %v1306, %v1302
    %v1871 = vpack.c.b16 %v1307, %v1303
    %v1872 = vpack.c.b16 %v1312, %v1308
    %v1873 = vpack.c.b16 %v1313, %v1309
    %v1874 = vpack.c.b16 %v1314, %v1310
    %v1875 = vpack.c.b16 %v1315, %v1311
    %v1876 = vpack.c.b16 %v1320, %v1316
    %v1877 = vpack.c.b16 %v1321, %v1317
    %v1878 = vpack.c.b16 %v1322, %v1318
    %v1879 = vpack.c.b16 %v1323, %v1319
    %v1880 = vpack.c.b16 %v1328, %v1324
    %v1881 = vpack.c.b16 %v1329, %v1325
    %v1882 = vpack.c.b16 %v1330, %v1326
    %v1883 = vpack.c.b16 %v1331, %v1327
    %v1884 = vpack.c.b16 %v1336, %v1332
    %v1885 = vpack.c.b16 %v1337, %v1333
    %v1886 = vpack.c.b16 %v1338, %v1334
    %v1887 = vpack.c.b16 %v1339, %v1335
    %v1888 = vpack.c.b16 %v1344, %v1340
    %v1889 = vpack.c.b16 %v1345, %v1341
    %v1890 = vpack.c.b16 %v1346, %v1342
    %v1891 = vpack.c.b16 %v1347, %v1343
    %v1892 = vpack.c.b16 %v1352, %v1348
    %v1893 = vpack.c.b16 %v1353, %v1349
    %v1894 = vpack.c.b16 %v1354, %v1350
    %v1895 = vpack.c.b16 %v1355, %v1351
    %v1896 = vpack.c.b16 %v1360, %v1356
    %v1897 = vpack.c.b16 %v1361, %v1357
    %v1898 = vpack.c.b16 %v1362, %v1358
    %v1899 = vpack.c.b16 %v1363, %v1359
    %v1900 = vpack.c.b16 %v1368, %v1364
    %v1901 = vpack.c.b16 %v1369, %v1365
    %v1902 = vpack.c.b16 %v1370, %v1366
    %v1903 = vpack.c.b16 %v1371, %v1367
    %v1904 = vpack.c.b16 %v1376, %v1372
    %v1905 = vpack.c.b16 %v1377, %v1373
    %v1906 = vpack.c.b16 %v1378, %v1374
    %v1907 = vpack.c.b16 %v1379, %v1375
    %v1908 = vpack.c.b16 %v1384, %v1380
    %v1909 = vpack.c.b16 %v1385, %v1381
    %v1910 = vpack.c.b16 %v1386, %v1382
    %v1911 = vpack.c.b16 %v1387, %v1383
    %v1912 = vpack.c.b16 %v1392, %v1388
    %v1913 = vpack.c.b16 %v1393, %v1389
    %v1914 = vpack.c.b16 %v1394, %v1390
    %v1915 = vpack.c.b16 %v1395, %v1391
    %v1916 = vpack.c.b16 %v1400, %v1396
    %v1917 = vpack.c.b16 %v1401, %v1397
    %v1918 = vpack.c.b16 %v1402, %v1398
    %v1919 = vpack.c.b16 %v1403, %v1399
    %v1920 = vpack.c.b16 %v1408, %v1404
    %v1921 = vpack.c.b16 %v1409, %v1405
    %v1922 = vpack.c.b16 %v1410, %v1406
    %v1923 = vpack.c.b16 %v1411, %v1407
    %v1924 = vpack.c.b16 %v1416, %v1412
    %v1925 = vpack.c.b16 %v1417, %v1413
    %v1926 = vpack.c.b16 %v1418, %v1414
    %v1927 = vpack.c.b16 %v1419, %v1415
    %v1928 = vpack.c.b16 %v1424, %v1420
    %v1929 = vpack.c.b16 %v1425, %v1421
    %v1930 = vpack.c.b16 %v1426, %v1422
    %v1931 = vpack.c.b16 %v1427, %v1423
    %v1932 = vpack.c.b16 %v1432, %v1428
    %v1933 = vpack.c.b16 %v1433, %v1429
    %v1934 = vpack.c.b16 %v1434, %v1430
    %v1935 = vpack.c.b16 %v1435, %v1431
    %v1936 = vpack.c.b16 %v1440, %v1436
    %v1937 = vpack.c.b16 %v1441, %v1437
    %v1938 = vpack.c.b16 %v1442, %v1438
    %v1939 = vpack.c.b16 %v1443, %v1439
    %v1940 = vpack.c.b16 %v1448, %v1444
    %v1941 = vpack.c.b16 %v1449, %v1445
    %v1942 = vpack.c.b16 %v1450, %v1446
    %v1943 = vpack.c.b16 %v1451, %v1447
    %v1944 = vpack.c.b16 %v1456, %v1452
    %v1945 = vpack.c.b16 %v1457, %v1453
    %v1946 = vpack.c.b16 %v1458, %v1454
    %v1947 = vpack.c.b16 %v1459, %v1455
    %v1948 = vpack.c.b16 %v1464, %v1460
    %v1949 = vpack.c.b16 %v1465, %v1461
    %v1950 = vpack.c.b16 %v1466, %v1462
    %v1951 = vpack.c.b16 %v1467, %v1463
    %v1952 = vpack.c.b16 %v1472, %v1468
    %v1953 = vpack.c.b16 %v1473, %v1469
    %v1954 = vpack.c.b16 %v1474, %v1470
    %v1955 = vpack.c.b16 %v1475, %v1471
    %v1956 = vpack.c.b16 %v1480, %v1476
    %v1957 = vpack.c.b16 %v1481, %v1477
    %v1958 = vpack.c.b16 %v1482, %v1478
    %v1959 = vpack.c.b16 %v1483, %v1479
    %v1960 = vpack.c.b16 %v1488, %v1484
    %v1961 = vpack.c.b16 %v1489, %v1485
    %v1962 = vpack.c.b16 %v1490, %v1486
    %v1963 = vpack.c.b16 %v1491, %v1487
    %v1964 = vpack.c.b16 %v1496, %v1492
    %v1965 = vpack.c.b16 %v1497, %v1493
    %v1966 = vpack.c.b16 %v1498, %v1494
    %v1967 = vpack.c.b16 %v1499, %v1495
    %v1968 = vpack.c.b16 %v1504, %v1500
    %v1969 = vpack.c.b16 %v1505, %v1501
    %v1970 = vpack.c.b16 %v1506, %v1502
    %v1971 = vpack.c.b16 %v1507, %v1503
    %v1972 = vpack.c.b16 %v1512, %v1508
    %v1973 = vpack.c.b16 %v1513, %v1509
    %v1974 = vpack.c.b16 %v1514, %v1510
    %v1975 = vpack.c.b16 %v1515, %v1511
    %v1976 = vpack.c.b16 %v1520, %v1516
    %v1977 = vpack.c.b16 %v1521, %v1517
    %v1978 = vpack.c.b16 %v1522, %v1518
    %v1979 = vpack.c.b16 %v1523, %v1519
    %v1980 = vpack.c.b16 %v1528, %v1524
    %v1981 = vpack.c.b16 %v1529, %v1525
    %v1982 = vpack.c.b16 %v1530, %v1526
    %v1983 = vpack.c.b16 %v1531, %v1527
    %v1984 = vpack.c.b16 %v1536, %v1532
    %v1985 = vpack.c.b16 %v1537, %v1533
    %v1986 = vpack.c.b16 %v1538, %v1534
    %v1987 = vpack.c.b16 %v1539, %v1535
    %v1988 = vpack.c.b16 %v1544, %v1540
    %v1989 = vpack.c.b16 %v1545, %v1541
    %v1990 = vpack.c.b16 %v1546, %v1542
    %v1991 = vpack.c.b16 %v1547, %v1543
    %v1992 = vpack.c.b16 %v1552, %v1548
    %v1993 = vpack.c.b16 %v1553, %v1549
    %v1994 = vpack.c.b16 %v1554, %v1550
    %v1995 = vpack.c.b16 %v1555, %v1551
    %v1996 = vpack.c.b16 %v1560, %v1556
    %v1997 = vpack.c.b16 %v1561, %v1557
    %v1998 = vpack.c.b16 %v1562, %v1558
    %v1999 = vpack.c.b16 %v1563, %v1559
    %v2000 = vpack.c.b16 %v1568, %v1564
    %v2001 = vpack.c.b16 %v1569, %v1565
    %v2002 = vpack.c.b16 %v1570, %v1566
    %v2003 = vpack.c.b16 %v1571, %v1567
    %v2004 = vpack.c.b16 %v1576, %v1572
    %v2005 = vpack.c.b16 %v1577, %v1573
    %v2006 = vpack.c.b16 %v1578, %v1574
    %v2007 = vpack.c.b16 %v1579, %v1575
    %v2008 = vpack.c.b16 %v1584, %v1580
    %v2009 = vpack.c.b16 %v1585, %v1581
    %v2010 = vpack.c.b16 %v1586, %v1582
    %v2011 = vpack.c.b16 %v1587, %v1583
    %v2012 = vpack.c.b16 %v1592, %v1588
    %v2013 = vpack.c.b16 %v1593, %v1589
    %v2014 = vpack.c.b16 %v1594, %v1590
    %v2015 = vpack.c.b16 %v1595, %v1591
    %v2016 = vpack.c.b16 %v1600, %v1596
    %v2017 = vpack.c.b16 %v1601, %v1597
    %v2018 = vpack.c.b16 %v1602, %v1598
    %v2019 = vpack.c.b16 %v1603, %v1599
    %v2020 = vpack.c.b16 %v1608, %v1604
    %v2021 = vpack.c.b16 %v1609, %v1605
    %v2022 = vpack.c.b16 %v1610, %v1606
    %v2023 = vpack.c.b16 %v1611, %v1607
    %v2024 = vpack.c.b16 %v1616, %v1612
    %v2025 = vpack.c.b16 %v1617, %v1613
    %v2026 = vpack.c.b16 %v1618, %v1614
    %v2027 = vpack.c.b16 %v1619, %v1615
    %v2028 = vpack.c.b16 %v1624, %v1620
    %v2029 = vpack.c.b16 %v1625, %v1621
    %v2030 = vpack.c.b16 %v1626, %v1622
    %v2031 = vpack.c.b16 %v1627, %v1623
    %v2032 = vpack.c.b16 %v1632, %v1628
    %v2033 = vpack.c.b16 %v1633, %v1629
    %v2034 = vpack.c.b16 %v1634, %v1630
    %v2035 = vpack.c.b16 %v1635, %v1631
    %v2036 = vpack.c.b16 %v1640, %v1636
    %v2037 = vpack.c.b16 %v1641, %v1637
    %v2038 = vpack.c.b16 %v1642, %v1638
    %v2039 = vpack.c.b16 %v1643, %v1639
    %v2040 = vpack.c.b16 %v1648, %v1644
    %v2041 = vpack.c.b16 %v1649, %v1645
    %v2042 = vpack.c.b16 %v1650, %v1646
    %v2043 = vpack.c.b16 %v1651, %v1647
    %vm2436 = vcmask 261120
    %v2437 = vsel %vm2436, %v463, 0
    %2439 = vmatpush.bf16.msra.mxu0 %v1680
    %2440 = vmatpush.bf16.msra.mxu0 %v1676
    %2441 = vmatpush.bf16.msra.mxu0 %v1672
    %2442 = vmatpush.bf16.msra.mxu0 %v1668
    %2443 = vmatpush.bf16.msra.mxu0 %v1664
    %2444 = vmatpush.bf16.msra.mxu0 %v1660
    %2445 = vmatpush.bf16.msra.mxu0 %v1656
    %2446 = vmatpush.bf16.msra.mxu0 %v1652
    %2447 = vmatmul.bf16.gmra.mxu0 %v443
    %v2448 = vpop.f32.mrf.mxu0
    %v2449 = vadd.f32 %v424, %v2448
    %v2450 = vpop.f32.mrf.mxu0
    %2451 = vdwg.mxu0
    %2452 = vmatpush.bf16.msra.mxu0 %v1712
    %2453 = vmatpush.bf16.msra.mxu0 %v1708
    %2454 = vmatpush.bf16.msra.mxu0 %v1704
    %2455 = vmatpush.bf16.msra.mxu0 %v1700
    %2456 = vmatpush.bf16.msra.mxu0 %v1696
    %2457 = vmatpush.bf16.msra.mxu0 %v1692
    %2458 = vmatpush.bf16.msra.mxu0 %v1688
    %2459 = vmatpush.bf16.msra.mxu0 %v1684
    %2460 = vmatmul.bf16.gmra.mxu0 %v444
    %v2461 = vpop.f32.mrf.mxu0
    %v2462 = vadd.f32 %v2449, %v2461
    %v2463 = vpop.f32.mrf.mxu0
    %2464 = vdwg.mxu0
    %2465 = vmatpush.bf16.msra.mxu0 %v1744
    %2466 = vmatpush.bf16.msra.mxu0 %v1740
    %2467 = vmatpush.bf16.msra.mxu0 %v1736
    %2468 = vmatpush.bf16.msra.mxu0 %v1732
    %2469 = vmatpush.bf16.msra.mxu0 %v1728
    %2470 = vmatpush.bf16.msra.mxu0 %v1724
    %2471 = vmatpush.bf16.msra.mxu0 %v1720
    %2472 = vmatpush.bf16.msra.mxu0 %v1716
    %2473 = vmatmul.bf16.gmra.mxu0 %v445
    %v2474 = vpop.f32.mrf.mxu0
    %v2475 = vadd.f32 %v2462, %v2474
    %v2476 = vpop.f32.mrf.mxu0
    %2477 = vdwg.mxu0
    %2478 = vmatpush.bf16.msra.mxu0 %v1776
    %2479 = vmatpush.bf16.msra.mxu0 %v1772
    %2480 = vmatpush.bf16.msra.mxu0 %v1768
    %2481 = vmatpush.bf16.msra.mxu0 %v1764
    %2482 = vmatpush.bf16.msra.mxu0 %v1760
    %2483 = vmatpush.bf16.msra.mxu0 %v1756
    %2484 = vmatpush.bf16.msra.mxu0 %v1752
    %2485 = vmatpush.bf16.msra.mxu0 %v1748
    %2486 = vmatmul.bf16.gmra.mxu0 %v446
    %v2487 = vpop.f32.mrf.mxu0
    %v2488 = vadd.f32 %v2475, %v2487
    %v2489 = vpop.f32.mrf.mxu0
    %2490 = vdwg.mxu0
    %2491 = vmatpush.bf16.msra.mxu0 %v1808
    %2492 = vmatpush.bf16.msra.mxu0 %v1804
    %2493 = vmatpush.bf16.msra.mxu0 %v1800
    %2494 = vmatpush.bf16.msra.mxu0 %v1796
    %2495 = vmatpush.bf16.msra.mxu0 %v1792
    %2496 = vmatpush.bf16.msra.mxu0 %v1788
    %2497 = vmatpush.bf16.msra.mxu0 %v1784
    %2498 = vmatpush.bf16.msra.mxu0 %v1780
    %2499 = vmatmul.bf16.gmra.mxu0 %v447
    %v2500 = vpop.f32.mrf.mxu0
    %v2501 = vadd.f32 %v2488, %v2500
    %v2502 = vpop.f32.mrf.mxu0
    %2503 = vdwg.mxu0
    %2504 = vmatpush.bf16.msra.mxu0 %v1840
    %2505 = vmatpush.bf16.msra.mxu0 %v1836
    %2506 = vmatpush.bf16.msra.mxu0 %v1832
    %2507 = vmatpush.bf16.msra.mxu0 %v1828
    %2508 = vmatpush.bf16.msra.mxu0 %v1824
    %2509 = vmatpush.bf16.msra.mxu0 %v1820
    %2510 = vmatpush.bf16.msra.mxu0 %v1816
    %2511 = vmatpush.bf16.msra.mxu0 %v1812
    %2512 = vmatmul.bf16.gmra.mxu0 %v448
    %v2513 = vpop.f32.mrf.mxu0
    %v2514 = vadd.f32 %v2501, %v2513
    %v2515 = vpop.f32.mrf.mxu0
    %2516 = vdwg.mxu0
    %2517 = vmatpush.bf16.msra.mxu0 %v1872
    %2518 = vmatpush.bf16.msra.mxu0 %v1868
    %2519 = vmatpush.bf16.msra.mxu0 %v1864
    %2520 = vmatpush.bf16.msra.mxu0 %v1860
    %2521 = vmatpush.bf16.msra.mxu0 %v1856
    %2522 = vmatpush.bf16.msra.mxu0 %v1852
    %2523 = vmatpush.bf16.msra.mxu0 %v1848
    %2524 = vmatpush.bf16.msra.mxu0 %v1844
    %2525 = vmatmul.bf16.gmra.mxu0 %v449
    %v2526 = vpop.f32.mrf.mxu0
    %v2527 = vadd.f32 %v2514, %v2526
    %v2528 = vpop.f32.mrf.mxu0
    %2529 = vdwg.mxu0
    %2530 = vmatpush.bf16.msra.mxu0 %v1904
    %2531 = vmatpush.bf16.msra.mxu0 %v1900
    %2532 = vmatpush.bf16.msra.mxu0 %v1896
    %2533 = vmatpush.bf16.msra.mxu0 %v1892
    %2534 = vmatpush.bf16.msra.mxu0 %v1888
    %2535 = vmatpush.bf16.msra.mxu0 %v1884
    %2536 = vmatpush.bf16.msra.mxu0 %v1880
    %2537 = vmatpush.bf16.msra.mxu0 %v1876
    %2538 = vmatmul.bf16.gmra.mxu0 %v450
    %v2539 = vpop.f32.mrf.mxu0
    %v2540 = vadd.f32 %v2527, %v2539
    %v2541 = vpop.f32.mrf.mxu0
    %2542 = vdwg.mxu0
    %2543 = vmatpush.bf16.msra.mxu0 %v1936
    %2544 = vmatpush.bf16.msra.mxu0 %v1932
    %2545 = vmatpush.bf16.msra.mxu0 %v1928
    %2546 = vmatpush.bf16.msra.mxu0 %v1924
    %2547 = vmatpush.bf16.msra.mxu0 %v1920
    %2548 = vmatpush.bf16.msra.mxu0 %v1916
    %2549 = vmatpush.bf16.msra.mxu0 %v1912
    %2550 = vmatpush.bf16.msra.mxu0 %v1908
    %2551 = vmatmul.bf16.gmra.mxu0 %v459
    %v2552 = vpop.f32.mrf.mxu0
    %v2553 = vadd.f32 %v2540, %v2552
    %v2554 = vpop.f32.mrf.mxu0
    %2555 = vdwg.mxu0
    %2556 = vmatpush.bf16.msra.mxu0 %v1968
    %2557 = vmatpush.bf16.msra.mxu0 %v1964
    %2558 = vmatpush.bf16.msra.mxu0 %v1960
    %2559 = vmatpush.bf16.msra.mxu0 %v1956
    %2560 = vmatpush.bf16.msra.mxu0 %v1952
    %2561 = vmatpush.bf16.msra.mxu0 %v1948
    %2562 = vmatpush.bf16.msra.mxu0 %v1944
    %2563 = vmatpush.bf16.msra.mxu0 %v1940
    %2564 = vmatmul.bf16.gmra.mxu0 %v460
    %v2565 = vpop.f32.mrf.mxu0
    %v2566 = vadd.f32 %v2553, %v2565
    %v2567 = vpop.f32.mrf.mxu0
    %2568 = vdwg.mxu0
    %2569 = vmatpush.bf16.msra.mxu0 %v2000
    %2570 = vmatpush.bf16.msra.mxu0 %v1996
    %2571 = vmatpush.bf16.msra.mxu0 %v1992
    %2572 = vmatpush.bf16.msra.mxu0 %v1988
    %2573 = vmatpush.bf16.msra.mxu0 %v1984
    %2574 = vmatpush.bf16.msra.mxu0 %v1980
    %2575 = vmatpush.bf16.msra.mxu0 %v1976
    %2576 = vmatpush.bf16.msra.mxu0 %v1972
    %2577 = vmatmul.bf16.gmra.mxu0 %v461
    %v2578 = vpop.f32.mrf.mxu0
    %v2579 = vadd.f32 %v2566, %v2578
    %v2580 = vpop.f32.mrf.mxu0
    %2581 = vdwg.mxu0
    %2582 = vmatpush.bf16.msra.mxu0 %v2032
    %2583 = vmatpush.bf16.msra.mxu0 %v2028
    %2584 = vmatpush.bf16.msra.mxu0 %v2024
    %2585 = vmatpush.bf16.msra.mxu0 %v2020
    %2586 = vmatpush.bf16.msra.mxu0 %v2016
    %2587 = vmatpush.bf16.msra.mxu0 %v2012
    %2588 = vmatpush.bf16.msra.mxu0 %v2008
    %2589 = vmatpush.bf16.msra.mxu0 %v2004
    %2590 = vmatmul.bf16.gmra.mxu0 %v462
    %v2591 = vpop.f32.mrf.mxu0
    %v2592 = vadd.f32 %v2579, %v2591
    %v2593 = vpop.f32.mrf.mxu0
    %2594 = vdwg.mxu0
    %2595 = vmatpush.bf16.msra.mxu0 0
    %2596 = vmatpush.bf16.msra.mxu0 0
    %2597 = vmatpush.bf16.msra.mxu0 0
    %2598 = vmatpush.bf16.msra.mxu0 0
    %2599 = vmatpush.bf16.msra.mxu0 0
    %2600 = vmatpush.bf16.msra.mxu0 0
    %2601 = vmatpush.bf16.msra.mxu0 %v2040
    %2602 = vmatpush.bf16.msra.mxu0 %v2036
    %2603 = vmatmul.bf16.gmra.mxu0 %v2437
    %v2604 = vpop.f32.mrf.mxu0
    %v2605 = vadd.f32 %v2592, %v2604
    %v2606 = vpop.f32.mrf.mxu0
    %2607 = vdwg.mxu0
    %2608 = vmatpush.bf16.msra.mxu0 %v1681
    %2609 = vmatpush.bf16.msra.mxu0 %v1677
    %2610 = vmatpush.bf16.msra.mxu0 %v1673
    %2611 = vmatpush.bf16.msra.mxu0 %v1669
    %2612 = vmatpush.bf16.msra.mxu0 %v1665
    %2613 = vmatpush.bf16.msra.mxu0 %v1661
    %2614 = vmatpush.bf16.msra.mxu0 %v1657
    %2615 = vmatpush.bf16.msra.mxu0 %v1653
    %2616 = vmatmul.bf16.gmra.mxu0 %v443
    %v2617 = vpop.f32.mrf.mxu0
    %v2618 = vadd.f32 %v425, %v2617
    %v2619 = vpop.f32.mrf.mxu0
    %2620 = vdwg.mxu0
    %2621 = vmatpush.bf16.msra.mxu0 %v1713
    %2622 = vmatpush.bf16.msra.mxu0 %v1709
    %2623 = vmatpush.bf16.msra.mxu0 %v1705
    %2624 = vmatpush.bf16.msra.mxu0 %v1701
    %2625 = vmatpush.bf16.msra.mxu0 %v1697
    %2626 = vmatpush.bf16.msra.mxu0 %v1693
    %2627 = vmatpush.bf16.msra.mxu0 %v1689
    %2628 = vmatpush.bf16.msra.mxu0 %v1685
    %2629 = vmatmul.bf16.gmra.mxu0 %v444
    %v2630 = vpop.f32.mrf.mxu0
    %v2631 = vadd.f32 %v2618, %v2630
    %v2632 = vpop.f32.mrf.mxu0
    %2633 = vdwg.mxu0
    %2634 = vmatpush.bf16.msra.mxu0 %v1745
    %2635 = vmatpush.bf16.msra.mxu0 %v1741
    %2636 = vmatpush.bf16.msra.mxu0 %v1737
    %2637 = vmatpush.bf16.msra.mxu0 %v1733
    %2638 = vmatpush.bf16.msra.mxu0 %v1729
    %2639 = vmatpush.bf16.msra.mxu0 %v1725
    %2640 = vmatpush.bf16.msra.mxu0 %v1721
    %2641 = vmatpush.bf16.msra.mxu0 %v1717
    %2642 = vmatmul.bf16.gmra.mxu0 %v445
    %v2643 = vpop.f32.mrf.mxu0
    %v2644 = vadd.f32 %v2631, %v2643
    %v2645 = vpop.f32.mrf.mxu0
    %2646 = vdwg.mxu0
    %2647 = vmatpush.bf16.msra.mxu0 %v1777
    %2648 = vmatpush.bf16.msra.mxu0 %v1773
    %2649 = vmatpush.bf16.msra.mxu0 %v1769
    %2650 = vmatpush.bf16.msra.mxu0 %v1765
    %2651 = vmatpush.bf16.msra.mxu0 %v1761
    %2652 = vmatpush.bf16.msra.mxu0 %v1757
    %2653 = vmatpush.bf16.msra.mxu0 %v1753
    %2654 = vmatpush.bf16.msra.mxu0 %v1749
    %2655 = vmatmul.bf16.gmra.mxu0 %v446
    %v2656 = vpop.f32.mrf.mxu0
    %v2657 = vadd.f32 %v2644, %v2656
    %v2658 = vpop.f32.mrf.mxu0
    %2659 = vdwg.mxu0
    %2660 = vmatpush.bf16.msra.mxu0 %v1809
    %2661 = vmatpush.bf16.msra.mxu0 %v1805
    %2662 = vmatpush.bf16.msra.mxu0 %v1801
    %2663 = vmatpush.bf16.msra.mxu0 %v1797
    %2664 = vmatpush.bf16.msra.mxu0 %v1793
    %2665 = vmatpush.bf16.msra.mxu0 %v1789
    %2666 = vmatpush.bf16.msra.mxu0 %v1785
    %2667 = vmatpush.bf16.msra.mxu0 %v1781
    %2668 = vmatmul.bf16.gmra.mxu0 %v447
    %v2669 = vpop.f32.mrf.mxu0
    %v2670 = vadd.f32 %v2657, %v2669
    %v2671 = vpop.f32.mrf.mxu0
    %2672 = vdwg.mxu0
    %2673 = vmatpush.bf16.msra.mxu0 %v1841
    %2674 = vmatpush.bf16.msra.mxu0 %v1837
    %2675 = vmatpush.bf16.msra.mxu0 %v1833
    %2676 = vmatpush.bf16.msra.mxu0 %v1829
    %2677 = vmatpush.bf16.msra.mxu0 %v1825
    %2678 = vmatpush.bf16.msra.mxu0 %v1821
    %2679 = vmatpush.bf16.msra.mxu0 %v1817
    %2680 = vmatpush.bf16.msra.mxu0 %v1813
    %2681 = vmatmul.bf16.gmra.mxu0 %v448
    %v2682 = vpop.f32.mrf.mxu0
    %v2683 = vadd.f32 %v2670, %v2682
    %v2684 = vpop.f32.mrf.mxu0
    %2685 = vdwg.mxu0
    %2686 = vmatpush.bf16.msra.mxu0 %v1873
    %2687 = vmatpush.bf16.msra.mxu0 %v1869
    %2688 = vmatpush.bf16.msra.mxu0 %v1865
    %2689 = vmatpush.bf16.msra.mxu0 %v1861
    %2690 = vmatpush.bf16.msra.mxu0 %v1857
    %2691 = vmatpush.bf16.msra.mxu0 %v1853
    %2692 = vmatpush.bf16.msra.mxu0 %v1849
    %2693 = vmatpush.bf16.msra.mxu0 %v1845
    %2694 = vmatmul.bf16.gmra.mxu0 %v449
    %v2695 = vpop.f32.mrf.mxu0
    %v2696 = vadd.f32 %v2683, %v2695
    %v2697 = vpop.f32.mrf.mxu0
    %2698 = vdwg.mxu0
    %2699 = vmatpush.bf16.msra.mxu0 %v1905
    %2700 = vmatpush.bf16.msra.mxu0 %v1901
    %2701 = vmatpush.bf16.msra.mxu0 %v1897
    %2702 = vmatpush.bf16.msra.mxu0 %v1893
    %2703 = vmatpush.bf16.msra.mxu0 %v1889
    %2704 = vmatpush.bf16.msra.mxu0 %v1885
    %2705 = vmatpush.bf16.msra.mxu0 %v1881
    %2706 = vmatpush.bf16.msra.mxu0 %v1877
    %2707 = vmatmul.bf16.gmra.mxu0 %v450
    %v2708 = vpop.f32.mrf.mxu0
    %v2709 = vadd.f32 %v2696, %v2708
    %v2710 = vpop.f32.mrf.mxu0
    %2711 = vdwg.mxu0
    %2712 = vmatpush.bf16.msra.mxu0 %v1937
    %2713 = vmatpush.bf16.msra.mxu0 %v1933
    %2714 = vmatpush.bf16.msra.mxu0 %v1929
    %2715 = vmatpush.bf16.msra.mxu0 %v1925
    %2716 = vmatpush.bf16.msra.mxu0 %v1921
    %2717 = vmatpush.bf16.msra.mxu0 %v1917
    %2718 = vmatpush.bf16.msra.mxu0 %v1913
    %2719 = vmatpush.bf16.msra.mxu0 %v1909
    %2720 = vmatmul.bf16.gmra.mxu0 %v459
    %v2721 = vpop.f32.mrf.mxu0
    %v2722 = vadd.f32 %v2709, %v2721
    %v2723 = vpop.f32.mrf.mxu0
    %2724 = vdwg.mxu0
    %2725 = vmatpush.bf16.msra.mxu0 %v1969
    %2726 = vmatpush.bf16.msra.mxu0 %v1965
    %2727 = vmatpush.bf16.msra.mxu0 %v1961
    %2728 = vmatpush.bf16.msra.mxu0 %v1957
    %2729 = vmatpush.bf16.msra.mxu0 %v1953
    %2730 = vmatpush.bf16.msra.mxu0 %v1949
    %2731 = vmatpush.bf16.msra.mxu0 %v1945
    %2732 = vmatpush.bf16.msra.mxu0 %v1941
    %2733 = vmatmul.bf16.gmra.mxu0 %v460
    %v2734 = vpop.f32.mrf.mxu0
    %v2735 = vadd.f32 %v2722, %v2734
    %v2736 = vpop.f32.mrf.mxu0
    %2737 = vdwg.mxu0
    %2738 = vmatpush.bf16.msra.mxu0 %v2001
    %2739 = vmatpush.bf16.msra.mxu0 %v1997
    %2740 = vmatpush.bf16.msra.mxu0 %v1993
    %2741 = vmatpush.bf16.msra.mxu0 %v1989
    %2742 = vmatpush.bf16.msra.mxu0 %v1985
    %2743 = vmatpush.bf16.msra.mxu0 %v1981
    %2744 = vmatpush.bf16.msra.mxu0 %v1977
    %2745 = vmatpush.bf16.msra.mxu0 %v1973
    %2746 = vmatmul.bf16.gmra.mxu0 %v461
    %v2747 = vpop.f32.mrf.mxu0
    %v2748 = vadd.f32 %v2735, %v2747
    %v2749 = vpop.f32.mrf.mxu0
    %2750 = vdwg.mxu0
    %2751 = vmatpush.bf16.msra.mxu0 %v2033
    %2752 = vmatpush.bf16.msra.mxu0 %v2029
    %2753 = vmatpush.bf16.msra.mxu0 %v2025
    %2754 = vmatpush.bf16.msra.mxu0 %v2021
    %2755 = vmatpush.bf16.msra.mxu0 %v2017
    %2756 = vmatpush.bf16.msra.mxu0 %v2013
    %2757 = vmatpush.bf16.msra.mxu0 %v2009
    %2758 = vmatpush.bf16.msra.mxu0 %v2005
    %2759 = vmatmul.bf16.gmra.mxu0 %v462
    %v2760 = vpop.f32.mrf.mxu0
    %v2761 = vadd.f32 %v2748, %v2760
    %v2762 = vpop.f32.mrf.mxu0
    %2763 = vdwg.mxu0
    %2764 = vmatpush.bf16.msra.mxu0 0
    %2765 = vmatpush.bf16.msra.mxu0 0
    %2766 = vmatpush.bf16.msra.mxu0 0
    %2767 = vmatpush.bf16.msra.mxu0 0
    %2768 = vmatpush.bf16.msra.mxu0 0
    %2769 = vmatpush.bf16.msra.mxu0 0
    %2770 = vmatpush.bf16.msra.mxu0 %v2041
    %2771 = vmatpush.bf16.msra.mxu0 %v2037
    %2772 = vmatmul.bf16.gmra.mxu0 %v2437
    %v2773 = vpop.f32.mrf.mxu0
    %v2774 = vadd.f32 %v2761, %v2773
    %v2775 = vpop.f32.mrf.mxu0
    %2776 = vdwg.mxu0
    %2777 = vmatpush.bf16.msra.mxu0 %v1682
    %2778 = vmatpush.bf16.msra.mxu0 %v1678
    %2779 = vmatpush.bf16.msra.mxu0 %v1674
    %2780 = vmatpush.bf16.msra.mxu0 %v1670
    %2781 = vmatpush.bf16.msra.mxu0 %v1666
    %2782 = vmatpush.bf16.msra.mxu0 %v1662
    %2783 = vmatpush.bf16.msra.mxu0 %v1658
    %2784 = vmatpush.bf16.msra.mxu0 %v1654
    %2785 = vmatmul.bf16.gmra.mxu0 %v443
    %v2786 = vpop.f32.mrf.mxu0
    %v2787 = vadd.f32 %v426, %v2786
    %v2788 = vpop.f32.mrf.mxu0
    %2789 = vdwg.mxu0
    %2790 = vmatpush.bf16.msra.mxu0 %v1714
    %2791 = vmatpush.bf16.msra.mxu0 %v1710
    %2792 = vmatpush.bf16.msra.mxu0 %v1706
    %2793 = vmatpush.bf16.msra.mxu0 %v1702
    %2794 = vmatpush.bf16.msra.mxu0 %v1698
    %2795 = vmatpush.bf16.msra.mxu0 %v1694
    %2796 = vmatpush.bf16.msra.mxu0 %v1690
    %2797 = vmatpush.bf16.msra.mxu0 %v1686
    %2798 = vmatmul.bf16.gmra.mxu0 %v444
    %v2799 = vpop.f32.mrf.mxu0
    %v2800 = vadd.f32 %v2787, %v2799
    %v2801 = vpop.f32.mrf.mxu0
    %2802 = vdwg.mxu0
    %2803 = vmatpush.bf16.msra.mxu0 %v1746
    %2804 = vmatpush.bf16.msra.mxu0 %v1742
    %2805 = vmatpush.bf16.msra.mxu0 %v1738
    %2806 = vmatpush.bf16.msra.mxu0 %v1734
    %2807 = vmatpush.bf16.msra.mxu0 %v1730
    %2808 = vmatpush.bf16.msra.mxu0 %v1726
    %2809 = vmatpush.bf16.msra.mxu0 %v1722
    %2810 = vmatpush.bf16.msra.mxu0 %v1718
    %2811 = vmatmul.bf16.gmra.mxu0 %v445
    %v2812 = vpop.f32.mrf.mxu0
    %v2813 = vadd.f32 %v2800, %v2812
    %v2814 = vpop.f32.mrf.mxu0
    %2815 = vdwg.mxu0
    %2816 = vmatpush.bf16.msra.mxu0 %v1778
    %2817 = vmatpush.bf16.msra.mxu0 %v1774
    %2818 = vmatpush.bf16.msra.mxu0 %v1770
    %2819 = vmatpush.bf16.msra.mxu0 %v1766
    %2820 = vmatpush.bf16.msra.mxu0 %v1762
    %2821 = vmatpush.bf16.msra.mxu0 %v1758
    %2822 = vmatpush.bf16.msra.mxu0 %v1754
    %2823 = vmatpush.bf16.msra.mxu0 %v1750
    %2824 = vmatmul.bf16.gmra.mxu0 %v446
    %v2825 = vpop.f32.mrf.mxu0
    %v2826 = vadd.f32 %v2813, %v2825
    %v2827 = vpop.f32.mrf.mxu0
    %2828 = vdwg.mxu0
    %2829 = vmatpush.bf16.msra.mxu0 %v1810
    %2830 = vmatpush.bf16.msra.mxu0 %v1806
    %2831 = vmatpush.bf16.msra.mxu0 %v1802
    %2832 = vmatpush.bf16.msra.mxu0 %v1798
    %2833 = vmatpush.bf16.msra.mxu0 %v1794
    %2834 = vmatpush.bf16.msra.mxu0 %v1790
    %2835 = vmatpush.bf16.msra.mxu0 %v1786
    %2836 = vmatpush.bf16.msra.mxu0 %v1782
    %2837 = vmatmul.bf16.gmra.mxu0 %v447
    %v2838 = vpop.f32.mrf.mxu0
    %v2839 = vadd.f32 %v2826, %v2838
    %v2840 = vpop.f32.mrf.mxu0
    %2841 = vdwg.mxu0
    %2842 = vmatpush.bf16.msra.mxu0 %v1842
    %2843 = vmatpush.bf16.msra.mxu0 %v1838
    %2844 = vmatpush.bf16.msra.mxu0 %v1834
    %2845 = vmatpush.bf16.msra.mxu0 %v1830
    %2846 = vmatpush.bf16.msra.mxu0 %v1826
    %2847 = vmatpush.bf16.msra.mxu0 %v1822
    %2848 = vmatpush.bf16.msra.mxu0 %v1818
    %2849 = vmatpush.bf16.msra.mxu0 %v1814
    %2850 = vmatmul.bf16.gmra.mxu0 %v448
    %v2851 = vpop.f32.mrf.mxu0
    %v2852 = vadd.f32 %v2839, %v2851
    %v2853 = vpop.f32.mrf.mxu0
    %2854 = vdwg.mxu0
    %2855 = vmatpush.bf16.msra.mxu0 %v1874
    %2856 = vmatpush.bf16.msra.mxu0 %v1870
    %2857 = vmatpush.bf16.msra.mxu0 %v1866
    %2858 = vmatpush.bf16.msra.mxu0 %v1862
    %2859 = vmatpush.bf16.msra.mxu0 %v1858
    %2860 = vmatpush.bf16.msra.mxu0 %v1854
    %2861 = vmatpush.bf16.msra.mxu0 %v1850
    %2862 = vmatpush.bf16.msra.mxu0 %v1846
    %2863 = vmatmul.bf16.gmra.mxu0 %v449
    %v2864 = vpop.f32.mrf.mxu0
    %v2865 = vadd.f32 %v2852, %v2864
    %v2866 = vpop.f32.mrf.mxu0
    %2867 = vdwg.mxu0
    %2868 = vmatpush.bf16.msra.mxu0 %v1906
    %2869 = vmatpush.bf16.msra.mxu0 %v1902
    %2870 = vmatpush.bf16.msra.mxu0 %v1898
    %2871 = vmatpush.bf16.msra.mxu0 %v1894
    %2872 = vmatpush.bf16.msra.mxu0 %v1890
    %2873 = vmatpush.bf16.msra.mxu0 %v1886
    %2874 = vmatpush.bf16.msra.mxu0 %v1882
    %2875 = vmatpush.bf16.msra.mxu0 %v1878
    %2876 = vmatmul.bf16.gmra.mxu0 %v450
    %v2877 = vpop.f32.mrf.mxu0
    %v2878 = vadd.f32 %v2865, %v2877
    %v2879 = vpop.f32.mrf.mxu0
    %2880 = vdwg.mxu0
    %2881 = vmatpush.bf16.msra.mxu0 %v1938
    %2882 = vmatpush.bf16.msra.mxu0 %v1934
    %2883 = vmatpush.bf16.msra.mxu0 %v1930
    %2884 = vmatpush.bf16.msra.mxu0 %v1926
    %2885 = vmatpush.bf16.msra.mxu0 %v1922
    %2886 = vmatpush.bf16.msra.mxu0 %v1918
    %2887 = vmatpush.bf16.msra.mxu0 %v1914
    %2888 = vmatpush.bf16.msra.mxu0 %v1910
    %2889 = vmatmul.bf16.gmra.mxu0 %v459
    %v2890 = vpop.f32.mrf.mxu0
    %v2891 = vadd.f32 %v2878, %v2890
    %v2892 = vpop.f32.mrf.mxu0
    %2893 = vdwg.mxu0
    %2894 = vmatpush.bf16.msra.mxu0 %v1970
    %2895 = vmatpush.bf16.msra.mxu0 %v1966
    %2896 = vmatpush.bf16.msra.mxu0 %v1962
    %2897 = vmatpush.bf16.msra.mxu0 %v1958
    %2898 = vmatpush.bf16.msra.mxu0 %v1954
    %2899 = vmatpush.bf16.msra.mxu0 %v1950
    %2900 = vmatpush.bf16.msra.mxu0 %v1946
    %2901 = vmatpush.bf16.msra.mxu0 %v1942
    %2902 = vmatmul.bf16.gmra.mxu0 %v460
    %v2903 = vpop.f32.mrf.mxu0
    %v2904 = vadd.f32 %v2891, %v2903
    %v2905 = vpop.f32.mrf.mxu0
    %2906 = vdwg.mxu0
    %2907 = vmatpush.bf16.msra.mxu0 %v2002
    %2908 = vmatpush.bf16.msra.mxu0 %v1998
    %2909 = vmatpush.bf16.msra.mxu0 %v1994
    %2910 = vmatpush.bf16.msra.mxu0 %v1990
    %2911 = vmatpush.bf16.msra.mxu0 %v1986
    %2912 = vmatpush.bf16.msra.mxu0 %v1982
    %2913 = vmatpush.bf16.msra.mxu0 %v1978
    %2914 = vmatpush.bf16.msra.mxu0 %v1974
    %2915 = vmatmul.bf16.gmra.mxu0 %v461
    %v2916 = vpop.f32.mrf.mxu0
    %v2917 = vadd.f32 %v2904, %v2916
    %v2918 = vpop.f32.mrf.mxu0
    %2919 = vdwg.mxu0
    %2920 = vmatpush.bf16.msra.mxu0 %v2034
    %2921 = vmatpush.bf16.msra.mxu0 %v2030
    %2922 = vmatpush.bf16.msra.mxu0 %v2026
    %2923 = vmatpush.bf16.msra.mxu0 %v2022
    %2924 = vmatpush.bf16.msra.mxu0 %v2018
    %2925 = vmatpush.bf16.msra.mxu0 %v2014
    %2926 = vmatpush.bf16.msra.mxu0 %v2010
    %2927 = vmatpush.bf16.msra.mxu0 %v2006
    %2928 = vmatmul.bf16.gmra.mxu0 %v462
    %v2929 = vpop.f32.mrf.mxu0
    %v2930 = vadd.f32 %v2917, %v2929
    %v2931 = vpop.f32.mrf.mxu0
    %2932 = vdwg.mxu0
    %2933 = vmatpush.bf16.msra.mxu0 0
    %2934 = vmatpush.bf16.msra.mxu0 0
    %2935 = vmatpush.bf16.msra.mxu0 0
    %2936 = vmatpush.bf16.msra.mxu0 0
    %2937 = vmatpush.bf16.msra.mxu0 0
    %2938 = vmatpush.bf16.msra.mxu0 0
    %2939 = vmatpush.bf16.msra.mxu0 %v2042
    %2940 = vmatpush.bf16.msra.mxu0 %v2038
    %2941 = vmatmul.bf16.gmra.mxu0 %v2437
    %v2942 = vpop.f32.mrf.mxu0
    %v2943 = vadd.f32 %v2930, %v2942
    %v2944 = vpop.f32.mrf.mxu0
    %2945 = vdwg.mxu0
    %2946 = vmatpush.bf16.msra.mxu0 %v1683
    %2947 = vmatpush.bf16.msra.mxu0 %v1679
    %2948 = vmatpush.bf16.msra.mxu0 %v1675
    %2949 = vmatpush.bf16.msra.mxu0 %v1671
    %2950 = vmatpush.bf16.msra.mxu0 %v1667
    %2951 = vmatpush.bf16.msra.mxu0 %v1663
    %2952 = vmatpush.bf16.msra.mxu0 %v1659
    %2953 = vmatpush.bf16.msra.mxu0 %v1655
    %2954 = vmatmul.bf16.gmra.mxu0 %v443
    %v2955 = vpop.f32.mrf.mxu0
    %v2956 = vadd.f32 %v427, %v2955
    %v2957 = vpop.f32.mrf.mxu0
    %2958 = vdwg.mxu0
    %2959 = vmatpush.bf16.msra.mxu0 %v1715
    %2960 = vmatpush.bf16.msra.mxu0 %v1711
    %2961 = vmatpush.bf16.msra.mxu0 %v1707
    %2962 = vmatpush.bf16.msra.mxu0 %v1703
    %2963 = vmatpush.bf16.msra.mxu0 %v1699
    %2964 = vmatpush.bf16.msra.mxu0 %v1695
    %2965 = vmatpush.bf16.msra.mxu0 %v1691
    %2966 = vmatpush.bf16.msra.mxu0 %v1687
    %2967 = vmatmul.bf16.gmra.mxu0 %v444
    %v2968 = vpop.f32.mrf.mxu0
    %v2969 = vadd.f32 %v2956, %v2968
    %v2970 = vpop.f32.mrf.mxu0
    %2971 = vdwg.mxu0
    %2972 = vmatpush.bf16.msra.mxu0 %v1747
    %2973 = vmatpush.bf16.msra.mxu0 %v1743
    %2974 = vmatpush.bf16.msra.mxu0 %v1739
    %2975 = vmatpush.bf16.msra.mxu0 %v1735
    %2976 = vmatpush.bf16.msra.mxu0 %v1731
    %2977 = vmatpush.bf16.msra.mxu0 %v1727
    %2978 = vmatpush.bf16.msra.mxu0 %v1723
    %2979 = vmatpush.bf16.msra.mxu0 %v1719
    %2980 = vmatmul.bf16.gmra.mxu0 %v445
    %v2981 = vpop.f32.mrf.mxu0
    %v2982 = vadd.f32 %v2969, %v2981
    %v2983 = vpop.f32.mrf.mxu0
    %2984 = vdwg.mxu0
    %2985 = vmatpush.bf16.msra.mxu0 %v1779
    %2986 = vmatpush.bf16.msra.mxu0 %v1775
    %2987 = vmatpush.bf16.msra.mxu0 %v1771
    %2988 = vmatpush.bf16.msra.mxu0 %v1767
    %2989 = vmatpush.bf16.msra.mxu0 %v1763
    %2990 = vmatpush.bf16.msra.mxu0 %v1759
    %2991 = vmatpush.bf16.msra.mxu0 %v1755
    %2992 = vmatpush.bf16.msra.mxu0 %v1751
    %2993 = vmatmul.bf16.gmra.mxu0 %v446
    %v2994 = vpop.f32.mrf.mxu0
    %v2995 = vadd.f32 %v2982, %v2994
    %v2996 = vpop.f32.mrf.mxu0
    %2997 = vdwg.mxu0
    %2998 = vmatpush.bf16.msra.mxu0 %v1811
    %2999 = vmatpush.bf16.msra.mxu0 %v1807
    %3000 = vmatpush.bf16.msra.mxu0 %v1803
    %3001 = vmatpush.bf16.msra.mxu0 %v1799
    %3002 = vmatpush.bf16.msra.mxu0 %v1795
    %3003 = vmatpush.bf16.msra.mxu0 %v1791
    %3004 = vmatpush.bf16.msra.mxu0 %v1787
    %3005 = vmatpush.bf16.msra.mxu0 %v1783
    %3006 = vmatmul.bf16.gmra.mxu0 %v447
    %v3007 = vpop.f32.mrf.mxu0
    %v3008 = vadd.f32 %v2995, %v3007
    %v3009 = vpop.f32.mrf.mxu0
    %3010 = vdwg.mxu0
    %3011 = vmatpush.bf16.msra.mxu0 %v1843
    %3012 = vmatpush.bf16.msra.mxu0 %v1839
    %3013 = vmatpush.bf16.msra.mxu0 %v1835
    %3014 = vmatpush.bf16.msra.mxu0 %v1831
    %3015 = vmatpush.bf16.msra.mxu0 %v1827
    %3016 = vmatpush.bf16.msra.mxu0 %v1823
    %3017 = vmatpush.bf16.msra.mxu0 %v1819
    %3018 = vmatpush.bf16.msra.mxu0 %v1815
    %3019 = vmatmul.bf16.gmra.mxu0 %v448
    %v3020 = vpop.f32.mrf.mxu0
    %v3021 = vadd.f32 %v3008, %v3020
    %v3022 = vpop.f32.mrf.mxu0
    %3023 = vdwg.mxu0
    %3024 = vmatpush.bf16.msra.mxu0 %v1875
    %3025 = vmatpush.bf16.msra.mxu0 %v1871
    %3026 = vmatpush.bf16.msra.mxu0 %v1867
    %3027 = vmatpush.bf16.msra.mxu0 %v1863
    %3028 = vmatpush.bf16.msra.mxu0 %v1859
    %3029 = vmatpush.bf16.msra.mxu0 %v1855
    %3030 = vmatpush.bf16.msra.mxu0 %v1851
    %3031 = vmatpush.bf16.msra.mxu0 %v1847
    %3032 = vmatmul.bf16.gmra.mxu0 %v449
    %v3033 = vpop.f32.mrf.mxu0
    %v3034 = vadd.f32 %v3021, %v3033
    %v3035 = vpop.f32.mrf.mxu0
    %3036 = vdwg.mxu0
    %3037 = vmatpush.bf16.msra.mxu0 %v1907
    %3038 = vmatpush.bf16.msra.mxu0 %v1903
    %3039 = vmatpush.bf16.msra.mxu0 %v1899
    %3040 = vmatpush.bf16.msra.mxu0 %v1895
    %3041 = vmatpush.bf16.msra.mxu0 %v1891
    %3042 = vmatpush.bf16.msra.mxu0 %v1887
    %3043 = vmatpush.bf16.msra.mxu0 %v1883
    %3044 = vmatpush.bf16.msra.mxu0 %v1879
    %3045 = vmatmul.bf16.gmra.mxu0 %v450
    %v3046 = vpop.f32.mrf.mxu0
    %v3047 = vadd.f32 %v3034, %v3046
    %v3048 = vpop.f32.mrf.mxu0
    %3049 = vdwg.mxu0
    %3050 = vmatpush.bf16.msra.mxu0 %v1939
    %3051 = vmatpush.bf16.msra.mxu0 %v1935
    %3052 = vmatpush.bf16.msra.mxu0 %v1931
    %3053 = vmatpush.bf16.msra.mxu0 %v1927
    %3054 = vmatpush.bf16.msra.mxu0 %v1923
    %3055 = vmatpush.bf16.msra.mxu0 %v1919
    %3056 = vmatpush.bf16.msra.mxu0 %v1915
    %3057 = vmatpush.bf16.msra.mxu0 %v1911
    %3058 = vmatmul.bf16.gmra.mxu0 %v459
    %v3059 = vpop.f32.mrf.mxu0
    %v3060 = vadd.f32 %v3047, %v3059
    %v3061 = vpop.f32.mrf.mxu0
    %3062 = vdwg.mxu0
    %3063 = vmatpush.bf16.msra.mxu0 %v1971
    %3064 = vmatpush.bf16.msra.mxu0 %v1967
    %3065 = vmatpush.bf16.msra.mxu0 %v1963
    %3066 = vmatpush.bf16.msra.mxu0 %v1959
    %3067 = vmatpush.bf16.msra.mxu0 %v1955
    %3068 = vmatpush.bf16.msra.mxu0 %v1951
    %3069 = vmatpush.bf16.msra.mxu0 %v1947
    %3070 = vmatpush.bf16.msra.mxu0 %v1943
    %3071 = vmatmul.bf16.gmra.mxu0 %v460
    %v3072 = vpop.f32.mrf.mxu0
    %v3073 = vadd.f32 %v3060, %v3072
    %v3074 = vpop.f32.mrf.mxu0
    %3075 = vdwg.mxu0
    %3076 = vmatpush.bf16.msra.mxu0 %v2003
    %3077 = vmatpush.bf16.msra.mxu0 %v1999
    %3078 = vmatpush.bf16.msra.mxu0 %v1995
    %3079 = vmatpush.bf16.msra.mxu0 %v1991
    %3080 = vmatpush.bf16.msra.mxu0 %v1987
    %3081 = vmatpush.bf16.msra.mxu0 %v1983
    %3082 = vmatpush.bf16.msra.mxu0 %v1979
    %3083 = vmatpush.bf16.msra.mxu0 %v1975
    %3084 = vmatmul.bf16.gmra.mxu0 %v461
    %v3085 = vpop.f32.mrf.mxu0
    %v3086 = vadd.f32 %v3073, %v3085
    %v3087 = vpop.f32.mrf.mxu0
    %3088 = vdwg.mxu0
    %3089 = vmatpush.bf16.msra.mxu0 %v2035
    %3090 = vmatpush.bf16.msra.mxu0 %v2031
    %3091 = vmatpush.bf16.msra.mxu0 %v2027
    %3092 = vmatpush.bf16.msra.mxu0 %v2023
    %3093 = vmatpush.bf16.msra.mxu0 %v2019
    %3094 = vmatpush.bf16.msra.mxu0 %v2015
    %3095 = vmatpush.bf16.msra.mxu0 %v2011
    %3096 = vmatpush.bf16.msra.mxu0 %v2007
    %3097 = vmatmul.bf16.gmra.mxu0 %v462
    %v3098 = vpop.f32.mrf.mxu0
    %v3099 = vadd.f32 %v3086, %v3098
    %v3100 = vpop.f32.mrf.mxu0
    %3101 = vdwg.mxu0
    %3102 = vmatpush.bf16.msra.mxu0 0
    %3103 = vmatpush.bf16.msra.mxu0 0
    %3104 = vmatpush.bf16.msra.mxu0 0
    %3105 = vmatpush.bf16.msra.mxu0 0
    %3106 = vmatpush.bf16.msra.mxu0 0
    %3107 = vmatpush.bf16.msra.mxu0 0
    %3108 = vmatpush.bf16.msra.mxu0 %v2043
    %3109 = vmatpush.bf16.msra.mxu0 %v2039
    %3110 = vmatmul.bf16.gmra.mxu0 %v2437
    %v3111 = vpop.f32.mrf.mxu0
    %v3112 = vadd.f32 %v3099, %v3111
    %v3113 = vpop.f32.mrf.mxu0
    %3114 = vdwg.mxu0
    %v3115 = vmax.f32 %v2605, 0.0
    %v3116 = vmax.f32 %v2774, 0.0
    %v3117 = vmax.f32 %v2943, 0.0
    %v3118 = vmax.f32 %v3112, 0.0
    %v3119 = vld [vmem:[%s3] sm:$0xff]
    %v3120 = vld [vmem:[%s3 + $0x8] sm:$0xff]
    %v3121 = vld [vmem:[%s3 + $0x10] sm:$0xff]
    %v3122 = vld [vmem:[%s3 + $0x18] sm:$0xff]
    %v3123 = vld [vmem:[%s3 + $0x20] sm:$0xff]
    %v3124 = vld [vmem:[%s3 + $0x28] sm:$0xff]
    %v3125 = vld [vmem:[%s3 + $0x30] sm:$0xff]
    %v3126 = vld [vmem:[%s3 + $0x38] sm:$0xff]
    %v3127 = vld [vmem:[%s3 + $0x40] sm:$0xff]
    %v3128 = vld [vmem:[%s3 + $0x48] sm:$0xff]
    %v3129 = vld [vmem:[%s3 + $0x50] sm:$0xff]
    %v3130 = vld [vmem:[%s3 + $0x58] sm:$0xff]
    %v3131 = vld [vmem:[%s3 + $0x60] sm:$0xff]
    %v3132 = vld [vmem:[%s3 + $0x68] sm:$0xff]
    %v3133 = vld [vmem:[%s3 + $0x70] sm:$0xff]
    %v3134 = vld [vmem:[%s3 + $0x78] sm:$0xff]
    %v3135 = vld [vmem:[%s3 + $0x80] sm:$0xff]
    %v3136 = vld [vmem:[%s3 + $0x88] sm:$0xff]
    %v3137 = vld [vmem:[%s3 + $0x90] sm:$0xff]
    %v3138 = vld [vmem:[%s3 + $0x98] sm:$0xff]
    %v3139 = vld [vmem:[%s3 + $0xa0] sm:$0xff]
    %v3140 = vld [vmem:[%s3 + $0xa8] sm:$0xff]
    %v3141 = vld [vmem:[%s3 + $0xb0] sm:$0xff]
    %v3142 = vld [vmem:[%s3 + $0xb8] sm:$0xff]
    %v3143 = vld [vmem:[%s3 + $0xc0] sm:$0xff]
    %v3144 = vld [vmem:[%s3 + $0xc8] sm:$0xff]
    %v3145 = vld [vmem:[%s3 + $0xd0] sm:$0xff]
    %v3146 = vld [vmem:[%s3 + $0xd8] sm:$0xff]
    %v3147 = vld [vmem:[%s3 + $0xe0] sm:$0xff]
    %v3148 = vld [vmem:[%s3 + $0xe8] sm:$0xff]
    %v3149 = vld [vmem:[%s3 + $0xf0] sm:$0xff]
    %v3150 = vld [vmem:[%s3 + $0xf8] sm:$0xff]
    %v3151 = vld [vmem:[%s3 + $0x100] sm:$0xff]
    %v3152 = vld [vmem:[%s3 + $0x108] sm:$0xff]
    %v3153 = vld [vmem:[%s3 + $0x110] sm:$0xff]
    %v3154 = vld [vmem:[%s3 + $0x118] sm:$0xff]
    %v3155 = vld [vmem:[%s3 + $0x120] sm:$0xff]
    %v3156 = vld [vmem:[%s3 + $0x128] sm:$0xff]
    %v3157 = vld [vmem:[%s3 + $0x130] sm:$0xff]
    %v3158 = vld [vmem:[%s3 + $0x138] sm:$0xff]
    %v3159 = vld [vmem:[%s3 + $0x140] sm:$0xff]
    %v3160 = vld [vmem:[%s3 + $0x148] sm:$0xff]
    %v3161 = vld [vmem:[%s3 + $0x150] sm:$0xff]
    %v3162 = vld [vmem:[%s3 + $0x158] sm:$0xff]
    %v3163 = vld [vmem:[%s3 + $0x160] sm:$0xff]
    %v3164 = vld [vmem:[%s3 + $0x168] sm:$0xff]
    %v3165 = vld [vmem:[%s3 + $0x170] sm:$0xff]
    %v3166 = vld [vmem:[%s3 + $0x178] sm:$0xff]
    %v3167 = vld [vmem:[%s3 + $0x180] sm:$0xff]
    %v3168 = vld [vmem:[%s3 + $0x188] sm:$0xff]
    %v3169 = vld [vmem:[%s3 + $0x190] sm:$0xff]
    %v3170 = vld [vmem:[%s3 + $0x198] sm:$0xff]
    %v3171 = vld [vmem:[%s3 + $0x1a0] sm:$0xff]
    %v3172 = vld [vmem:[%s3 + $0x1a8] sm:$0xff]
    %v3173 = vld [vmem:[%s3 + $0x1b0] sm:$0xff]
    %v3174 = vld [vmem:[%s3 + $0x1b8] sm:$0xff]
    %v3175 = vld [vmem:[%s3 + $0x1c0] sm:$0xff]
    %v3176 = vld [vmem:[%s3 + $0x1c8] sm:$0xff]
    %v3177 = vld [vmem:[%s3 + $0x1d0] sm:$0xff]
    %v3178 = vld [vmem:[%s3 + $0x1d8] sm:$0xff]
    %v3179 = vld [vmem:[%s3 + $0x1e0] sm:$0xff]
    %v3180 = vld [vmem:[%s3 + $0x1e8] sm:$0xff]
    %v3181 = vld [vmem:[%s3 + $0x1f0] sm:$0xff]
    %v3182 = vld [vmem:[%s3 + $0x1f8] sm:$0xff]
    %v3183 = vld [vmem:[%s4] sm:$0x1]
    %v3185 = vperm.slane %v3183, 0
    %3187 = vmatpush.msra.mxu0 %v3134
    %3188 = vmatpush.msra.mxu0 %v3133
    %3189 = vmatpush.msra.mxu0 %v3132
    %3190 = vmatpush.msra.mxu0 %v3131
    %3191 = vmatpush.msra.mxu0 %v3130
    %3192 = vmatpush.msra.mxu0 %v3129
    %3193 = vmatpush.msra.mxu0 %v3128
    %3194 = vmatpush.msra.mxu0 %v3127
    %3195 = vmatpush.msra.mxu0 %v3126
    %3196 = vmatpush.msra.mxu0 %v3125
    %3197 = vmatpush.msra.mxu0 %v3124
    %3198 = vmatpush.msra.mxu0 %v3123
    %3199 = vmatpush.msra.mxu0 %v3122
    %3200 = vmatpush.msra.mxu0 %v3121
    %3201 = vmatpush.msra.mxu0 %v3120
    %3202 = vmatpush.msra.mxu0 %v3119
    %3203 = vmatmul.f32.gmra.mxu0 %v3115
    %v3204 = vpop.f32.mrf.mxu0
    %v3205 = vadd.f32 %v3185, %v3204
    %3206 = vdwg.mxu0
    %3207 = vmatpush.msra.mxu0 %v3150
    %3208 = vmatpush.msra.mxu0 %v3149
    %3209 = vmatpush.msra.mxu0 %v3148
    %3210 = vmatpush.msra.mxu0 %v3147
    %3211 = vmatpush.msra.mxu0 %v3146
    %3212 = vmatpush.msra.mxu0 %v3145
    %3213 = vmatpush.msra.mxu0 %v3144
    %3214 = vmatpush.msra.mxu0 %v3143
    %3215 = vmatpush.msra.mxu0 %v3142
    %3216 = vmatpush.msra.mxu0 %v3141
    %3217 = vmatpush.msra.mxu0 %v3140
    %3218 = vmatpush.msra.mxu0 %v3139
    %3219 = vmatpush.msra.mxu0 %v3138
    %3220 = vmatpush.msra.mxu0 %v3137
    %3221 = vmatpush.msra.mxu0 %v3136
    %3222 = vmatpush.msra.mxu0 %v3135
    %3223 = vmatmul.f32.gmra.mxu0 %v3116
    %v3224 = vpop.f32.mrf.mxu0
    %v3225 = vadd.f32 %v3205, %v3224
    %3226 = vdwg.mxu0
    %3227 = vmatpush.msra.mxu0 %v3166
    %3228 = vmatpush.msra.mxu0 %v3165
    %3229 = vmatpush.msra.mxu0 %v3164
    %3230 = vmatpush.msra.mxu0 %v3163
    %3231 = vmatpush.msra.mxu0 %v3162
    %3232 = vmatpush.msra.mxu0 %v3161
    %3233 = vmatpush.msra.mxu0 %v3160
    %3234 = vmatpush.msra.mxu0 %v3159
    %3235 = vmatpush.msra.mxu0 %v3158
    %3236 = vmatpush.msra.mxu0 %v3157
    %3237 = vmatpush.msra.mxu0 %v3156
    %3238 = vmatpush.msra.mxu0 %v3155
    %3239 = vmatpush.msra.mxu0 %v3154
    %3240 = vmatpush.msra.mxu0 %v3153
    %3241 = vmatpush.msra.mxu0 %v3152
    %3242 = vmatpush.msra.mxu0 %v3151
    %3243 = vmatmul.f32.gmra.mxu0 %v3117
    %v3244 = vpop.f32.mrf.mxu0
    %v3245 = vadd.f32 %v3225, %v3244
    %3246 = vdwg.mxu0
    %3247 = vmatpush.msra.mxu0 %v3182
    %3248 = vmatpush.msra.mxu0 %v3181
    %3249 = vmatpush.msra.mxu0 %v3180
    %3250 = vmatpush.msra.mxu0 %v3179
    %3251 = vmatpush.msra.mxu0 %v3178
    %3252 = vmatpush.msra.mxu0 %v3177
    %3253 = vmatpush.msra.mxu0 %v3176
    %3254 = vmatpush.msra.mxu0 %v3175
    %3255 = vmatpush.msra.mxu0 %v3174
    %3256 = vmatpush.msra.mxu0 %v3173
    %3257 = vmatpush.msra.mxu0 %v3172
    %3258 = vmatpush.msra.mxu0 %v3171
    %3259 = vmatpush.msra.mxu0 %v3170
    %3260 = vmatpush.msra.mxu0 %v3169
    %3261 = vmatpush.msra.mxu0 %v3168
    %3262 = vmatpush.msra.mxu0 %v3167
    %3263 = vmatmul.f32.gmra.mxu0 %v3118
    %v3264 = vpop.f32.mrf.mxu0
    %v3265 = vadd.f32 %v3245, %v3264
    %3266 = vdwg.mxu0
    %3268 = vset.pattern.permute.xlu0 3
    %3269 = vperm.xlu0 %3268, %v3265
    %v3270 = vpop.permute.xlu0 %3269
    %v3272 = vadd.f32 %v3270, %v3265
    %vm3273 = vcmask 23552
    %3274 = vst.msk [vmem:[#allocation2] sm:$0xff] %vm3273, %v3272
    // Predicated region
    $region22: #{duel_qfunc_forward.7} parent=1 // pred_check
      _
    $region23: #{duel_qfunc_forward.7} parent=1 // pred_check_branch
      %3276 = sbr.rel (0) target = $region25
    $region24: #{duel_qfunc_forward.7} parent=1 // pred_region
      %3278 = vsyncadd [#allocation3], 96
      %s3279 = sshll.u32 [#allocation2], 4
      %s3280 = int_to_ptr.vmem [resolvable:$true] %s3279
      %s3281 = sshll.u32 %s5, 4
      %s3282 = int_to_ptr.hbm [resolvable:$true] %s3281
      %3287 = dma.vmem_to_hbm [thread:$0]  %s3280, 32, %s3282, [#allocation3], 32, 32, 2
    $region25: #{duel_qfunc_forward.7} parent=1 // pred_fallthru
      _
    // Predicated region
    $region26: #{duel_qfunc_forward.7} parent=1 // pred_check
      _
    $region27: #{duel_qfunc_forward.7} parent=1 // pred_check_branch
      %3289 = sbr.rel (0) target = $region29
    $region28: #{duel_qfunc_forward.7} parent=1 // pred_region
      %3291 = dma.done [#allocation3], 128
    $region29: #{duel_qfunc_forward.7} parent=1 // pred_fallthru
      _
    %3292 = vsyncpa [#allocation3], 1

</llo_original>
